<compile_context>
chip_gen: v7x
topology: tpu7x:2x2x1
jax: 0.10.0
libtpu: 0.0.40
codegen_flags: <defaults>
</compile_context>

<pallas_src>
import functools
import numpy as np
import jax
import jax.numpy as jnp
from jax import lax
from jax.experimental import pallas as pl
from jax.experimental.pallas import tpu as pltpu

# ---- small config consistent with the module ----
B = 2
T = 8                 # sequence length
D_MODEL = 32          # hidden_dim
N_HEAD = 2            # config['decoder_head']
D_K = D_MODEL // N_HEAD
D_V = D_K
D_INNER = 64          # config['conv_filter_size']
KERNEL_SIZE = (3, 3)  # config['conv_kernel_size'] (odd => 'same' padding)
N_LAYERS = 2
MAX_SEQ_LEN = 16

LANE = 128
QKV_W = 3 * N_HEAD * D_K          # 96 real columns of the fused QKV weight
ATTN_SLAB_W = 2 * LANE            # [0:96]=wq|wk|wv, [96:128]=0, [128:160]=w_o, rest 0
VEC_W = LANE                      # bias / LayerNorm slab width (one full vreg of lanes)
CONV_PAD = LANE                   # conv weight slabs padded to 128 lanes

assert QKV_W <= LANE and D_MODEL <= LANE and D_INNER <= LANE
assert N_HEAD * D_V == D_MODEL    # lets w_o share the (D_MODEL, .) attention slab rows


# -------------------------- shared math helpers --------------------------
def _layer_norm(x, g, b, eps=1e-5):
    mu = jnp.mean(x, axis=-1, keepdims=True)
    var = jnp.mean((x - mu) ** 2, axis=-1, keepdims=True)
    return (x - mu) * lax.rsqrt(var + eps) * g + b


# ------------------------------ Pallas kernel ------------------------------
def decoder_stack_kernel(lens_ref, x_ref, wattn_ref, w1_ref, w2_ref, vec_ref,
                         out_ref, *, n_layers, n_head, d_k, d_v, d_model,
                         ksizes, seq_len, batch):
    bt = batch * seq_len
    hdk = n_head * d_k
    inv_temp = 1.0 / float(np.power(d_k, 0.5))

    x = x_ref[...]                                   # (B*T, D) f32, running activation

    # ------- masks, built ONCE from the prefetched lengths (iota + compares only) -------
    flat = lax.broadcasted_iota(jnp.int32, (bt, 1), 0)            # flat row id
    colf = lax.broadcasted_iota(jnp.int32, (1, bt), 1)            # flat col id
    rows2 = lax.broadcasted_iota(jnp.int32, (bt, bt), 0)
    cols2 = lax.broadcasted_iota(jnp.int32, (bt, bt), 1)

    valid_rows = jnp.zeros((bt, 1), jnp.bool_)       # real (non-pad) token rows
    valid_cols = jnp.zeros((1, bt), jnp.bool_)       # real (non-pad) key columns
    same_batch = jnp.zeros((bt, bt), jnp.bool_)      # block-diagonal batch structure
    for bi in range(batch):
        lo, hi = bi * seq_len, (bi + 1) * seq_len
        ln = lens_ref[bi]
        valid_rows = jnp.logical_or(
            valid_rows, jnp.logical_and(flat >= lo, flat < lo + ln))
        valid_cols = jnp.logical_or(
            valid_cols, jnp.logical_and(colf >= lo, colf < lo + ln))
        same_batch = jnp.logical_or(
            same_batch,
            jnp.logical_and(jnp.logical_and(rows2 >= lo, rows2 < hi),
                            jnp.logical_and(cols2 >= lo, cols2 < hi)))
    attn_ok = jnp.logical_and(same_batch, valid_cols)               # (BT, BT)

    # conv tap validity: a rolled row r reads row r+d, which must stay inside the
    # same batch's [0, T) window (this also kills cross-batch / wrap-around leakage).
    tap_valid = {}
    for ks in set(ksizes):
        pc = (ks - 1) // 2
        for j in range(ks):
            d = j - pc
            if d == 0 or d in tap_valid:
                continue
            ok = jnp.zeros((bt, 1), jnp.bool_)
            for bi in range(batch):
                lo, hi = bi * seq_len, (bi + 1) * seq_len
                ok = jnp.logical_or(
                    ok,
                    jnp.logical_and(
                        jnp.logical_and(flat >= lo, flat < hi),
                        jnp.logical_and(flat + d >= lo, flat + d < hi)))
            tap_valid[d] = ok

    def conv1d_same(xin, w_ref, lidx, bias_row, ksize):
        """'same' Conv1d over the flat B*T row axis via XLU sublane rolls + masks."""
        pc = (ksize - 1) // 2
        acc = jnp.zeros((bt, w_ref.shape[-1]), jnp.float32)
        for j in range(ksize):
            d = j - pc
            if d == 0:
                xs = xin
            else:
                xs = pltpu.roll(xin, shift=(-d) % bt, axis=0)
                xs = jnp.where(tap_valid[d], xs, 0.0)
            acc = acc + jnp.dot(xs.astype(jnp.bfloat16), w_ref[lidx, j],
                                preferred_element_type=jnp.float32)
        return acc + bias_row

    # ---------------- layer stack (python-unrolled: N_LAYERS is small) ----------------
    # TODO(synk): if N_LAYERS grows, move the layer loop onto an "arbitrary" grid axis
    # so only one layer's weight slabs are resident / double-buffered at a time.
    for l in range(n_layers):
        vec_l = vec_ref[l]                              # (8, 128) f32 bias/LN slab
        ln1g, ln1b = vec_l[2:3, :d_model], vec_l[3:4, :d_model]
        ln2g, ln2b = vec_l[6:7, :d_model], vec_l[7:8, :d_model]

        # -------- multi-head self-attention (block-diagonal over the flat B*T rows) ----
        w_qkv = wattn_ref[l, :, 0:LANE]                 # (D, 128) bf16, cols 96..127 = 0
        w_out = wattn_ref[l, :, LANE:LANE + d_model]    # (H*Dv, D) bf16, lane-128 aligned
        qkv = jnp.dot(x.astype(jnp.bfloat16), w_qkv,
                      preferred_element_type=jnp.float32) + vec_l[0:1, :]   # (BT, 128)

        attn_out = jnp.zeros((bt, d_model), jnp.float32)
        for h in range(n_head):
            qh = qkv[:, h * d_k:(h + 1) * d_k]
            kh = qkv[:, hdk + h * d_k:hdk + (h + 1) * d_k]
            vh = qkv[:, 2 * hdk + h * d_v:2 * hdk + (h + 1) * d_v]
            scores = lax.dot_general(qh, kh, (((1,), (1,)), ((), ())),
                                     preferred_element_type=jnp.float32) * inv_temp
            # -1e30 (not -inf) keeps fully-padded rows finite; they are zeroed below.
            scores = jnp.where(attn_ok, scores, jnp.float32(-1e30))
            m = jnp.max(scores, axis=-1, keepdims=True)
            e = jnp.exp(scores - m)
            p = e * pl.reciprocal(jnp.sum(e, axis=-1, keepdims=True), approx=True)
            oh = jnp.dot(p, vh, preferred_element_type=jnp.float32)        # (BT, Dv)
            # fold the output projection per head (no head concat / relayout)
            attn_out = attn_out + jnp.dot(
                oh.astype(jnp.bfloat16), w_out[h * d_v:(h + 1) * d_v, :],
                preferred_element_type=jnp.float32)
        attn_out = attn_out + vec_l[1:2, :d_model]

        y = _layer_norm(attn_out + x, ln1g, ln1b)
        y = jnp.where(valid_rows, y, 0.0)               # masked_fill(mask, 0)

        # --------- position-wise FFN: Conv1d -> ReLU -> Conv1d ---------
        h1 = conv1d_same(y, w1_ref, l, vec_l[4:5, :], ksizes[0])           # (BT, 128)
        h1 = jnp.maximum(h1, 0.0)
        h2 = conv1d_same(h1, w2_ref, l, vec_l[5:6, :], ksizes[1])          # (BT, 128)
        z = _layer_norm(h2[:, :d_model] + y, ln2g, ln2b)
        z = jnp.where(valid_rows, z, 0.0)
        x = z

    out_ref[...] = x.astype(out_ref.dtype)


# ------------------------------ wrapper ------------------------------
def pack_params(layer_params):
    """Pack 16 per-layer params into 4 dense, 128-lane-aligned, layer-stacked slabs."""
    wattn, w1s, w2s, vecs = [], [], [], []

    def row(v):
        v = v.reshape(-1)
        return jnp.pad(v, (0, VEC_W - v.shape[0]))

    for p in layer_params:
        slab = jnp.zeros((D_MODEL, ATTN_SLAB_W), jnp.float32)
        slab = slab.at[:, :QKV_W].set(
            jnp.concatenate([p['wq'], p['wk'], p['wv']], axis=1))
        slab = slab.at[:, LANE:LANE + D_MODEL].set(p['wo'])     # w_o at lane 128
        wattn.append(slab)

        w1p = jnp.zeros((KERNEL_SIZE[0], D_MODEL, CONV_PAD), jnp.float32)
        w1p = w1p.at[:, :, :D_INNER].set(p['w1'])
        w1s.append(w1p)

        w2p = jnp.zeros((KERNEL_SIZE[1], CONV_PAD, CONV_PAD), jnp.float32)
        w2p = w2p.at[:, :D_INNER, :D_MODEL].set(p['w2'])
        w2s.append(w2p)

        vecs.append(jnp.stack([
            row(jnp.concatenate([p['bq'], p['bk'], p['bv']])),
            row(p['bo']), row(p['ln1g']), row(p['ln1b']),
            row(p['b1']), row(p['b2']), row(p['ln2g']), row(p['ln2b'])], axis=0))

    # Weight-matrix slabs in bf16 (halves DMA, native-rate MXU); bias/LN slab stays f32.
    return (jnp.stack(wattn).astype(jnp.bfloat16),
            jnp.stack(w1s).astype(jnp.bfloat16),
            jnp.stack(w2s).astype(jnp.bfloat16),
            jnp.stack(vecs))


def fused_fft_stack(x, lengths, packed):
    b, t, d = x.shape
    bt = b * t
    wattn, w1, w2, vec = packed
    kernel = functools.partial(
        decoder_stack_kernel, n_layers=N_LAYERS, n_head=N_HEAD, d_k=D_K,
        d_v=D_V, d_model=d, ksizes=KERNEL_SIZE, seq_len=t, batch=b)

    def rep(arr):
        nd = arr.ndim
        return pl.BlockSpec(arr.shape, lambda i, lens, nd=nd: (0,) * nd)

    x2 = x.reshape(bt, d)                    # flat (B*T, D) slab -> one grid step

    grid_spec = pltpu.PrefetchScalarGridSpec(
        num_scalar_prefetch=1,
        grid=(1,),                           # single fused step: whole batch per invocation
        in_specs=[pl.BlockSpec((bt, d), lambda i, lens: (0, 0)),
                  rep(wattn), rep(w1), rep(w2), rep(vec)],
        out_specs=pl.BlockSpec((bt, d), lambda i, lens: (0, 0)))

    out = pl.pallas_call(
        kernel,
        out_shape=jax.ShapeDtypeStruct((bt, d), jnp.float32),
        grid_spec=grid_spec,
        compiler_params=pltpu.CompilerParams(
            dimension_semantics=("arbitrary",)),
    )(lengths, x2, wattn, w1, w2, vec)
    return out.reshape(b, t, d)


# ------------------------------ glue (plain JAX) ------------------------------
def get_sinusoid_encoding_table(n_position, d_hid):
    pos = np.arange(n_position, dtype=np.float64)[:, None]
    idx = np.arange(d_hid, dtype=np.float64)[None, :]
    angle = pos / np.power(10000.0, 2.0 * (np.floor(idx / 2.0)) / d_hid)
    table = np.zeros((n_position, d_hid), dtype=np.float32)
    table[:, 0::2] = np.sin(angle[:, 0::2])
    table[:, 1::2] = np.cos(angle[:, 1::2])
    return jnp.asarray(table)


def init_params(key):
    layers = []
    scale = 0.1
    for _ in range(N_LAYERS):
        def nxt():
            nonlocal key
            key, sub = jax.random.split(key)
            return sub
        p = dict(
            wq=jax.random.normal(nxt(), (D_MODEL, N_HEAD * D_K), jnp.float32) * scale,
            bq=jax.random.normal(nxt(), (N_HEAD * D_K,), jnp.float32) * scale,
            wk=jax.random.normal(nxt(), (D_MODEL, N_HEAD * D_K), jnp.float32) * scale,
            bk=jax.random.normal(nxt(), (N_HEAD * D_K,), jnp.float32) * scale,
            wv=jax.random.normal(nxt(), (D_MODEL, N_HEAD * D_V), jnp.float32) * scale,
            bv=jax.random.normal(nxt(), (N_HEAD * D_V,), jnp.float32) * scale,
            wo=jax.random.normal(nxt(), (N_HEAD * D_V, D_MODEL), jnp.float32) * scale,
            bo=jax.random.normal(nxt(), (D_MODEL,), jnp.float32) * scale,
            ln1g=jnp.ones((D_MODEL,), jnp.float32),
            ln1b=jnp.zeros((D_MODEL,), jnp.float32),
            w1=jax.random.normal(nxt(), (KERNEL_SIZE[0], D_MODEL, D_INNER), jnp.float32) * scale,
            b1=jax.random.normal(nxt(), (D_INNER,), jnp.float32) * scale,
            w2=jax.random.normal(nxt(), (KERNEL_SIZE[1], D_INNER, D_MODEL), jnp.float32) * scale,
            b2=jax.random.normal(nxt(), (D_MODEL,), jnp.float32) * scale,
            ln2g=jnp.ones((D_MODEL,), jnp.float32),
            ln2b=jnp.zeros((D_MODEL,), jnp.float32),
        )
        layers.append(p)
    return layers


def decoder_forward(enc_seq, mask, pos_enc, layer_params):
    """Mirrors Decoder.forward (eval mode). Returns (dec_output, mask)."""
    b, t, d = enc_seq.shape
    if t > MAX_SEQ_LEN:
        # eval-mode long-sequence branch: recompute sinusoid table on the fly
        table = get_sinusoid_encoding_table(t, d)
        dec_in = enc_seq + table[None, :t, :]
        cur_mask = mask
    else:
        max_len = min(t, MAX_SEQ_LEN)
        dec_in = enc_seq[:, :max_len, :] + pos_enc[None, :max_len, :]
        cur_mask = mask[:, :max_len]

    # FastSpeech2 masks are length (prefix) masks: True on the padded tail.
    lengths = jnp.sum(jnp.logical_not(cur_mask), axis=1).astype(jnp.int32)
    packed = pack_params(layer_params)
    dec_out = fused_fft_stack(dec_in.astype(jnp.float32), lengths, packed)
    return dec_out, cur_mask


# ------------------------------ pure-JAX reference ------------------------------
def _ref_conv1d(x, w, b):
    ksz = w.shape[0]
    pad = (ksz - 1) // 2
    xp = jnp.pad(x, ((0, 0), (pad, pad), (0, 0)))
    out = jnp.zeros((x.shape[0], x.shape[1], w.shape[2]), jnp.float32) + b
    for j in range(ksz):
        out = out + xp[:, j:j + x.shape[1], :] @ w[j]
    return out


def _ref_fft_block(x, mask, p):
    bsz, t, _ = x.shape
    residual = x
    q = x @ p['wq'] + p['bq']
    k = x @ p['wk'] + p['bk']
    v = x @ p['wv'] + p['bv']

    def split(a, dh):
        return a.reshape(bsz, t, N_HEAD, dh).transpose(0, 2, 1, 3)  # (B,H,T,dh)

    qh, kh, vh = split(q, D_K), split(k, D_K), split(v, D_V)
    scores = jnp.einsum('bhqe,bhke->bhqk', qh, kh) / np.power(D_K, 0.5)
    scores = jnp.where(mask[:, None, None, :], -np.inf, scores)
    attn = jax.nn.softmax(scores, axis=-1)
    o = jnp.einsum('bhqk,bhke->bhqe', attn, vh)
    o = o.transpose(0, 2, 1, 3).reshape(bsz, t, N_HEAD * D_V)
    o = o @ p['wo'] + p['bo']
    y = _layer_norm(o + residual, p['ln1g'], p['ln1b'])
    y = jnp.where(mask[:, :, None], 0.0, y)
    h1 = jnp.maximum(_ref_conv1d(y, p['w1'], p['b1']), 0.0)
    h2 = _ref_conv1d(h1, p['w2'], p['b2'])
    z = _layer_norm(h2 + y, p['ln2g'], p['ln2b'])
    z = jnp.where(mask[:, :, None], 0.0, z)
    return z


def reference_decoder(enc_seq, mask, pos_enc, layer_params):
    b, t, d = enc_seq.shape
    max_len = min(t, MAX_SEQ_LEN)
    dec = enc_seq[:, :max_len, :] + pos_enc[None, :max_len, :]
    cur_mask = mask[:, :max_len]
    for p in layer_params:
        dec = _ref_fft_block(dec, cur_mask, p)
    return dec, cur_mask


# ------------------------------------ main ------------------------------------
if __name__ == "__main__":
    key = jax.random.PRNGKey(0)
    key, k_seq, k_par = jax.random.split(key, 3)

    pos_enc = get_sinusoid_encoding_table(MAX_SEQ_LEN + 1, D_MODEL)

    enc_seq = jax.random.normal(k_seq, (B, T, D_MODEL), jnp.float32) * 0.3
    lengths = jnp.array([T, 5], dtype=jnp.int32)                  # batch 1 padded from t=5
    mask = jnp.arange(T)[None, :] >= lengths[:, None]             # True where padded

    layer_params = init_params(k_par)

    dec_out, out_mask = decoder_forward(enc_seq, mask, pos_enc, layer_params)
    jax.block_until_ready(dec_out)

    ref_out, _ = reference_decoder(enc_seq, mask, pos_enc, layer_params)
    # bf16 weight slabs + approx reciprocal vs f32 reference -> ~1e-2 worst-case error.
    np.testing.assert_allclose(np.asarray(dec_out), np.asarray(ref_out),
                               rtol=2e-2, atol=2e-2)
    assert dec_out.shape == (B, T, D_MODEL)
    assert out_mask.shape == (B, T)
    assert bool(jnp.all(jnp.isfinite(dec_out)))
    print("KERNEL_OK")
</pallas_src>

<mosaic_0001>
module attributes {stable_mosaic.version = 11 : i64} {
  func.func @decoder_stack_kernel(%arg0: i32, %arg1: memref<2xi32, #tpu.memory_space<smem>>, %arg2: memref<16x32xf32, #tpu.memory_space<vmem>>, %arg3: memref<2x32x256xbf16, #tpu.memory_space<vmem>>, %arg4: memref<2x3x32x128xbf16, #tpu.memory_space<vmem>>, %arg5: memref<2x3x128x128xbf16, #tpu.memory_space<vmem>>, %arg6: memref<2x8x128xf32, #tpu.memory_space<vmem>>, %arg7: memref<16x32xf32, #tpu.memory_space<vmem>>) attributes {dimension_semantics = [#tpu.dimension_semantics<arbitrary>], iteration_bounds = array<i64: 1>, scalar_prefetch = 1 : i64, scratch_operands = 0 : i64, tpu.core_type = #tpu.core_type<tc>, window_params = [{pipeline_mode = #tpu.pipeline_mode<synchronous>, transform_indices = @transform_0, window_bounds = array<i64: 16, 32>}, {pipeline_mode = #tpu.pipeline_mode<synchronous>, transform_indices = @transform_1, window_bounds = array<i64: 2, 32, 256>}, {pipeline_mode = #tpu.pipeline_mode<synchronous>, transform_indices = @transform_2, window_bounds = array<i64: 2, 3, 32, 128>}, {pipeline_mode = #tpu.pipeline_mode<synchronous>, transform_indices = @transform_3, window_bounds = array<i64: 2, 3, 128, 128>}, {pipeline_mode = #tpu.pipeline_mode<synchronous>, transform_indices = @transform_4, window_bounds = array<i64: 2, 8, 128>}, {pipeline_mode = #tpu.pipeline_mode<synchronous>, transform_indices = @transform_5, window_bounds = array<i64: 16, 32>}]} {
    %c0 = arith.constant 0 : index
    %c0_0 = arith.constant 0 : index
    %0 = vector.load %arg2[%c0, %c0_0] : memref<16x32xf32, #tpu.memory_space<vmem>>, vector<16x32xf32>
    %1 = tpu.iota {dimensions = array<i32: 0>} : vector<16x1xi32>
    %2 = tpu.iota {dimensions = array<i32: 1>} : vector<1x16xi32>
    %3 = tpu.iota {dimensions = array<i32: 0>} : vector<16x16xi32>
    %4 = tpu.iota {dimensions = array<i32: 1>} : vector<16x16xi32>
    %false = arith.constant false
    %5 = vector.broadcast %false : i1 to vector<16x1xi1>
    %false_1 = arith.constant false
    %6 = vector.broadcast %false_1 : i1 to vector<1x16xi1>
    %false_2 = arith.constant false
    %7 = vector.broadcast %false_2 : i1 to vector<16x16xi1>
    %c0_3 = arith.constant 0 : index
    %8 = memref.load %arg1[%c0_3] : memref<2xi32, #tpu.memory_space<smem>>
    %c0_i32 = arith.constant 0 : i32
    %9 = vector.broadcast %c0_i32 : i32 to vector<16x1xi32>
    %10 = arith.cmpi sge, %1, %9 : vector<16x1xi32>
    %c0_i32_4 = arith.constant 0 : i32
    %11 = arith.addi %c0_i32_4, %8 : i32
    %12 = vector.broadcast %11 : i32 to vector<16x1xi32>
    %13 = arith.cmpi slt, %1, %12 : vector<16x1xi32>
    %14 = arith.andi %10, %13 : vector<16x1xi1>
    %15 = arith.ori %5, %14 : vector<16x1xi1>
    %c0_i32_5 = arith.constant 0 : i32
    %16 = vector.broadcast %c0_i32_5 : i32 to vector<1x16xi32>
    %17 = arith.cmpi sge, %2, %16 : vector<1x16xi32>
    %c0_i32_6 = arith.constant 0 : i32
    %18 = arith.addi %c0_i32_6, %8 : i32
    %19 = vector.broadcast %18 : i32 to vector<1x16xi32>
    %20 = arith.cmpi slt, %2, %19 : vector<1x16xi32>
    %21 = arith.andi %17, %20 : vector<1x16xi1>
    %22 = arith.ori %6, %21 : vector<1x16xi1>
    %c0_i32_7 = arith.constant 0 : i32
    %23 = vector.broadcast %c0_i32_7 : i32 to vector<16x16xi32>
    %24 = arith.cmpi sge, %3, %23 : vector<16x16xi32>
    %c8_i32 = arith.constant 8 : i32
    %25 = vector.broadcast %c8_i32 : i32 to vector<16x16xi32>
    %26 = arith.cmpi slt, %3, %25 : vector<16x16xi32>
    %27 = arith.andi %24, %26 : vector<16x16xi1>
    %c0_i32_8 = arith.constant 0 : i32
    %28 = vector.broadcast %c0_i32_8 : i32 to vector<16x16xi32>
    %29 = arith.cmpi sge, %4, %28 : vector<16x16xi32>
    %c8_i32_9 = arith.constant 8 : i32
    %30 = vector.broadcast %c8_i32_9 : i32 to vector<16x16xi32>
    %31 = arith.cmpi slt, %4, %30 : vector<16x16xi32>
    %32 = arith.andi %29, %31 : vector<16x16xi1>
    %33 = arith.andi %27, %32 : vector<16x16xi1>
    %34 = arith.ori %7, %33 : vector<16x16xi1>
    %c1 = arith.constant 1 : index
    %35 = memref.load %arg1[%c1] : memref<2xi32, #tpu.memory_space<smem>>
    %c8_i32_10 = arith.constant 8 : i32
    %36 = vector.broadcast %c8_i32_10 : i32 to vector<16x1xi32>
    %37 = arith.cmpi sge, %1, %36 : vector<16x1xi32>
    %c8_i32_11 = arith.constant 8 : i32
    %38 = arith.addi %c8_i32_11, %35 : i32
    %39 = vector.broadcast %38 : i32 to vector<16x1xi32>
    %40 = arith.cmpi slt, %1, %39 : vector<16x1xi32>
    %41 = arith.andi %37, %40 : vector<16x1xi1>
    %42 = arith.ori %15, %41 : vector<16x1xi1>
    %c8_i32_12 = arith.constant 8 : i32
    %43 = vector.broadcast %c8_i32_12 : i32 to vector<1x16xi32>
    %44 = arith.cmpi sge, %2, %43 : vector<1x16xi32>
    %c8_i32_13 = arith.constant 8 : i32
    %45 = arith.addi %c8_i32_13, %35 : i32
    %46 = vector.broadcast %45 : i32 to vector<1x16xi32>
    %47 = arith.cmpi slt, %2, %46 : vector<1x16xi32>
    %48 = arith.andi %44, %47 : vector<1x16xi1>
    %49 = arith.ori %22, %48 : vector<1x16xi1>
    %c8_i32_14 = arith.constant 8 : i32
    %50 = vector.broadcast %c8_i32_14 : i32 to vector<16x16xi32>
    %51 = arith.cmpi sge, %3, %50 : vector<16x16xi32>
    %c16_i32 = arith.constant 16 : i32
    %52 = vector.broadcast %c16_i32 : i32 to vector<16x16xi32>
    %53 = arith.cmpi slt, %3, %52 : vector<16x16xi32>
    %54 = arith.andi %51, %53 : vector<16x16xi1>
    %c8_i32_15 = arith.constant 8 : i32
    %55 = vector.broadcast %c8_i32_15 : i32 to vector<16x16xi32>
    %56 = arith.cmpi sge, %4, %55 : vector<16x16xi32>
    %c16_i32_16 = arith.constant 16 : i32
    %57 = vector.broadcast %c16_i32_16 : i32 to vector<16x16xi32>
    %58 = arith.cmpi slt, %4, %57 : vector<16x16xi32>
    %59 = arith.andi %56, %58 : vector<16x16xi1>
    %60 = arith.andi %54, %59 : vector<16x16xi1>
    %61 = arith.ori %34, %60 : vector<16x16xi1>
    %62 = vector.broadcast %49 : vector<1x16xi1> to vector<16x16xi1>
    %63 = arith.andi %61, %62 : vector<16x16xi1>
    %false_17 = arith.constant false
    %64 = vector.broadcast %false_17 : i1 to vector<16x1xi1>
    %c0_i32_18 = arith.constant 0 : i32
    %65 = vector.broadcast %c0_i32_18 : i32 to vector<16x1xi32>
    %66 = arith.cmpi sge, %1, %65 : vector<16x1xi32>
    %c8_i32_19 = arith.constant 8 : i32
    %67 = vector.broadcast %c8_i32_19 : i32 to vector<16x1xi32>
    %68 = arith.cmpi slt, %1, %67 : vector<16x1xi32>
    %69 = arith.andi %66, %68 : vector<16x1xi1>
    %c-1_i32 = arith.constant -1 : i32
    %70 = vector.broadcast %c-1_i32 : i32 to vector<16x1xi32>
    %71 = arith.addi %1, %70 : vector<16x1xi32>
    %c0_i32_20 = arith.constant 0 : i32
    %72 = vector.broadcast %c0_i32_20 : i32 to vector<16x1xi32>
    %73 = arith.cmpi sge, %71, %72 : vector<16x1xi32>
    %c-1_i32_21 = arith.constant -1 : i32
    %74 = vector.broadcast %c-1_i32_21 : i32 to vector<16x1xi32>
    %75 = arith.addi %1, %74 : vector<16x1xi32>
    %c8_i32_22 = arith.constant 8 : i32
    %76 = vector.broadcast %c8_i32_22 : i32 to vector<16x1xi32>
    %77 = arith.cmpi slt, %75, %76 : vector<16x1xi32>
    %78 = arith.andi %73, %77 : vector<16x1xi1>
    %79 = arith.andi %69, %78 : vector<16x1xi1>
    %80 = arith.ori %64, %79 : vector<16x1xi1>
    %c8_i32_23 = arith.constant 8 : i32
    %81 = vector.broadcast %c8_i32_23 : i32 to vector<16x1xi32>
    %82 = arith.cmpi sge, %1, %81 : vector<16x1xi32>
    %c16_i32_24 = arith.constant 16 : i32
    %83 = vector.broadcast %c16_i32_24 : i32 to vector<16x1xi32>
    %84 = arith.cmpi slt, %1, %83 : vector<16x1xi32>
    %85 = arith.andi %82, %84 : vector<16x1xi1>
    %c-1_i32_25 = arith.constant -1 : i32
    %86 = vector.broadcast %c-1_i32_25 : i32 to vector<16x1xi32>
    %87 = arith.addi %1, %86 : vector<16x1xi32>
    %c8_i32_26 = arith.constant 8 : i32
    %88 = vector.broadcast %c8_i32_26 : i32 to vector<16x1xi32>
    %89 = arith.cmpi sge, %87, %88 : vector<16x1xi32>
    %c-1_i32_27 = arith.constant -1 : i32
    %90 = vector.broadcast %c-1_i32_27 : i32 to vector<16x1xi32>
    %91 = arith.addi %1, %90 : vector<16x1xi32>
    %c16_i32_28 = arith.constant 16 : i32
    %92 = vector.broadcast %c16_i32_28 : i32 to vector<16x1xi32>
    %93 = arith.cmpi slt, %91, %92 : vector<16x1xi32>
    %94 = arith.andi %89, %93 : vector<16x1xi1>
    %95 = arith.andi %85, %94 : vector<16x1xi1>
    %96 = arith.ori %80, %95 : vector<16x1xi1>
    %false_29 = arith.constant false
    %97 = vector.broadcast %false_29 : i1 to vector<16x1xi1>
    %c0_i32_30 = arith.constant 0 : i32
    %98 = vector.broadcast %c0_i32_30 : i32 to vector<16x1xi32>
    %99 = arith.cmpi sge, %1, %98 : vector<16x1xi32>
    %c8_i32_31 = arith.constant 8 : i32
    %100 = vector.broadcast %c8_i32_31 : i32 to vector<16x1xi32>
    %101 = arith.cmpi slt, %1, %100 : vector<16x1xi32>
    %102 = arith.andi %99, %101 : vector<16x1xi1>
    %c1_i32 = arith.constant 1 : i32
    %103 = vector.broadcast %c1_i32 : i32 to vector<16x1xi32>
    %104 = arith.addi %1, %103 : vector<16x1xi32>
    %c0_i32_32 = arith.constant 0 : i32
    %105 = vector.broadcast %c0_i32_32 : i32 to vector<16x1xi32>
    %106 = arith.cmpi sge, %104, %105 : vector<16x1xi32>
    %c1_i32_33 = arith.constant 1 : i32
    %107 = vector.broadcast %c1_i32_33 : i32 to vector<16x1xi32>
    %108 = arith.addi %1, %107 : vector<16x1xi32>
    %c8_i32_34 = arith.constant 8 : i32
    %109 = vector.broadcast %c8_i32_34 : i32 to vector<16x1xi32>
    %110 = arith.cmpi slt, %108, %109 : vector<16x1xi32>
    %111 = arith.andi %106, %110 : vector<16x1xi1>
    %112 = arith.andi %102, %111 : vector<16x1xi1>
    %113 = arith.ori %97, %112 : vector<16x1xi1>
    %c8_i32_35 = arith.constant 8 : i32
    %114 = vector.broadcast %c8_i32_35 : i32 to vector<16x1xi32>
    %115 = arith.cmpi sge, %1, %114 : vector<16x1xi32>
    %c16_i32_36 = arith.constant 16 : i32
    %116 = vector.broadcast %c16_i32_36 : i32 to vector<16x1xi32>
    %117 = arith.cmpi slt, %1, %116 : vector<16x1xi32>
    %118 = arith.andi %115, %117 : vector<16x1xi1>
    %c1_i32_37 = arith.constant 1 : i32
    %119 = vector.broadcast %c1_i32_37 : i32 to vector<16x1xi32>
    %120 = arith.addi %1, %119 : vector<16x1xi32>
    %c8_i32_38 = arith.constant 8 : i32
    %121 = vector.broadcast %c8_i32_38 : i32 to vector<16x1xi32>
    %122 = arith.cmpi sge, %120, %121 : vector<16x1xi32>
    %c1_i32_39 = arith.constant 1 : i32
    %123 = vector.broadcast %c1_i32_39 : i32 to vector<16x1xi32>
    %124 = arith.addi %1, %123 : vector<16x1xi32>
    %c16_i32_40 = arith.constant 16 : i32
    %125 = vector.broadcast %c16_i32_40 : i32 to vector<16x1xi32>
    %126 = arith.cmpi slt, %124, %125 : vector<16x1xi32>
    %127 = arith.andi %122, %126 : vector<16x1xi1>
    %128 = arith.andi %118, %127 : vector<16x1xi1>
    %129 = arith.ori %113, %128 : vector<16x1xi1>
    %c0_41 = arith.constant 0 : index
    %c0_42 = arith.constant 0 : index
    %c0_43 = arith.constant 0 : index
    %130 = vector.load %arg6[%c0_41, %c0_42, %c0_43] : memref<2x8x128xf32, #tpu.memory_space<vmem>>, vector<1x8x128xf32>
    %131 = vector.shape_cast %130 : vector<1x8x128xf32> to vector<8x128xf32>
    %132 = vector.extract_strided_slice %131 {offsets = [2, 0], sizes = [1, 32], strides = [1, 1]} : vector<8x128xf32> to vector<1x32xf32>
    %133 = vector.extract_strided_slice %131 {offsets = [3, 0], sizes = [1, 32], strides = [1, 1]} : vector<8x128xf32> to vector<1x32xf32>
    %134 = vector.extract_strided_slice %131 {offsets = [6, 0], sizes = [1, 32], strides = [1, 1]} : vector<8x128xf32> to vector<1x32xf32>
    %135 = vector.extract_strided_slice %131 {offsets = [7, 0], sizes = [1, 32], strides = [1, 1]} : vector<8x128xf32> to vector<1x32xf32>
    %c0_44 = arith.constant 0 : index
    %c0_45 = arith.constant 0 : index
    %c0_46 = arith.constant 0 : index
    %136 = vector.load %arg3[%c0_44, %c0_45, %c0_46] : memref<2x32x256xbf16, #tpu.memory_space<vmem>>, vector<1x32x128xbf16>
    %137 = vector.shape_cast %136 : vector<1x32x128xbf16> to vector<32x128xbf16>
    %c0_47 = arith.constant 0 : index
    %c0_48 = arith.constant 0 : index
    %c128 = arith.constant 128 : index
    %138 = vector.load %arg3[%c0_47, %c0_48, %c128] : memref<2x32x256xbf16, #tpu.memory_space<vmem>>, vector<1x32x32xbf16>
    %139 = vector.shape_cast %138 : vector<1x32x32xbf16> to vector<32x32xbf16>
    %140 = arith.truncf %0 : vector<16x32xf32> to vector<16x32xbf16>
    %cst = arith.constant dense<0.000000e+00> : vector<16x128xf32>
    %141 = tpu.matmul %140, %137, %cst {dimension_numbers = #tpu.dot_dimension_numbers<[1], [0], [0], [1], [0, 0, 1, 1], [], []>} : vector<16x32xbf16>, vector<32x128xbf16>, vector<16x128xf32> -> vector<16x128xf32>
    %142 = vector.extract_strided_slice %131 {offsets = [0, 0], sizes = [1, 128], strides = [1, 1]} : vector<8x128xf32> to vector<1x128xf32>
    %143 = vector.broadcast %142 : vector<1x128xf32> to vector<16x128xf32>
    %144 = arith.addf %141, %143 : vector<16x128xf32>
    %cst_49 = arith.constant 0.000000e+00 : f32
    %145 = vector.broadcast %cst_49 : f32 to vector<16x32xf32>
    %146 = vector.extract_strided_slice %144 {offsets = [0, 0], sizes = [16, 16], strides = [1, 1]} : vector<16x128xf32> to vector<16x16xf32>
    %147 = vector.extract_strided_slice %144 {offsets = [0, 32], sizes = [16, 16], strides = [1, 1]} : vector<16x128xf32> to vector<16x16xf32>
    %148 = vector.extract_strided_slice %144 {offsets = [0, 64], sizes = [16, 16], strides = [1, 1]} : vector<16x128xf32> to vector<16x16xf32>
    %cst_50 = arith.constant dense<0.000000e+00> : vector<16x16xf32>
    %149 = tpu.matmul %146, %147, %cst_50 {dimension_numbers = #tpu.dot_dimension_numbers<[1], [1], [0], [0], [0, 0, 1, 0], [], []>} : vector<16x16xf32>, vector<16x16xf32>, vector<16x16xf32> -> vector<16x16xf32>
    %cst_51 = arith.constant 2.500000e-01 : f32
    %150 = vector.broadcast %cst_51 : f32 to vector<16x16xf32>
    %151 = arith.mulf %149, %150 : vector<16x16xf32>
    %cst_52 = arith.constant -1.000000e+30 : f32
    %152 = vector.broadcast %cst_52 : f32 to vector<16x16xf32>
    %153 = arith.select %63, %151, %152 : vector<16x16xi1>, vector<16x16xf32>
    %cst_53 = arith.constant dense<0xFF800000> : vector<16xf32>
    %154 = vector.multi_reduction <maximumf>, %153, %cst_53 [1] : vector<16x16xf32> to vector<16xf32>
    %155 = vector.shape_cast %154 : vector<16xf32> to vector<16x1xf32>
    %156 = vector.broadcast %155 : vector<16x1xf32> to vector<16x16xf32>
    %157 = arith.subf %153, %156 : vector<16x16xf32>
    %158 = math.exp %157 : vector<16x16xf32>
    %cst_54 = arith.constant dense<0.000000e+00> : vector<16xf32>
    %159 = vector.multi_reduction <add>, %158, %cst_54 [1] : vector<16x16xf32> to vector<16xf32>
    %160 = vector.shape_cast %159 : vector<16xf32> to vector<16x1xf32>
    %161 = tpu.reciprocal %160 {approx = true} : vector<16x1xf32> -> vector<16x1xf32>
    %162 = vector.broadcast %161 : vector<16x1xf32> to vector<16x16xf32>
    %163 = arith.mulf %158, %162 : vector<16x16xf32>
    %cst_55 = arith.constant dense<0.000000e+00> : vector<16x16xf32>
    %164 = tpu.matmul %163, %148, %cst_55 {dimension_numbers = #tpu.dot_dimension_numbers<[1], [0], [0], [1], [0, 0, 1, 1], [], []>} : vector<16x16xf32>, vector<16x16xf32>, vector<16x16xf32> -> vector<16x16xf32>
    %165 = arith.truncf %164 : vector<16x16xf32> to vector<16x16xbf16>
    %166 = vector.extract_strided_slice %139 {offsets = [0, 0], sizes = [16, 32], strides = [1, 1]} : vector<32x32xbf16> to vector<16x32xbf16>
    %cst_56 = arith.constant dense<0.000000e+00> : vector<16x32xf32>
    %167 = tpu.matmul %165, %166, %cst_56 {dimension_numbers = #tpu.dot_dimension_numbers<[1], [0], [0], [1], [0, 0, 1, 1], [], []>} : vector<16x16xbf16>, vector<16x32xbf16>, vector<16x32xf32> -> vector<16x32xf32>
    %168 = arith.addf %145, %167 : vector<16x32xf32>
    %169 = vector.extract_strided_slice %144 {offsets = [0, 16], sizes = [16, 16], strides = [1, 1]} : vector<16x128xf32> to vector<16x16xf32>
    %170 = vector.extract_strided_slice %144 {offsets = [0, 48], sizes = [16, 16], strides = [1, 1]} : vector<16x128xf32> to vector<16x16xf32>
    %171 = vector.extract_strided_slice %144 {offsets = [0, 80], sizes = [16, 16], strides = [1, 1]} : vector<16x128xf32> to vector<16x16xf32>
    %cst_57 = arith.constant dense<0.000000e+00> : vector<16x16xf32>
    %172 = tpu.matmul %169, %170, %cst_57 {dimension_numbers = #tpu.dot_dimension_numbers<[1], [1], [0], [0], [0, 0, 1, 0], [], []>} : vector<16x16xf32>, vector<16x16xf32>, vector<16x16xf32> -> vector<16x16xf32>
    %cst_58 = arith.constant 2.500000e-01 : f32
    %173 = vector.broadcast %cst_58 : f32 to vector<16x16xf32>
    %174 = arith.mulf %172, %173 : vector<16x16xf32>
    %cst_59 = arith.constant -1.000000e+30 : f32
    %175 = vector.broadcast %cst_59 : f32 to vector<16x16xf32>
    %176 = arith.select %63, %174, %175 : vector<16x16xi1>, vector<16x16xf32>
    %cst_60 = arith.constant dense<0xFF800000> : vector<16xf32>
    %177 = vector.multi_reduction <maximumf>, %176, %cst_60 [1] : vector<16x16xf32> to vector<16xf32>
    %178 = vector.shape_cast %177 : vector<16xf32> to vector<16x1xf32>
    %179 = vector.broadcast %178 : vector<16x1xf32> to vector<16x16xf32>
    %180 = arith.subf %176, %179 : vector<16x16xf32>
    %181 = math.exp %180 : vector<16x16xf32>
    %cst_61 = arith.constant dense<0.000000e+00> : vector<16xf32>
    %182 = vector.multi_reduction <add>, %181, %cst_61 [1] : vector<16x16xf32> to vector<16xf32>
    %183 = vector.shape_cast %182 : vector<16xf32> to vector<16x1xf32>
    %184 = tpu.reciprocal %183 {approx = true} : vector<16x1xf32> -> vector<16x1xf32>
    %185 = vector.broadcast %184 : vector<16x1xf32> to vector<16x16xf32>
    %186 = arith.mulf %181, %185 : vector<16x16xf32>
    %cst_62 = arith.constant dense<0.000000e+00> : vector<16x16xf32>
    %187 = tpu.matmul %186, %171, %cst_62 {dimension_numbers = #tpu.dot_dimension_numbers<[1], [0], [0], [1], [0, 0, 1, 1], [], []>} : vector<16x16xf32>, vector<16x16xf32>, vector<16x16xf32> -> vector<16x16xf32>
    %188 = arith.truncf %187 : vector<16x16xf32> to vector<16x16xbf16>
    %189 = vector.extract_strided_slice %139 {offsets = [16, 0], sizes = [16, 32], strides = [1, 1]} : vector<32x32xbf16> to vector<16x32xbf16>
    %cst_63 = arith.constant dense<0.000000e+00> : vector<16x32xf32>
    %190 = tpu.matmul %188, %189, %cst_63 {dimension_numbers = #tpu.dot_dimension_numbers<[1], [0], [0], [1], [0, 0, 1, 1], [], []>} : vector<16x16xbf16>, vector<16x32xbf16>, vector<16x32xf32> -> vector<16x32xf32>
    %191 = arith.addf %168, %190 : vector<16x32xf32>
    %192 = vector.extract_strided_slice %131 {offsets = [1, 0], sizes = [1, 32], strides = [1, 1]} : vector<8x128xf32> to vector<1x32xf32>
    %193 = vector.broadcast %192 : vector<1x32xf32> to vector<16x32xf32>
    %194 = arith.addf %191, %193 : vector<16x32xf32>
    %195 = arith.addf %194, %0 : vector<16x32xf32>
    %cst_64 = arith.constant dense<0.000000e+00> : vector<16xf32>
    %196 = vector.multi_reduction <add>, %195, %cst_64 [1] : vector<16x32xf32> to vector<16xf32>
    %197 = vector.shape_cast %196 : vector<16xf32> to vector<16x1xf32>
    %cst_65 = arith.constant 3.200000e+01 : f32
    %198 = vector.broadcast %cst_65 : f32 to vector<16x1xf32>
    %199 = arith.divf %197, %198 : vector<16x1xf32>
    %200 = vector.broadcast %199 : vector<16x1xf32> to vector<16x32xf32>
    %201 = arith.subf %195, %200 : vector<16x32xf32>
    %202 = arith.mulf %201, %201 : vector<16x32xf32>
    %cst_66 = arith.constant dense<0.000000e+00> : vector<16xf32>
    %203 = vector.multi_reduction <add>, %202, %cst_66 [1] : vector<16x32xf32> to vector<16xf32>
    %204 = vector.shape_cast %203 : vector<16xf32> to vector<16x1xf32>
    %cst_67 = arith.constant 3.200000e+01 : f32
    %205 = vector.broadcast %cst_67 : f32 to vector<16x1xf32>
    %206 = arith.divf %204, %205 : vector<16x1xf32>
    %207 = vector.broadcast %199 : vector<16x1xf32> to vector<16x32xf32>
    %208 = arith.subf %195, %207 : vector<16x32xf32>
    %cst_68 = arith.constant 9.99999974E-6 : f32
    %209 = vector.broadcast %cst_68 : f32 to vector<16x1xf32>
    %210 = arith.addf %206, %209 : vector<16x1xf32>
    %211 = math.rsqrt %210 : vector<16x1xf32>
    %212 = vector.broadcast %211 : vector<16x1xf32> to vector<16x32xf32>
    %213 = arith.mulf %208, %212 : vector<16x32xf32>
    %214 = vector.broadcast %132 : vector<1x32xf32> to vector<16x32xf32>
    %215 = arith.mulf %213, %214 : vector<16x32xf32>
    %216 = vector.broadcast %133 : vector<1x32xf32> to vector<16x32xf32>
    %217 = arith.addf %215, %216 : vector<16x32xf32>
    %cst_69 = arith.constant 0.000000e+00 : f32
    %218 = vector.shape_cast %42 : vector<16x1xi1> to vector<16x1xi1>
    %219 = vector.broadcast %218 : vector<16x1xi1> to vector<16x32xi1>
    %220 = vector.broadcast %cst_69 : f32 to vector<16x32xf32>
    %221 = arith.select %219, %217, %220 : vector<16x32xi1>, vector<16x32xf32>
    %222 = vector.extract_strided_slice %131 {offsets = [4, 0], sizes = [1, 128], strides = [1, 1]} : vector<8x128xf32> to vector<1x128xf32>
    %cst_70 = arith.constant 0.000000e+00 : f32
    %223 = vector.broadcast %cst_70 : f32 to vector<16x128xf32>
    %c1_i32_71 = arith.constant 1 : i32
    %224 = tpu.dynamic_rotate %221 by %c1_i32_71 dim 0 : vector<16x32xf32>, i32 -> vector<16x32xf32>
    %cst_72 = arith.constant 0.000000e+00 : f32
    %225 = vector.shape_cast %96 : vector<16x1xi1> to vector<16x1xi1>
    %226 = vector.broadcast %225 : vector<16x1xi1> to vector<16x32xi1>
    %227 = vector.broadcast %cst_72 : f32 to vector<16x32xf32>
    %228 = arith.select %226, %224, %227 : vector<16x32xi1>, vector<16x32xf32>
    %229 = arith.truncf %228 : vector<16x32xf32> to vector<16x32xbf16>
    %c0_73 = arith.constant 0 : index
    %c0_74 = arith.constant 0 : index
    %c0_75 = arith.constant 0 : index
    %c0_76 = arith.constant 0 : index
    %230 = vector.load %arg4[%c0_73, %c0_74, %c0_75, %c0_76] : memref<2x3x32x128xbf16, #tpu.memory_space<vmem>>, vector<1x1x32x128xbf16>
    %231 = vector.shape_cast %230 : vector<1x1x32x128xbf16> to vector<32x128xbf16>
    %cst_77 = arith.constant dense<0.000000e+00> : vector<16x128xf32>
    %232 = tpu.matmul %229, %231, %cst_77 {dimension_numbers = #tpu.dot_dimension_numbers<[1], [0], [0], [1], [0, 0, 1, 1], [], []>} : vector<16x32xbf16>, vector<32x128xbf16>, vector<16x128xf32> -> vector<16x128xf32>
    %233 = arith.addf %223, %232 : vector<16x128xf32>
    %234 = arith.truncf %221 : vector<16x32xf32> to vector<16x32xbf16>
    %c0_78 = arith.constant 0 : index
    %c1_79 = arith.constant 1 : index
    %c0_80 = arith.constant 0 : index
    %c0_81 = arith.constant 0 : index
    %235 = vector.load %arg4[%c0_78, %c1_79, %c0_80, %c0_81] : memref<2x3x32x128xbf16, #tpu.memory_space<vmem>>, vector<1x1x32x128xbf16>
    %236 = vector.shape_cast %235 : vector<1x1x32x128xbf16> to vector<32x128xbf16>
    %cst_82 = arith.constant dense<0.000000e+00> : vector<16x128xf32>
    %237 = tpu.matmul %234, %236, %cst_82 {dimension_numbers = #tpu.dot_dimension_numbers<[1], [0], [0], [1], [0, 0, 1, 1], [], []>} : vector<16x32xbf16>, vector<32x128xbf16>, vector<16x128xf32> -> vector<16x128xf32>
    %238 = arith.addf %233, %237 : vector<16x128xf32>
    %c15_i32 = arith.constant 15 : i32
    %239 = tpu.dynamic_rotate %221 by %c15_i32 dim 0 : vector<16x32xf32>, i32 -> vector<16x32xf32>
    %cst_83 = arith.constant 0.000000e+00 : f32
    %240 = vector.shape_cast %129 : vector<16x1xi1> to vector<16x1xi1>
    %241 = vector.broadcast %240 : vector<16x1xi1> to vector<16x32xi1>
    %242 = vector.broadcast %cst_83 : f32 to vector<16x32xf32>
    %243 = arith.select %241, %239, %242 : vector<16x32xi1>, vector<16x32xf32>
    %244 = arith.truncf %243 : vector<16x32xf32> to vector<16x32xbf16>
    %c0_84 = arith.constant 0 : index
    %c2 = arith.constant 2 : index
    %c0_85 = arith.constant 0 : index
    %c0_86 = arith.constant 0 : index
    %245 = vector.load %arg4[%c0_84, %c2, %c0_85, %c0_86] : memref<2x3x32x128xbf16, #tpu.memory_space<vmem>>, vector<1x1x32x128xbf16>
    %246 = vector.shape_cast %245 : vector<1x1x32x128xbf16> to vector<32x128xbf16>
    %cst_87 = arith.constant dense<0.000000e+00> : vector<16x128xf32>
    %247 = tpu.matmul %244, %246, %cst_87 {dimension_numbers = #tpu.dot_dimension_numbers<[1], [0], [0], [1], [0, 0, 1, 1], [], []>} : vector<16x32xbf16>, vector<32x128xbf16>, vector<16x128xf32> -> vector<16x128xf32>
    %248 = arith.addf %238, %247 : vector<16x128xf32>
    %249 = vector.broadcast %222 : vector<1x128xf32> to vector<16x128xf32>
    %250 = arith.addf %248, %249 : vector<16x128xf32>
    %cst_88 = arith.constant 0.000000e+00 : f32
    %251 = vector.broadcast %cst_88 : f32 to vector<16x128xf32>
    %252 = arith.maximumf %250, %251 : vector<16x128xf32>
    %253 = vector.extract_strided_slice %131 {offsets = [5, 0], sizes = [1, 128], strides = [1, 1]} : vector<8x128xf32> to vector<1x128xf32>
    %cst_89 = arith.constant 0.000000e+00 : f32
    %254 = vector.broadcast %cst_89 : f32 to vector<16x128xf32>
    %c1_i32_90 = arith.constant 1 : i32
    %255 = tpu.dynamic_rotate %252 by %c1_i32_90 dim 0 : vector<16x128xf32>, i32 -> vector<16x128xf32>
    %cst_91 = arith.constant 0.000000e+00 : f32
    %256 = vector.shape_cast %96 : vector<16x1xi1> to vector<16x1xi1>
    %257 = vector.broadcast %256 : vector<16x1xi1> to vector<16x128xi1>
    %258 = vector.broadcast %cst_91 : f32 to vector<16x128xf32>
    %259 = arith.select %257, %255, %258 : vector<16x128xi1>, vector<16x128xf32>
    %260 = arith.truncf %259 : vector<16x128xf32> to vector<16x128xbf16>
    %c0_92 = arith.constant 0 : index
    %c0_93 = arith.constant 0 : index
    %c0_94 = arith.constant 0 : index
    %c0_95 = arith.constant 0 : index
    %261 = vector.load %arg5[%c0_92, %c0_93, %c0_94, %c0_95] : memref<2x3x128x128xbf16, #tpu.memory_space<vmem>>, vector<1x1x128x128xbf16>
    %262 = vector.shape_cast %261 : vector<1x1x128x128xbf16> to vector<128x128xbf16>
    %cst_96 = arith.constant dense<0.000000e+00> : vector<16x128xf32>
    %263 = tpu.matmul %260, %262, %cst_96 {dimension_numbers = #tpu.dot_dimension_numbers<[1], [0], [0], [1], [0, 0, 1, 1], [], []>} : vector<16x128xbf16>, vector<128x128xbf16>, vector<16x128xf32> -> vector<16x128xf32>
    %264 = arith.addf %254, %263 : vector<16x128xf32>
    %265 = arith.truncf %252 : vector<16x128xf32> to vector<16x128xbf16>
    %c0_97 = arith.constant 0 : index
    %c1_98 = arith.constant 1 : index
    %c0_99 = arith.constant 0 : index
    %c0_100 = arith.constant 0 : index
    %266 = vector.load %arg5[%c0_97, %c1_98, %c0_99, %c0_100] : memref<2x3x128x128xbf16, #tpu.memory_space<vmem>>, vector<1x1x128x128xbf16>
    %267 = vector.shape_cast %266 : vector<1x1x128x128xbf16> to vector<128x128xbf16>
    %cst_101 = arith.constant dense<0.000000e+00> : vector<16x128xf32>
    %268 = tpu.matmul %265, %267, %cst_101 {dimension_numbers = #tpu.dot_dimension_numbers<[1], [0], [0], [1], [0, 0, 1, 1], [], []>} : vector<16x128xbf16>, vector<128x128xbf16>, vector<16x128xf32> -> vector<16x128xf32>
    %269 = arith.addf %264, %268 : vector<16x128xf32>
    %c15_i32_102 = arith.constant 15 : i32
    %270 = tpu.dynamic_rotate %252 by %c15_i32_102 dim 0 : vector<16x128xf32>, i32 -> vector<16x128xf32>
    %cst_103 = arith.constant 0.000000e+00 : f32
    %271 = vector.shape_cast %129 : vector<16x1xi1> to vector<16x1xi1>
    %272 = vector.broadcast %271 : vector<16x1xi1> to vector<16x128xi1>
    %273 = vector.broadcast %cst_103 : f32 to vector<16x128xf32>
    %274 = arith.select %272, %270, %273 : vector<16x128xi1>, vector<16x128xf32>
    %275 = arith.truncf %274 : vector<16x128xf32> to vector<16x128xbf16>
    %c0_104 = arith.constant 0 : index
    %c2_105 = arith.constant 2 : index
    %c0_106 = arith.constant 0 : index
    %c0_107 = arith.constant 0 : index
    %276 = vector.load %arg5[%c0_104, %c2_105, %c0_106, %c0_107] : memref<2x3x128x128xbf16, #tpu.memory_space<vmem>>, vector<1x1x128x128xbf16>
    %277 = vector.shape_cast %276 : vector<1x1x128x128xbf16> to vector<128x128xbf16>
    %cst_108 = arith.constant dense<0.000000e+00> : vector<16x128xf32>
    %278 = tpu.matmul %275, %277, %cst_108 {dimension_numbers = #tpu.dot_dimension_numbers<[1], [0], [0], [1], [0, 0, 1, 1], [], []>} : vector<16x128xbf16>, vector<128x128xbf16>, vector<16x128xf32> -> vector<16x128xf32>
    %279 = arith.addf %269, %278 : vector<16x128xf32>
    %280 = vector.broadcast %253 : vector<1x128xf32> to vector<16x128xf32>
    %281 = arith.addf %279, %280 : vector<16x128xf32>
    %282 = vector.extract_strided_slice %281 {offsets = [0, 0], sizes = [16, 32], strides = [1, 1]} : vector<16x128xf32> to vector<16x32xf32>
    %283 = arith.addf %282, %221 : vector<16x32xf32>
    %cst_109 = arith.constant dense<0.000000e+00> : vector<16xf32>
    %284 = vector.multi_reduction <add>, %283, %cst_109 [1] : vector<16x32xf32> to vector<16xf32>
    %285 = vector.shape_cast %284 : vector<16xf32> to vector<16x1xf32>
    %cst_110 = arith.constant 3.200000e+01 : f32
    %286 = vector.broadcast %cst_110 : f32 to vector<16x1xf32>
    %287 = arith.divf %285, %286 : vector<16x1xf32>
    %288 = vector.broadcast %287 : vector<16x1xf32> to vector<16x32xf32>
    %289 = arith.subf %283, %288 : vector<16x32xf32>
    %290 = arith.mulf %289, %289 : vector<16x32xf32>
    %cst_111 = arith.constant dense<0.000000e+00> : vector<16xf32>
    %291 = vector.multi_reduction <add>, %290, %cst_111 [1] : vector<16x32xf32> to vector<16xf32>
    %292 = vector.shape_cast %291 : vector<16xf32> to vector<16x1xf32>
    %cst_112 = arith.constant 3.200000e+01 : f32
    %293 = vector.broadcast %cst_112 : f32 to vector<16x1xf32>
    %294 = arith.divf %292, %293 : vector<16x1xf32>
    %295 = vector.broadcast %287 : vector<16x1xf32> to vector<16x32xf32>
    %296 = arith.subf %283, %295 : vector<16x32xf32>
    %cst_113 = arith.constant 9.99999974E-6 : f32
    %297 = vector.broadcast %cst_113 : f32 to vector<16x1xf32>
    %298 = arith.addf %294, %297 : vector<16x1xf32>
    %299 = math.rsqrt %298 : vector<16x1xf32>
    %300 = vector.broadcast %299 : vector<16x1xf32> to vector<16x32xf32>
    %301 = arith.mulf %296, %300 : vector<16x32xf32>
    %302 = vector.broadcast %134 : vector<1x32xf32> to vector<16x32xf32>
    %303 = arith.mulf %301, %302 : vector<16x32xf32>
    %304 = vector.broadcast %135 : vector<1x32xf32> to vector<16x32xf32>
    %305 = arith.addf %303, %304 : vector<16x32xf32>
    %cst_114 = arith.constant 0.000000e+00 : f32
    %306 = vector.shape_cast %42 : vector<16x1xi1> to vector<16x1xi1>
    %307 = vector.broadcast %306 : vector<16x1xi1> to vector<16x32xi1>
    %308 = vector.broadcast %cst_114 : f32 to vector<16x32xf32>
    %309 = arith.select %307, %305, %308 : vector<16x32xi1>, vector<16x32xf32>
    %c1_115 = arith.constant 1 : index
    %c0_116 = arith.constant 0 : index
    %c0_117 = arith.constant 0 : index
    %310 = vector.load %arg6[%c1_115, %c0_116, %c0_117] : memref<2x8x128xf32, #tpu.memory_space<vmem>>, vector<1x8x128xf32>
    %311 = vector.shape_cast %310 : vector<1x8x128xf32> to vector<8x128xf32>
    %312 = vector.extract_strided_slice %311 {offsets = [2, 0], sizes = [1, 32], strides = [1, 1]} : vector<8x128xf32> to vector<1x32xf32>
    %313 = vector.extract_strided_slice %311 {offsets = [3, 0], sizes = [1, 32], strides = [1, 1]} : vector<8x128xf32> to vector<1x32xf32>
    %314 = vector.extract_strided_slice %311 {offsets = [6, 0], sizes = [1, 32], strides = [1, 1]} : vector<8x128xf32> to vector<1x32xf32>
    %315 = vector.extract_strided_slice %311 {offsets = [7, 0], sizes = [1, 32], strides = [1, 1]} : vector<8x128xf32> to vector<1x32xf32>
    %c1_118 = arith.constant 1 : index
    %c0_119 = arith.constant 0 : index
    %c0_120 = arith.constant 0 : index
    %316 = vector.load %arg3[%c1_118, %c0_119, %c0_120] : memref<2x32x256xbf16, #tpu.memory_space<vmem>>, vector<1x32x128xbf16>
    %317 = vector.shape_cast %316 : vector<1x32x128xbf16> to vector<32x128xbf16>
    %c1_121 = arith.constant 1 : index
    %c0_122 = arith.constant 0 : index
    %c128_123 = arith.constant 128 : index
    %318 = vector.load %arg3[%c1_121, %c0_122, %c128_123] : memref<2x32x256xbf16, #tpu.memory_space<vmem>>, vector<1x32x32xbf16>
    %319 = vector.shape_cast %318 : vector<1x32x32xbf16> to vector<32x32xbf16>
    %320 = arith.truncf %309 : vector<16x32xf32> to vector<16x32xbf16>
    %cst_124 = arith.constant dense<0.000000e+00> : vector<16x128xf32>
    %321 = tpu.matmul %320, %317, %cst_124 {dimension_numbers = #tpu.dot_dimension_numbers<[1], [0], [0], [1], [0, 0, 1, 1], [], []>} : vector<16x32xbf16>, vector<32x128xbf16>, vector<16x128xf32> -> vector<16x128xf32>
    %322 = vector.extract_strided_slice %311 {offsets = [0, 0], sizes = [1, 128], strides = [1, 1]} : vector<8x128xf32> to vector<1x128xf32>
    %323 = vector.broadcast %322 : vector<1x128xf32> to vector<16x128xf32>
    %324 = arith.addf %321, %323 : vector<16x128xf32>
    %cst_125 = arith.constant 0.000000e+00 : f32
    %325 = vector.broadcast %cst_125 : f32 to vector<16x32xf32>
    %326 = vector.extract_strided_slice %324 {offsets = [0, 0], sizes = [16, 16], strides = [1, 1]} : vector<16x128xf32> to vector<16x16xf32>
    %327 = vector.extract_strided_slice %324 {offsets = [0, 32], sizes = [16, 16], strides = [1, 1]} : vector<16x128xf32> to vector<16x16xf32>
    %328 = vector.extract_strided_slice %324 {offsets = [0, 64], sizes = [16, 16], strides = [1, 1]} : vector<16x128xf32> to vector<16x16xf32>
    %cst_126 = arith.constant dense<0.000000e+00> : vector<16x16xf32>
    %329 = tpu.matmul %326, %327, %cst_126 {dimension_numbers = #tpu.dot_dimension_numbers<[1], [1], [0], [0], [0, 0, 1, 0], [], []>} : vector<16x16xf32>, vector<16x16xf32>, vector<16x16xf32> -> vector<16x16xf32>
    %cst_127 = arith.constant 2.500000e-01 : f32
    %330 = vector.broadcast %cst_127 : f32 to vector<16x16xf32>
    %331 = arith.mulf %329, %330 : vector<16x16xf32>
    %cst_128 = arith.constant -1.000000e+30 : f32
    %332 = vector.broadcast %cst_128 : f32 to vector<16x16xf32>
    %333 = arith.select %63, %331, %332 : vector<16x16xi1>, vector<16x16xf32>
    %cst_129 = arith.constant dense<0xFF800000> : vector<16xf32>
    %334 = vector.multi_reduction <maximumf>, %333, %cst_129 [1] : vector<16x16xf32> to vector<16xf32>
    %335 = vector.shape_cast %334 : vector<16xf32> to vector<16x1xf32>
    %336 = vector.broadcast %335 : vector<16x1xf32> to vector<16x16xf32>
    %337 = arith.subf %333, %336 : vector<16x16xf32>
    %338 = math.exp %337 : vector<16x16xf32>
    %cst_130 = arith.constant dense<0.000000e+00> : vector<16xf32>
    %339 = vector.multi_reduction <add>, %338, %cst_130 [1] : vector<16x16xf32> to vector<16xf32>
    %340 = vector.shape_cast %339 : vector<16xf32> to vector<16x1xf32>
    %341 = tpu.reciprocal %340 {approx = true} : vector<16x1xf32> -> vector<16x1xf32>
    %342 = vector.broadcast %341 : vector<16x1xf32> to vector<16x16xf32>
    %343 = arith.mulf %338, %342 : vector<16x16xf32>
    %cst_131 = arith.constant dense<0.000000e+00> : vector<16x16xf32>
    %344 = tpu.matmul %343, %328, %cst_131 {dimension_numbers = #tpu.dot_dimension_numbers<[1], [0], [0], [1], [0, 0, 1, 1], [], []>} : vector<16x16xf32>, vector<16x16xf32>, vector<16x16xf32> -> vector<16x16xf32>
    %345 = arith.truncf %344 : vector<16x16xf32> to vector<16x16xbf16>
    %346 = vector.extract_strided_slice %319 {offsets = [0, 0], sizes = [16, 32], strides = [1, 1]} : vector<32x32xbf16> to vector<16x32xbf16>
    %cst_132 = arith.constant dense<0.000000e+00> : vector<16x32xf32>
    %347 = tpu.matmul %345, %346, %cst_132 {dimension_numbers = #tpu.dot_dimension_numbers<[1], [0], [0], [1], [0, 0, 1, 1], [], []>} : vector<16x16xbf16>, vector<16x32xbf16>, vector<16x32xf32> -> vector<16x32xf32>
    %348 = arith.addf %325, %347 : vector<16x32xf32>
    %349 = vector.extract_strided_slice %324 {offsets = [0, 16], sizes = [16, 16], strides = [1, 1]} : vector<16x128xf32> to vector<16x16xf32>
    %350 = vector.extract_strided_slice %324 {offsets = [0, 48], sizes = [16, 16], strides = [1, 1]} : vector<16x128xf32> to vector<16x16xf32>
    %351 = vector.extract_strided_slice %324 {offsets = [0, 80], sizes = [16, 16], strides = [1, 1]} : vector<16x128xf32> to vector<16x16xf32>
    %cst_133 = arith.constant dense<0.000000e+00> : vector<16x16xf32>
    %352 = tpu.matmul %349, %350, %cst_133 {dimension_numbers = #tpu.dot_dimension_numbers<[1], [1], [0], [0], [0, 0, 1, 0], [], []>} : vector<16x16xf32>, vector<16x16xf32>, vector<16x16xf32> -> vector<16x16xf32>
    %cst_134 = arith.constant 2.500000e-01 : f32
    %353 = vector.broadcast %cst_134 : f32 to vector<16x16xf32>
    %354 = arith.mulf %352, %353 : vector<16x16xf32>
    %cst_135 = arith.constant -1.000000e+30 : f32
    %355 = vector.broadcast %cst_135 : f32 to vector<16x16xf32>
    %356 = arith.select %63, %354, %355 : vector<16x16xi1>, vector<16x16xf32>
    %cst_136 = arith.constant dense<0xFF800000> : vector<16xf32>
    %357 = vector.multi_reduction <maximumf>, %356, %cst_136 [1] : vector<16x16xf32> to vector<16xf32>
    %358 = vector.shape_cast %357 : vector<16xf32> to vector<16x1xf32>
    %359 = vector.broadcast %358 : vector<16x1xf32> to vector<16x16xf32>
    %360 = arith.subf %356, %359 : vector<16x16xf32>
    %361 = math.exp %360 : vector<16x16xf32>
    %cst_137 = arith.constant dense<0.000000e+00> : vector<16xf32>
    %362 = vector.multi_reduction <add>, %361, %cst_137 [1] : vector<16x16xf32> to vector<16xf32>
    %363 = vector.shape_cast %362 : vector<16xf32> to vector<16x1xf32>
    %364 = tpu.reciprocal %363 {approx = true} : vector<16x1xf32> -> vector<16x1xf32>
    %365 = vector.broadcast %364 : vector<16x1xf32> to vector<16x16xf32>
    %366 = arith.mulf %361, %365 : vector<16x16xf32>
    %cst_138 = arith.constant dense<0.000000e+00> : vector<16x16xf32>
    %367 = tpu.matmul %366, %351, %cst_138 {dimension_numbers = #tpu.dot_dimension_numbers<[1], [0], [0], [1], [0, 0, 1, 1], [], []>} : vector<16x16xf32>, vector<16x16xf32>, vector<16x16xf32> -> vector<16x16xf32>
    %368 = arith.truncf %367 : vector<16x16xf32> to vector<16x16xbf16>
    %369 = vector.extract_strided_slice %319 {offsets = [16, 0], sizes = [16, 32], strides = [1, 1]} : vector<32x32xbf16> to vector<16x32xbf16>
    %cst_139 = arith.constant dense<0.000000e+00> : vector<16x32xf32>
    %370 = tpu.matmul %368, %369, %cst_139 {dimension_numbers = #tpu.dot_dimension_numbers<[1], [0], [0], [1], [0, 0, 1, 1], [], []>} : vector<16x16xbf16>, vector<16x32xbf16>, vector<16x32xf32> -> vector<16x32xf32>
    %371 = arith.addf %348, %370 : vector<16x32xf32>
    %372 = vector.extract_strided_slice %311 {offsets = [1, 0], sizes = [1, 32], strides = [1, 1]} : vector<8x128xf32> to vector<1x32xf32>
    %373 = vector.broadcast %372 : vector<1x32xf32> to vector<16x32xf32>
    %374 = arith.addf %371, %373 : vector<16x32xf32>
    %375 = arith.addf %374, %309 : vector<16x32xf32>
    %cst_140 = arith.constant dense<0.000000e+00> : vector<16xf32>
    %376 = vector.multi_reduction <add>, %375, %cst_140 [1] : vector<16x32xf32> to vector<16xf32>
    %377 = vector.shape_cast %376 : vector<16xf32> to vector<16x1xf32>
    %cst_141 = arith.constant 3.200000e+01 : f32
    %378 = vector.broadcast %cst_141 : f32 to vector<16x1xf32>
    %379 = arith.divf %377, %378 : vector<16x1xf32>
    %380 = vector.broadcast %379 : vector<16x1xf32> to vector<16x32xf32>
    %381 = arith.subf %375, %380 : vector<16x32xf32>
    %382 = arith.mulf %381, %381 : vector<16x32xf32>
    %cst_142 = arith.constant dense<0.000000e+00> : vector<16xf32>
    %383 = vector.multi_reduction <add>, %382, %cst_142 [1] : vector<16x32xf32> to vector<16xf32>
    %384 = vector.shape_cast %383 : vector<16xf32> to vector<16x1xf32>
    %cst_143 = arith.constant 3.200000e+01 : f32
    %385 = vector.broadcast %cst_143 : f32 to vector<16x1xf32>
    %386 = arith.divf %384, %385 : vector<16x1xf32>
    %387 = vector.broadcast %379 : vector<16x1xf32> to vector<16x32xf32>
    %388 = arith.subf %375, %387 : vector<16x32xf32>
    %cst_144 = arith.constant 9.99999974E-6 : f32
    %389 = vector.broadcast %cst_144 : f32 to vector<16x1xf32>
    %390 = arith.addf %386, %389 : vector<16x1xf32>
    %391 = math.rsqrt %390 : vector<16x1xf32>
    %392 = vector.broadcast %391 : vector<16x1xf32> to vector<16x32xf32>
    %393 = arith.mulf %388, %392 : vector<16x32xf32>
    %394 = vector.broadcast %312 : vector<1x32xf32> to vector<16x32xf32>
    %395 = arith.mulf %393, %394 : vector<16x32xf32>
    %396 = vector.broadcast %313 : vector<1x32xf32> to vector<16x32xf32>
    %397 = arith.addf %395, %396 : vector<16x32xf32>
    %cst_145 = arith.constant 0.000000e+00 : f32
    %398 = vector.shape_cast %42 : vector<16x1xi1> to vector<16x1xi1>
    %399 = vector.broadcast %398 : vector<16x1xi1> to vector<16x32xi1>
    %400 = vector.broadcast %cst_145 : f32 to vector<16x32xf32>
    %401 = arith.select %399, %397, %400 : vector<16x32xi1>, vector<16x32xf32>
    %402 = vector.extract_strided_slice %311 {offsets = [4, 0], sizes = [1, 128], strides = [1, 1]} : vector<8x128xf32> to vector<1x128xf32>
    %cst_146 = arith.constant 0.000000e+00 : f32
    %403 = vector.broadcast %cst_146 : f32 to vector<16x128xf32>
    %c1_i32_147 = arith.constant 1 : i32
    %404 = tpu.dynamic_rotate %401 by %c1_i32_147 dim 0 : vector<16x32xf32>, i32 -> vector<16x32xf32>
    %cst_148 = arith.constant 0.000000e+00 : f32
    %405 = vector.shape_cast %96 : vector<16x1xi1> to vector<16x1xi1>
    %406 = vector.broadcast %405 : vector<16x1xi1> to vector<16x32xi1>
    %407 = vector.broadcast %cst_148 : f32 to vector<16x32xf32>
    %408 = arith.select %406, %404, %407 : vector<16x32xi1>, vector<16x32xf32>
    %409 = arith.truncf %408 : vector<16x32xf32> to vector<16x32xbf16>
    %c1_149 = arith.constant 1 : index
    %c0_150 = arith.constant 0 : index
    %c0_151 = arith.constant 0 : index
    %c0_152 = arith.constant 0 : index
    %410 = vector.load %arg4[%c1_149, %c0_150, %c0_151, %c0_152] : memref<2x3x32x128xbf16, #tpu.memory_space<vmem>>, vector<1x1x32x128xbf16>
    %411 = vector.shape_cast %410 : vector<1x1x32x128xbf16> to vector<32x128xbf16>
    %cst_153 = arith.constant dense<0.000000e+00> : vector<16x128xf32>
    %412 = tpu.matmul %409, %411, %cst_153 {dimension_numbers = #tpu.dot_dimension_numbers<[1], [0], [0], [1], [0, 0, 1, 1], [], []>} : vector<16x32xbf16>, vector<32x128xbf16>, vector<16x128xf32> -> vector<16x128xf32>
    %413 = arith.addf %403, %412 : vector<16x128xf32>
    %414 = arith.truncf %401 : vector<16x32xf32> to vector<16x32xbf16>
    %c1_154 = arith.constant 1 : index
    %c1_155 = arith.constant 1 : index
    %c0_156 = arith.constant 0 : index
    %c0_157 = arith.constant 0 : index
    %415 = vector.load %arg4[%c1_154, %c1_155, %c0_156, %c0_157] : memref<2x3x32x128xbf16, #tpu.memory_space<vmem>>, vector<1x1x32x128xbf16>
    %416 = vector.shape_cast %415 : vector<1x1x32x128xbf16> to vector<32x128xbf16>
    %cst_158 = arith.constant dense<0.000000e+00> : vector<16x128xf32>
    %417 = tpu.matmul %414, %416, %cst_158 {dimension_numbers = #tpu.dot_dimension_numbers<[1], [0], [0], [1], [0, 0, 1, 1], [], []>} : vector<16x32xbf16>, vector<32x128xbf16>, vector<16x128xf32> -> vector<16x128xf32>
    %418 = arith.addf %413, %417 : vector<16x128xf32>
    %c15_i32_159 = arith.constant 15 : i32
    %419 = tpu.dynamic_rotate %401 by %c15_i32_159 dim 0 : vector<16x32xf32>, i32 -> vector<16x32xf32>
    %cst_160 = arith.constant 0.000000e+00 : f32
    %420 = vector.shape_cast %129 : vector<16x1xi1> to vector<16x1xi1>
    %421 = vector.broadcast %420 : vector<16x1xi1> to vector<16x32xi1>
    %422 = vector.broadcast %cst_160 : f32 to vector<16x32xf32>
    %423 = arith.select %421, %419, %422 : vector<16x32xi1>, vector<16x32xf32>
    %424 = arith.truncf %423 : vector<16x32xf32> to vector<16x32xbf16>
    %c1_161 = arith.constant 1 : index
    %c2_162 = arith.constant 2 : index
    %c0_163 = arith.constant 0 : index
    %c0_164 = arith.constant 0 : index
    %425 = vector.load %arg4[%c1_161, %c2_162, %c0_163, %c0_164] : memref<2x3x32x128xbf16, #tpu.memory_space<vmem>>, vector<1x1x32x128xbf16>
    %426 = vector.shape_cast %425 : vector<1x1x32x128xbf16> to vector<32x128xbf16>
    %cst_165 = arith.constant dense<0.000000e+00> : vector<16x128xf32>
    %427 = tpu.matmul %424, %426, %cst_165 {dimension_numbers = #tpu.dot_dimension_numbers<[1], [0], [0], [1], [0, 0, 1, 1], [], []>} : vector<16x32xbf16>, vector<32x128xbf16>, vector<16x128xf32> -> vector<16x128xf32>
    %428 = arith.addf %418, %427 : vector<16x128xf32>
    %429 = vector.broadcast %402 : vector<1x128xf32> to vector<16x128xf32>
    %430 = arith.addf %428, %429 : vector<16x128xf32>
    %cst_166 = arith.constant 0.000000e+00 : f32
    %431 = vector.broadcast %cst_166 : f32 to vector<16x128xf32>
    %432 = arith.maximumf %430, %431 : vector<16x128xf32>
    %433 = vector.extract_strided_slice %311 {offsets = [5, 0], sizes = [1, 128], strides = [1, 1]} : vector<8x128xf32> to vector<1x128xf32>
    %cst_167 = arith.constant 0.000000e+00 : f32
    %434 = vector.broadcast %cst_167 : f32 to vector<16x128xf32>
    %c1_i32_168 = arith.constant 1 : i32
    %435 = tpu.dynamic_rotate %432 by %c1_i32_168 dim 0 : vector<16x128xf32>, i32 -> vector<16x128xf32>
    %cst_169 = arith.constant 0.000000e+00 : f32
    %436 = vector.shape_cast %96 : vector<16x1xi1> to vector<16x1xi1>
    %437 = vector.broadcast %436 : vector<16x1xi1> to vector<16x128xi1>
    %438 = vector.broadcast %cst_169 : f32 to vector<16x128xf32>
    %439 = arith.select %437, %435, %438 : vector<16x128xi1>, vector<16x128xf32>
    %440 = arith.truncf %439 : vector<16x128xf32> to vector<16x128xbf16>
    %c1_170 = arith.constant 1 : index
    %c0_171 = arith.constant 0 : index
    %c0_172 = arith.constant 0 : index
    %c0_173 = arith.constant 0 : index
    %441 = vector.load %arg5[%c1_170, %c0_171, %c0_172, %c0_173] : memref<2x3x128x128xbf16, #tpu.memory_space<vmem>>, vector<1x1x128x128xbf16>
    %442 = vector.shape_cast %441 : vector<1x1x128x128xbf16> to vector<128x128xbf16>
    %cst_174 = arith.constant dense<0.000000e+00> : vector<16x128xf32>
    %443 = tpu.matmul %440, %442, %cst_174 {dimension_numbers = #tpu.dot_dimension_numbers<[1], [0], [0], [1], [0, 0, 1, 1], [], []>} : vector<16x128xbf16>, vector<128x128xbf16>, vector<16x128xf32> -> vector<16x128xf32>
    %444 = arith.addf %434, %443 : vector<16x128xf32>
    %445 = arith.truncf %432 : vector<16x128xf32> to vector<16x128xbf16>
    %c1_175 = arith.constant 1 : index
    %c1_176 = arith.constant 1 : index
    %c0_177 = arith.constant 0 : index
    %c0_178 = arith.constant 0 : index
    %446 = vector.load %arg5[%c1_175, %c1_176, %c0_177, %c0_178] : memref<2x3x128x128xbf16, #tpu.memory_space<vmem>>, vector<1x1x128x128xbf16>
    %447 = vector.shape_cast %446 : vector<1x1x128x128xbf16> to vector<128x128xbf16>
    %cst_179 = arith.constant dense<0.000000e+00> : vector<16x128xf32>
    %448 = tpu.matmul %445, %447, %cst_179 {dimension_numbers = #tpu.dot_dimension_numbers<[1], [0], [0], [1], [0, 0, 1, 1], [], []>} : vector<16x128xbf16>, vector<128x128xbf16>, vector<16x128xf32> -> vector<16x128xf32>
    %449 = arith.addf %444, %448 : vector<16x128xf32>
    %c15_i32_180 = arith.constant 15 : i32
    %450 = tpu.dynamic_rotate %432 by %c15_i32_180 dim 0 : vector<16x128xf32>, i32 -> vector<16x128xf32>
    %cst_181 = arith.constant 0.000000e+00 : f32
    %451 = vector.shape_cast %129 : vector<16x1xi1> to vector<16x1xi1>
    %452 = vector.broadcast %451 : vector<16x1xi1> to vector<16x128xi1>
    %453 = vector.broadcast %cst_181 : f32 to vector<16x128xf32>
    %454 = arith.select %452, %450, %453 : vector<16x128xi1>, vector<16x128xf32>
    %455 = arith.truncf %454 : vector<16x128xf32> to vector<16x128xbf16>
    %c1_182 = arith.constant 1 : index
    %c2_183 = arith.constant 2 : index
    %c0_184 = arith.constant 0 : index
    %c0_185 = arith.constant 0 : index
    %456 = vector.load %arg5[%c1_182, %c2_183, %c0_184, %c0_185] : memref<2x3x128x128xbf16, #tpu.memory_space<vmem>>, vector<1x1x128x128xbf16>
    %457 = vector.shape_cast %456 : vector<1x1x128x128xbf16> to vector<128x128xbf16>
    %cst_186 = arith.constant dense<0.000000e+00> : vector<16x128xf32>
    %458 = tpu.matmul %455, %457, %cst_186 {dimension_numbers = #tpu.dot_dimension_numbers<[1], [0], [0], [1], [0, 0, 1, 1], [], []>} : vector<16x128xbf16>, vector<128x128xbf16>, vector<16x128xf32> -> vector<16x128xf32>
    %459 = arith.addf %449, %458 : vector<16x128xf32>
    %460 = vector.broadcast %433 : vector<1x128xf32> to vector<16x128xf32>
    %461 = arith.addf %459, %460 : vector<16x128xf32>
    %462 = vector.extract_strided_slice %461 {offsets = [0, 0], sizes = [16, 32], strides = [1, 1]} : vector<16x128xf32> to vector<16x32xf32>
    %463 = arith.addf %462, %401 : vector<16x32xf32>
    %cst_187 = arith.constant dense<0.000000e+00> : vector<16xf32>
    %464 = vector.multi_reduction <add>, %463, %cst_187 [1] : vector<16x32xf32> to vector<16xf32>
    %465 = vector.shape_cast %464 : vector<16xf32> to vector<16x1xf32>
    %cst_188 = arith.constant 3.200000e+01 : f32
    %466 = vector.broadcast %cst_188 : f32 to vector<16x1xf32>
    %467 = arith.divf %465, %466 : vector<16x1xf32>
    %468 = vector.broadcast %467 : vector<16x1xf32> to vector<16x32xf32>
    %469 = arith.subf %463, %468 : vector<16x32xf32>
    %470 = arith.mulf %469, %469 : vector<16x32xf32>
    %cst_189 = arith.constant dense<0.000000e+00> : vector<16xf32>
    %471 = vector.multi_reduction <add>, %470, %cst_189 [1] : vector<16x32xf32> to vector<16xf32>
    %472 = vector.shape_cast %471 : vector<16xf32> to vector<16x1xf32>
    %cst_190 = arith.constant 3.200000e+01 : f32
    %473 = vector.broadcast %cst_190 : f32 to vector<16x1xf32>
    %474 = arith.divf %472, %473 : vector<16x1xf32>
    %475 = vector.broadcast %467 : vector<16x1xf32> to vector<16x32xf32>
    %476 = arith.subf %463, %475 : vector<16x32xf32>
    %cst_191 = arith.constant 9.99999974E-6 : f32
    %477 = vector.broadcast %cst_191 : f32 to vector<16x1xf32>
    %478 = arith.addf %474, %477 : vector<16x1xf32>
    %479 = math.rsqrt %478 : vector<16x1xf32>
    %480 = vector.broadcast %479 : vector<16x1xf32> to vector<16x32xf32>
    %481 = arith.mulf %476, %480 : vector<16x32xf32>
    %482 = vector.broadcast %314 : vector<1x32xf32> to vector<16x32xf32>
    %483 = arith.mulf %481, %482 : vector<16x32xf32>
    %484 = vector.broadcast %315 : vector<1x32xf32> to vector<16x32xf32>
    %485 = arith.addf %483, %484 : vector<16x32xf32>
    %cst_192 = arith.constant 0.000000e+00 : f32
    %486 = vector.shape_cast %42 : vector<16x1xi1> to vector<16x1xi1>
    %487 = vector.broadcast %486 : vector<16x1xi1> to vector<16x32xi1>
    %488 = vector.broadcast %cst_192 : f32 to vector<16x32xf32>
    %489 = arith.select %487, %485, %488 : vector<16x32xi1>, vector<16x32xf32>
    %c0_193 = arith.constant 0 : index
    %c0_194 = arith.constant 0 : index
    %490 = vector.load %arg7[%c0_193, %c0_194] : memref<16x32xf32, #tpu.memory_space<vmem>>, vector<16x32xf32>
    tpu.vector_store %arg7[%c0_193, %c0_194], %489 {strides = array<i32>} : memref<16x32xf32, #tpu.memory_space<vmem>>, vector<16x32xf32>,
    return
  }
  func.func @transform_0(%arg0: i32, %arg1: memref<2xi32, #tpu.memory_space<smem>>) -> (i32, i32) {
    %c0_i32 = arith.constant 0 : i32
    %c0_i32_0 = arith.constant 0 : i32
    %c0_i32_1 = arith.constant 0 : i32
    return %c0_i32, %c0_i32_0 : i32, i32
  }
  func.func @transform_1(%arg0: i32, %arg1: memref<2xi32, #tpu.memory_space<smem>>) -> (i32, i32, i32) {
    %c0_i32 = arith.constant 0 : i32
    %c0_i32_0 = arith.constant 0 : i32
    %c0_i32_1 = arith.constant 0 : i32
    %c0_i32_2 = arith.constant 0 : i32
    return %c0_i32, %c0_i32_0, %c0_i32_1 : i32, i32, i32
  }
  func.func @transform_2(%arg0: i32, %arg1: memref<2xi32, #tpu.memory_space<smem>>) -> (i32, i32, i32, i32) {
    %c0_i32 = arith.constant 0 : i32
    %c0_i32_0 = arith.constant 0 : i32
    %c0_i32_1 = arith.constant 0 : i32
    %c0_i32_2 = arith.constant 0 : i32
    %c0_i32_3 = arith.constant 0 : i32
    return %c0_i32, %c0_i32_0, %c0_i32_1, %c0_i32_2 : i32, i32, i32, i32
  }
  func.func @transform_3(%arg0: i32, %arg1: memref<2xi32, #tpu.memory_space<smem>>) -> (i32, i32, i32, i32) {
    %c0_i32 = arith.constant 0 : i32
    %c0_i32_0 = arith.constant 0 : i32
    %c0_i32_1 = arith.constant 0 : i32
    %c0_i32_2 = arith.constant 0 : i32
    %c0_i32_3 = arith.constant 0 : i32
    return %c0_i32, %c0_i32_0, %c0_i32_1, %c0_i32_2 : i32, i32, i32, i32
  }
  func.func @transform_4(%arg0: i32, %arg1: memref<2xi32, #tpu.memory_space<smem>>) -> (i32, i32, i32) {
    %c0_i32 = arith.constant 0 : i32
    %c0_i32_0 = arith.constant 0 : i32
    %c0_i32_1 = arith.constant 0 : i32
    %c0_i32_2 = arith.constant 0 : i32
    return %c0_i32, %c0_i32_0, %c0_i32_1 : i32, i32, i32
  }
  func.func @transform_5(%arg0: i32, %arg1: memref<2xi32, #tpu.memory_space<smem>>) -> (i32, i32) {
    %c0_i32 = arith.constant 0 : i32
    %c0_i32_0 = arith.constant 0 : i32
    %c0_i32_1 = arith.constant 0 : i32
    return %c0_i32, %c0_i32_0 : i32, i32
  }
}

</mosaic_0001>

<llo_original>
// kernel: tpu_custom_call.1
$region0: #{tpu_custom_call.1}
  #allocation0 [shape = 'u32[]', space=smem, size = 0x4, offset = 0x4, fixed_abs, tag = 'smem constant byte address 0x4 - core index']
  #allocation1 [shape = 'u32[144,128]{1,0:T(1,128)}', space=vmem, size = 0x12000, scoped, tag = 'internal scratch']
  #allocation2 [shape = 's32[1]{0}', space=sflag, size = 0x4, scoped, tag = 'scoped memory for tpu_custom_call.1']
  #allocation3 [shape = 'u8[512]{0}', space=smem, size = 0x200, scoped, tag = 'prefetched SMEM operand 0']
  %s0 = inlined_call_operand.hbm [shape: s32[2], index: 0, kind: input, shape index: {}]
  %s1 = inlined_call_operand.hbm [shape: f32[16,32], index: 1, kind: input, shape index: {}]
  %s2 = inlined_call_operand.hbm [shape: bf16[2,32,256], index: 2, kind: input, shape index: {}]
  %s3 = inlined_call_operand.hbm [shape: bf16[2,3,32,128], index: 3, kind: input, shape index: {}]
  %s4 = inlined_call_operand.hbm [shape: bf16[2,3,128,128], index: 4, kind: input, shape index: {}]
  %s5 = inlined_call_operand.vmem [shape: f32[2,8,128], index: 5, kind: input, shape index: {}]
  %s6 = inlined_call_operand.hbm [shape: f32[16,32], index: 6, kind: output, shape index: {}]
  %s7 = sld [smem:[#allocation0]]
  $region46: #{tpu_custom_call.1} parent=0
    _
  %s9 = ssub.s32 1, %s7
  %s10 = scalar_select 0, %s9, %s7
  %12 = dma.hbm_to_smem %s0, 16, [#allocation3], [#allocation2]
  %13 = dma.done [#allocation2], 16
  %14 = sfence
  $region1: #{tpu_custom_call.1} parent=0
    #allocation4 [shape = 'u8[8192]{0}', space=vmem, size = 0x2000, scoped, tag = 'input window, operand 1, single buffered']
    #allocation5 [shape = 's32[1]{0}', space=sflag, size = 0x4, scoped, tag = 'scoped memory for tpu_custom_call.1']
    #allocation6 [shape = 's32[1]{0}', space=sflag, size = 0x4, scoped, tag = 'scoped memory for tpu_custom_call.1']
    #allocation7 [shape = 'u8[32768]{0}', space=vmem, size = 0x8000, scoped, tag = 'input window, operand 2, single buffered']
    #allocation8 [shape = 's32[1]{0}', space=sflag, size = 0x4, scoped, tag = 'scoped memory for tpu_custom_call.1']
    #allocation9 [shape = 'u8[49152]{0}', space=vmem, size = 0xc000, scoped, tag = 'input window, operand 3, single buffered']
    #allocation10 [shape = 'u8[196608]{0}', space=vmem, size = 0x30000, scoped, tag = 'input window, operand 4, single buffered']
    #allocation11 [shape = 's32[1]{0}', space=sflag, size = 0x4, scoped, tag = 'scoped memory for tpu_custom_call.1']
    #allocation12 [shape = 'u8[8192]{0}', space=vmem, size = 0x2000, scoped, tag = 'output window, operand 0, single buffered']
    %15 = vsyncpa [#allocation5], 0
    %16 = vsyncpa [#allocation8], 0
    %17 = vsyncpa [#allocation11], 0
    %18 = vsyncpa [#allocation6], 0
    // Predicated region
    $region2: #{tpu_custom_call.1} parent=1 // pred_check
      _
    $region3: #{tpu_custom_call.1} parent=1 // pred_check_branch
      %20 = sbr.rel (0) target = $region5
    $region4: #{tpu_custom_call.1} parent=1 // pred_region
      %s22 = ssub.s32 256, 256
      %23 = vsyncadd [#allocation5], %s22
      %s24 = sshll.u32 [#allocation4], 4
      %s25 = int_to_ptr.vmem [resolvable:$true] %s24
      %30 = dma.hbm_to_vmem [thread:$0]  %s1, 256, %s25, [#allocation5], 128, 128, 8
    $region5: #{tpu_custom_call.1} parent=1 // pred_fallthru
      _
    // Predicated region
    $region6: #{tpu_custom_call.1} parent=1 // pred_check
      _
    $region7: #{tpu_custom_call.1} parent=1 // pred_check_branch
      %32 = sbr.rel (0) target = $region9
    $region8: #{tpu_custom_call.1} parent=1 // pred_region
      %s34 = ssub.s32 1024, 1024
      %35 = vsyncadd [#allocation8], %s34
      %s36 = sshll.u32 [#allocation7], 4
      %s37 = int_to_ptr.vmem [resolvable:$true] %s36
      %42 = dma.hbm_to_vmem [thread:$0]  %s2, 1024, %s37, [#allocation8], 128, 128, 8
    $region9: #{tpu_custom_call.1} parent=1 // pred_fallthru
      _
    // Predicated region
    $region10: #{tpu_custom_call.1} parent=1 // pred_check
      _
    $region11: #{tpu_custom_call.1} parent=1 // pred_check_branch
      %44 = sbr.rel (0) target = $region13
    $region12: #{tpu_custom_call.1} parent=1 // pred_region
      %s46 = ssub.s32 1536, 1536
      %47 = vsyncadd [#allocation8], %s46
      %s48 = sshll.u32 [#allocation9], 4
      %s49 = int_to_ptr.vmem [resolvable:$true] %s48
      %54 = dma.hbm_to_vmem [thread:$0]  %s3, 1536, %s49, [#allocation8], 64, 64, 4
    $region13: #{tpu_custom_call.1} parent=1 // pred_fallthru
      _
    // Predicated region
    $region14: #{tpu_custom_call.1} parent=1 // pred_check
      _
    $region15: #{tpu_custom_call.1} parent=1 // pred_check_branch
      %56 = sbr.rel (0) target = $region17
    $region16: #{tpu_custom_call.1} parent=1 // pred_region
      %s58 = ssub.s32 6144, 6144
      %59 = vsyncadd [#allocation11], %s58
      %s60 = sshll.u32 [#allocation10], 4
      %s61 = int_to_ptr.vmem [resolvable:$true] %s60
      %66 = dma.hbm_to_vmem [thread:$0]  %s4, 6144, %s61, [#allocation11], 64, 64, 4
    $region17: #{tpu_custom_call.1} parent=1 // pred_fallthru
      _
    // Predicated region
    $region18: #{tpu_custom_call.1} parent=1 // pred_check
      _
    $region19: #{tpu_custom_call.1} parent=1 // pred_check_branch
      %68 = sbr.rel (0) target = $region21
    $region20: #{tpu_custom_call.1} parent=1 // pred_region
      _
    $region21: #{tpu_custom_call.1} parent=1 // pred_fallthru
      _
    // Predicated region
    $region22: #{tpu_custom_call.1} parent=1 // pred_check
      _
    $region23: #{tpu_custom_call.1} parent=1 // pred_check_branch
      %70 = sbr.rel (0) target = $region25
    $region24: #{tpu_custom_call.1} parent=1 // pred_region
      %71 = dma.done [#allocation5], 256
    $region25: #{tpu_custom_call.1} parent=1 // pred_fallthru
      _
    // Predicated region
    $region26: #{tpu_custom_call.1} parent=1 // pred_check
      _
    $region27: #{tpu_custom_call.1} parent=1 // pred_check_branch
      %73 = sbr.rel (0) target = $region29
    $region28: #{tpu_custom_call.1} parent=1 // pred_region
      %74 = dma.done [#allocation8], 1024
    $region29: #{tpu_custom_call.1} parent=1 // pred_fallthru
      _
    // Predicated region
    $region30: #{tpu_custom_call.1} parent=1 // pred_check
      _
    $region31: #{tpu_custom_call.1} parent=1 // pred_check_branch
      %76 = sbr.rel (0) target = $region33
    $region32: #{tpu_custom_call.1} parent=1 // pred_region
      %77 = dma.done [#allocation8], 1536
    $region33: #{tpu_custom_call.1} parent=1 // pred_fallthru
      _
    // Predicated region
    $region34: #{tpu_custom_call.1} parent=1 // pred_check
      _
    $region35: #{tpu_custom_call.1} parent=1 // pred_check_branch
      %79 = sbr.rel (0) target = $region37
    $region36: #{tpu_custom_call.1} parent=1 // pred_region
      %80 = dma.done [#allocation11], 6144
    $region37: #{tpu_custom_call.1} parent=1 // pred_fallthru
      _
    %v82 = vld [vmem:[#allocation4] sm:$0xff]
    %v83 = vld [vmem:[#allocation4 + $0x8] sm:$0xff]
    %v84 = vlaneseq
    %v85 = vshrl.u32 %v84, 7
    %v86 = vadd.s32 %v85, 8
    %v87 = vlaneseq
    %v88 = vand.u32 %v87, 127
    %s89 = sld [smem:[#allocation3]]
    %vm90 = vcmp.ge.s32.totalorder %v85, 0
    %vm91 = vcmp.ge.s32.totalorder %v86, 0
    %v92 = vstv %s89
    %vm93 = vcmp.lt.s32.totalorder %v85, %v92
    %vm94 = vcmp.lt.s32.totalorder %v86, %v92
    %vm95 = vmand %vm90, %vm93
    %vm96 = vmand %vm91, %vm94
    %vm97 = vcmp.ge.s32.totalorder %v88, 0
    %vm98 = vcmp.lt.s32.totalorder %v88, %v92
    %vm99 = vmand %vm97, %vm98
    %vm100 = vcmp.lt.s32.totalorder %v85, 8
    %vm101 = vcmp.lt.s32.totalorder %v86, 8
    %vm102 = vmand %vm90, %vm100
    %vm103 = vmand %vm91, %vm101
    %vm104 = vcmp.lt.s32.totalorder %v88, 8
    %vm105 = vmand %vm97, %vm104
    %vm106 = vmand %vm102, %vm105
    %vm107 = vmand %vm103, %vm105
    %s108 = sld [smem:[#allocation3 + $0x1]]
    %vm109 = vcmp.ge.s32.totalorder %v85, 8
    %vm110 = vcmp.ge.s32.totalorder %v86, 8
    %s111 = sadd.s32 %s108, 8
    %v112 = vstv %s111
    %vm113 = vcmp.lt.s32.totalorder %v85, %v112
    %vm114 = vcmp.lt.s32.totalorder %v86, %v112
    %vm115 = vmand %vm109, %vm113
    %vm116 = vmand %vm110, %vm114
    %vm117 = vmor %vm95, %vm115
    %vm118 = vmor %vm96, %vm116
    %vm119 = vcmp.ge.s32.totalorder %v88, 8
    %vm120 = vcmp.lt.s32.totalorder %v88, %v112
    %vm121 = vmand %vm119, %vm120
    %vm122 = vmor %vm99, %vm121
    %vm123 = vcmp.lt.s32.totalorder %v85, 16
    %vm124 = vcmp.lt.s32.totalorder %v86, 16
    %vm125 = vmand %vm109, %vm123
    %vm126 = vmand %vm110, %vm124
    %vm127 = vcmp.lt.s32.totalorder %v88, 16
    %vm128 = vmand %vm119, %vm127
    %vm129 = vmand %vm125, %vm128
    %vm130 = vmand %vm126, %vm128
    %vm131 = vmor %vm106, %vm129
    %vm132 = vmor %vm107, %vm130
    %v133 = vsel %vm122, 1, 0
    %vm134 = vcmp.eq.s32.totalorder %v133, 1
    %vm135 = vmand %vm131, %vm134
    %vm136 = vmand %vm132, %vm134
    %v137 = vadd.s32 %v85, 4294967295
    %v138 = vadd.s32 %v86, 4294967295
    %vm139 = vcmp.ge.s32.totalorder %v137, 0
    %vm140 = vcmp.ge.s32.totalorder %v138, 0
    %vm141 = vcmp.lt.s32.totalorder %v137, 8
    %vm142 = vcmp.lt.s32.totalorder %v138, 8
    %vm143 = vmand %vm139, %vm141
    %vm144 = vmand %vm140, %vm142
    %vm145 = vmand %vm102, %vm143
    %vm146 = vmand %vm103, %vm144
    %vm147 = vcmp.ge.s32.totalorder %v137, 8
    %vm148 = vcmp.ge.s32.totalorder %v138, 8
    %vm149 = vcmp.lt.s32.totalorder %v137, 16
    %vm150 = vcmp.lt.s32.totalorder %v138, 16
    %vm151 = vmand %vm147, %vm149
    %vm152 = vmand %vm148, %vm150
    %vm153 = vmand %vm125, %vm151
    %vm154 = vmand %vm126, %vm152
    %vm155 = vmor %vm145, %vm153
    %vm156 = vmor %vm146, %vm154
    %v157 = vadd.s32 %v85, 1
    %v158 = vadd.s32 %v86, 1
    %vm159 = vcmp.ge.s32.totalorder %v157, 0
    %vm160 = vcmp.ge.s32.totalorder %v158, 0
    %vm161 = vcmp.lt.s32.totalorder %v157, 8
    %vm162 = vcmp.lt.s32.totalorder %v158, 8
    %vm163 = vmand %vm159, %vm161
    %vm164 = vmand %vm160, %vm162
    %vm165 = vmand %vm102, %vm163
    %vm166 = vmand %vm103, %vm164
    %vm167 = vcmp.ge.s32.totalorder %v157, 8
    %vm168 = vcmp.ge.s32.totalorder %v158, 8
    %vm169 = vcmp.lt.s32.totalorder %v157, 16
    %vm170 = vcmp.lt.s32.totalorder %v158, 16
    %vm171 = vmand %vm167, %vm169
    %vm172 = vmand %vm168, %vm170
    %vm173 = vmand %vm125, %vm171
    %vm174 = vmand %vm126, %vm172
    %vm175 = vmor %vm165, %vm173
    %vm176 = vmor %vm166, %vm174
    %v177 = vld [vmem:[%s5] sm:$0xff]
    %v178 = vld [vmem:[#allocation7] sm:$0xf]
    %v179 = vld [vmem:[#allocation7 + $0x8] sm:$0xf]
    %v180 = vld [vmem:[#allocation7 + $0x10] sm:$0xf]
    %v181 = vld [vmem:[#allocation7 + $0x18] sm:$0xf]
    %v182 = vld [vmem:[#allocation7 + $0x4] sm:$0xf]
    %v183 = vld [vmem:[#allocation7 + $0xc] sm:$0xf]
    %v184 = vld [vmem:[#allocation7 + $0x14] sm:$0xf]
    %v185 = vld [vmem:[#allocation7 + $0x1c] sm:$0xf]
    %v186 = vpack.c.bf16 %v83, %v82
    %v187 = vlaneseq
    %v188 = vshrl.u32 %v187, 7
    %v189 = vsub.s32 0, %v188
    %v190 = vrot.slane %v177, %v189
    %v195 = vunpack.c.l.b16 %v178
    %v196 = vunpack.c.l.b16 %v179
    %v197 = vunpack.c.l.b16 %v180
    %v198 = vunpack.c.l.b16 %v181
    %v199 = vpack.c.b16 %v196, %v195
    %v200 = vpack.c.b16 %v198, %v197
    %vm203 = vcmask 261120
    %v205 = vsel %vm203, %v186, 0
    %207 = vmatprep.subr.bf16.mxu0 0
    %208 = vmatpush1.bf16.msra.mxu0 %v199
    %209 = vmatprep.subr.bf16.mxu0 0
    %210 = vmatpush1.bf16.msra.mxu0 %v200
    %211 = vmatprep.subr.bf16.mxu0 0
    %212 = vmatpush1.bf16.msra.mxu0 0
    %213 = vmatprep.subr.bf16.mxu0 0
    %214 = vmatpush1.bf16.msra.mxu0 0
    %215 = vmatprep.subr.bf16.mxu0 0
    %216 = vmatpush1.bf16.msra.mxu0 0
    %217 = vmatprep.subr.bf16.mxu0 0
    %218 = vmatpush1.bf16.msra.mxu0 0
    %219 = vmatprep.subr.bf16.mxu0 0
    %220 = vmatpush1.bf16.msra.mxu0 0
    %221 = vmatprep.subr.bf16.mxu0 0
    %222 = vmatpush1.bf16.msra.mxu0 0
    %223 = vmatprep.subr.bf16.mxu0 0
    %224 = vmatpush1.bf16.msra.mxu0 0
    %225 = vmatprep.subr.bf16.mxu0 0
    %226 = vmatpush1.bf16.msra.mxu0 0
    %227 = vmatprep.subr.bf16.mxu0 0
    %228 = vmatpush1.bf16.msra.mxu0 0
    %229 = vmatprep.subr.bf16.mxu0 0
    %230 = vmatpush1.bf16.msra.mxu0 0
    %231 = vmatprep.subr.bf16.mxu0 0
    %232 = vmatpush1.bf16.msra.mxu0 0
    %233 = vmatprep.subr.bf16.mxu0 0
    %234 = vmatpush1.bf16.msra.mxu0 0
    %235 = vmatprep.subr.bf16.mxu0 0
    %236 = vmatpush1.bf16.msra.mxu0 0
    %237 = vmatprep.subr.bf16.mxu0 0
    %238 = vmatpush1.bf16.msra.mxu0 0
    %239 = vmatprep.mubr.bf16.mxu0 0
    %240 = vmatmul.mubr.bf16.gmra.mrb[0].mxu0 %v205
    %v241 = vpop.f32.mrb[0].mxu0
    %v242 = vadd.f32 %v190, %v241
    %v243 = vpop.f32.mrb[0].mxu0
    %v244 = vpop.f32.mrb[0].mxu0
    %v245 = vadd.f32 %v190, %v244
    %v246 = vpop.f32.mrb[0].mxu0
    %247 = vdwg.mxu0
    %250 = vrot.lane.b32.xlu0 %v242, 96
    %v251 = vpop.permute.xlu0 %250
    %252 = vrot.lane.b32.xlu0 %v245, 96
    %v253 = vpop.permute.xlu0 %252
    %vm254 = vcmask 130048
    %v255 = vsel %vm254, %v242, 0
    %v257 = vsel %vm254, %v245, 0
    %v259 = vsel %vm254, %v251, 0
    %v261 = vsel %vm254, %v253, 0
    %263 = vmatprep.subr.mxu0 0.0
    %264 = vmatpush1.xpose.msra.mxu0 %v259
    %265 = vmatprep.subr.mxu0 0.0
    %266 = vmatpush1.xpose.msra.mxu0 %v261
    %267 = vmatprep.subr.mxu0 0.0
    %268 = vmatpush1.xpose.msra.mxu0 0.0
    %269 = vmatprep.subr.mxu0 0.0
    %270 = vmatpush1.xpose.msra.mxu0 0.0
    %271 = vmatprep.subr.mxu0 0.0
    %272 = vmatpush1.xpose.msra.mxu0 0.0
    %273 = vmatprep.subr.mxu0 0.0
    %274 = vmatpush1.xpose.msra.mxu0 0.0
    %275 = vmatprep.subr.mxu0 0.0
    %276 = vmatpush1.xpose.msra.mxu0 0.0
    %277 = vmatprep.subr.mxu0 0.0
    %278 = vmatpush1.xpose.msra.mxu0 0.0
    %279 = vmatprep.subr.mxu0 0.0
    %280 = vmatpush1.xpose.msra.mxu0 0.0
    %281 = vmatprep.subr.mxu0 0.0
    %282 = vmatpush1.xpose.msra.mxu0 0.0
    %283 = vmatprep.subr.mxu0 0.0
    %284 = vmatpush1.xpose.msra.mxu0 0.0
    %285 = vmatprep.subr.mxu0 0.0
    %286 = vmatpush1.xpose.msra.mxu0 0.0
    %287 = vmatprep.subr.mxu0 0.0
    %288 = vmatpush1.xpose.msra.mxu0 0.0
    %289 = vmatprep.subr.mxu0 0.0
    %290 = vmatpush1.xpose.msra.mxu0 0.0
    %291 = vmatprep.subr.mxu0 0.0
    %292 = vmatpush1.xpose.msra.mxu0 0.0
    %293 = vmatprep.subr.mxu0 0.0
    %294 = vmatpush1.xpose.msra.mxu0 0.0
    %295 = vmatprep.subr.mxu0 0.0
    %296 = vmatpush1.xpose.msra.mxu0 0.0
    %297 = vmatprep.subr.mxu0 0.0
    %298 = vmatpush1.xpose.msra.mxu0 0.0
    %299 = vmatprep.subr.mxu0 0.0
    %300 = vmatpush1.xpose.msra.mxu0 0.0
    %301 = vmatprep.subr.mxu0 0.0
    %302 = vmatpush1.xpose.msra.mxu0 0.0
    %303 = vmatprep.subr.mxu0 0.0
    %304 = vmatpush1.xpose.msra.mxu0 0.0
    %305 = vmatprep.subr.mxu0 0.0
    %306 = vmatpush1.xpose.msra.mxu0 0.0
    %307 = vmatprep.subr.mxu0 0.0
    %308 = vmatpush1.xpose.msra.mxu0 0.0
    %309 = vmatprep.subr.mxu0 0.0
    %310 = vmatpush1.xpose.msra.mxu0 0.0
    %311 = vmatprep.subr.mxu0 0.0
    %312 = vmatpush1.xpose.msra.mxu0 0.0
    %313 = vmatprep.subr.mxu0 0.0
    %314 = vmatpush1.xpose.msra.mxu0 0.0
    %315 = vmatprep.subr.mxu0 0.0
    %316 = vmatpush1.xpose.msra.mxu0 0.0
    %317 = vmatprep.subr.mxu0 0.0
    %318 = vmatpush1.xpose.msra.mxu0 0.0
    %319 = vmatprep.subr.mxu0 0.0
    %320 = vmatpush1.xpose.msra.mxu0 0.0
    %321 = vmatprep.subr.mxu0 0.0
    %322 = vmatpush1.xpose.msra.mxu0 0.0
    %323 = vmatprep.subr.mxu0 0.0
    %324 = vmatpush1.xpose.msra.mxu0 0.0
    %325 = vmatprep.subr.mxu0 0.0
    %326 = vmatpush1.xpose.msra.mxu0 0.0
    %327 = vmatprep.mubr.f32.mxu0 0.0
    %328 = vmatmul.mubr.f32.gmra.mrb[0].mxu0 %v255
    %v329 = vpop.f32.mrb[0].mxu0
    %v330 = vadd.f32 0.0, %v329
    %v331 = vpop.f32.mrb[0].mxu0
    %332 = vmatprep.mubr.f32.mxu0 0.0
    %333 = vmatmul.mubr.f32.gmra.mrb[0].mxu0 %v257
    %v334 = vpop.f32.mrb[0].mxu0
    %v335 = vadd.f32 0.0, %v334
    %v336 = vpop.f32.mrb[0].mxu0
    %337 = vdwg.mxu0
    %v338 = vmul.f32 %v330, 0.25
    %v339 = vmul.f32 %v335, 0.25
    %v340 = vsel %vm135, %v338, -1e+30
    %v341 = vsel %vm136, %v339, -1e+30
    %v342 = vsel %vm254, %v340, -inf
    %343 = vmax.xlane.f32.xlu0 %v342
    %v344 = vpop.xlane.xlu0 %343
    %v345 = vsel %vm254, %v341, -inf
    %346 = vmax.xlane.f32.xlu0 %v345
    %v347 = vpop.xlane.xlu0 %346
    %v348 = vsub.f32 %v340, %v344
    %v349 = vsub.f32 %v341, %v347
    %v350 = vmul.f32 %v348, 1.442695
    %v351 = vpow.pop %v350
    %v352 = vmul.f32 %v349, 1.442695
    %v353 = vpow.pop %v352
    %v354 = vsel %vm254, %v351, 0.0
    %355 = vadd.xlane.f32.xlu0 %v354
    %v356 = vpop.xlane.xlu0 %355
    %v357 = vsel %vm254, %v353, 0.0
    %358 = vadd.xlane.f32.xlu0 %v357
    %v359 = vpop.xlane.xlu0 %358
    %v360 = vrcp.pop %v356
    %v361 = vrcp.pop %v359
    %v362 = vmul.f32 %v351, %v360
    %v363 = vmul.f32 %v353, %v361
    %364 = vrot.lane.b32.xlu0 %v242, 64
    %v365 = vpop.permute.xlu0 %364
    %366 = vrot.lane.b32.xlu0 %v245, 64
    %v367 = vpop.permute.xlu0 %366
    %v371 = vsel %vm254, %v362, 0
    %v374 = vsel %vm254, %v363, 0
    %376 = vmatprep.subr.mxu0 0.0
    %377 = vmatpush1.msra.mxu0 %v365
    %378 = vmatprep.subr.mxu0 0.0
    %379 = vmatpush1.msra.mxu0 %v367
    %380 = vmatprep.subr.mxu0 0.0
    %381 = vmatpush1.msra.mxu0 0.0
    %382 = vmatprep.subr.mxu0 0.0
    %383 = vmatpush1.msra.mxu0 0.0
    %384 = vmatprep.subr.mxu0 0.0
    %385 = vmatpush1.msra.mxu0 0.0
    %386 = vmatprep.subr.mxu0 0.0
    %387 = vmatpush1.msra.mxu0 0.0
    %388 = vmatprep.subr.mxu0 0.0
    %389 = vmatpush1.msra.mxu0 0.0
    %390 = vmatprep.subr.mxu0 0.0
    %391 = vmatpush1.msra.mxu0 0.0
    %392 = vmatprep.subr.mxu0 0.0
    %393 = vmatpush1.msra.mxu0 0.0
    %394 = vmatprep.subr.mxu0 0.0
    %395 = vmatpush1.msra.mxu0 0.0
    %396 = vmatprep.subr.mxu0 0.0
    %397 = vmatpush1.msra.mxu0 0.0
    %398 = vmatprep.subr.mxu0 0.0
    %399 = vmatpush1.msra.mxu0 0.0
    %400 = vmatprep.subr.mxu0 0.0
    %401 = vmatpush1.msra.mxu0 0.0
    %402 = vmatprep.subr.mxu0 0.0
    %403 = vmatpush1.msra.mxu0 0.0
    %404 = vmatprep.subr.mxu0 0.0
    %405 = vmatpush1.msra.mxu0 0.0
    %406 = vmatprep.subr.mxu0 0.0
    %407 = vmatpush1.msra.mxu0 0.0
    %408 = vmatprep.subr.mxu0 0.0
    %409 = vmatpush1.msra.mxu0 0.0
    %410 = vmatprep.subr.mxu0 0.0
    %411 = vmatpush1.msra.mxu0 0.0
    %412 = vmatprep.subr.mxu0 0.0
    %413 = vmatpush1.msra.mxu0 0.0
    %414 = vmatprep.subr.mxu0 0.0
    %415 = vmatpush1.msra.mxu0 0.0
    %416 = vmatprep.subr.mxu0 0.0
    %417 = vmatpush1.msra.mxu0 0.0
    %418 = vmatprep.subr.mxu0 0.0
    %419 = vmatpush1.msra.mxu0 0.0
    %420 = vmatprep.subr.mxu0 0.0
    %421 = vmatpush1.msra.mxu0 0.0
    %422 = vmatprep.subr.mxu0 0.0
    %423 = vmatpush1.msra.mxu0 0.0
    %424 = vmatprep.subr.mxu0 0.0
    %425 = vmatpush1.msra.mxu0 0.0
    %426 = vmatprep.subr.mxu0 0.0
    %427 = vmatpush1.msra.mxu0 0.0
    %428 = vmatprep.subr.mxu0 0.0
    %429 = vmatpush1.msra.mxu0 0.0
    %430 = vmatprep.subr.mxu0 0.0
    %431 = vmatpush1.msra.mxu0 0.0
    %432 = vmatprep.subr.mxu0 0.0
    %433 = vmatpush1.msra.mxu0 0.0
    %434 = vmatprep.subr.mxu0 0.0
    %435 = vmatpush1.msra.mxu0 0.0
    %436 = vmatprep.subr.mxu0 0.0
    %437 = vmatpush1.msra.mxu0 0.0
    %438 = vmatprep.subr.mxu0 0.0
    %439 = vmatpush1.msra.mxu0 0.0
    %440 = vmatprep.mubr.f32.mxu0 0.0
    %441 = vmatmul.mubr.f32.gmra.mrb[0].mxu0 %v371
    %v442 = vpop.f32.mrb[0].mxu0
    %v443 = vadd.f32 0.0, %v442
    %v444 = vpop.f32.mrb[0].mxu0
    %445 = vmatprep.mubr.f32.mxu0 0.0
    %446 = vmatmul.mubr.f32.gmra.mrb[0].mxu0 %v374
    %v447 = vpop.f32.mrb[0].mxu0
    %v448 = vadd.f32 0.0, %v447
    %v449 = vpop.f32.mrb[0].mxu0
    %450 = vdwg.mxu0
    %v451 = vpack.c.bf16 %v448, %v443
    %452 = vrot.lane.b32.xlu0 %v242, 112
    %v453 = vpop.permute.xlu0 %452
    %454 = vrot.lane.b32.xlu0 %v245, 112
    %v455 = vpop.permute.xlu0 %454
    %456 = vrot.lane.b32.xlu0 %v242, 80
    %v457 = vpop.permute.xlu0 %456
    %458 = vrot.lane.b32.xlu0 %v245, 80
    %v459 = vpop.permute.xlu0 %458
    %v460 = vsel %vm254, %v453, 0
    %v462 = vsel %vm254, %v455, 0
    %v464 = vsel %vm254, %v457, 0
    %v466 = vsel %vm254, %v459, 0
    %468 = vmatprep.subr.mxu0 0.0
    %469 = vmatpush1.xpose.msra.mxu0 %v464
    %470 = vmatprep.subr.mxu0 0.0
    %471 = vmatpush1.xpose.msra.mxu0 %v466
    %472 = vmatprep.subr.mxu0 0.0
    %473 = vmatpush1.xpose.msra.mxu0 0.0
    %474 = vmatprep.subr.mxu0 0.0
    %475 = vmatpush1.xpose.msra.mxu0 0.0
    %476 = vmatprep.subr.mxu0 0.0
    %477 = vmatpush1.xpose.msra.mxu0 0.0
    %478 = vmatprep.subr.mxu0 0.0
    %479 = vmatpush1.xpose.msra.mxu0 0.0
    %480 = vmatprep.subr.mxu0 0.0
    %481 = vmatpush1.xpose.msra.mxu0 0.0
    %482 = vmatprep.subr.mxu0 0.0
    %483 = vmatpush1.xpose.msra.mxu0 0.0
    %484 = vmatprep.subr.mxu0 0.0
    %485 = vmatpush1.xpose.msra.mxu0 0.0
    %486 = vmatprep.subr.mxu0 0.0
    %487 = vmatpush1.xpose.msra.mxu0 0.0
    %488 = vmatprep.subr.mxu0 0.0
    %489 = vmatpush1.xpose.msra.mxu0 0.0
    %490 = vmatprep.subr.mxu0 0.0
    %491 = vmatpush1.xpose.msra.mxu0 0.0
    %492 = vmatprep.subr.mxu0 0.0
    %493 = vmatpush1.xpose.msra.mxu0 0.0
    %494 = vmatprep.subr.mxu0 0.0
    %495 = vmatpush1.xpose.msra.mxu0 0.0
    %496 = vmatprep.subr.mxu0 0.0
    %497 = vmatpush1.xpose.msra.mxu0 0.0
    %498 = vmatprep.subr.mxu0 0.0
    %499 = vmatpush1.xpose.msra.mxu0 0.0
    %500 = vmatprep.subr.mxu0 0.0
    %501 = vmatpush1.xpose.msra.mxu0 0.0
    %502 = vmatprep.subr.mxu0 0.0
    %503 = vmatpush1.xpose.msra.mxu0 0.0
    %504 = vmatprep.subr.mxu0 0.0
    %505 = vmatpush1.xpose.msra.mxu0 0.0
    %506 = vmatprep.subr.mxu0 0.0
    %507 = vmatpush1.xpose.msra.mxu0 0.0
    %508 = vmatprep.subr.mxu0 0.0
    %509 = vmatpush1.xpose.msra.mxu0 0.0
    %510 = vmatprep.subr.mxu0 0.0
    %511 = vmatpush1.xpose.msra.mxu0 0.0
    %512 = vmatprep.subr.mxu0 0.0
    %513 = vmatpush1.xpose.msra.mxu0 0.0
    %514 = vmatprep.subr.mxu0 0.0
    %515 = vmatpush1.xpose.msra.mxu0 0.0
    %516 = vmatprep.subr.mxu0 0.0
    %517 = vmatpush1.xpose.msra.mxu0 0.0
    %518 = vmatprep.subr.mxu0 0.0
    %519 = vmatpush1.xpose.msra.mxu0 0.0
    %520 = vmatprep.subr.mxu0 0.0
    %521 = vmatpush1.xpose.msra.mxu0 0.0
    %522 = vmatprep.subr.mxu0 0.0
    %523 = vmatpush1.xpose.msra.mxu0 0.0
    %524 = vmatprep.subr.mxu0 0.0
    %525 = vmatpush1.xpose.msra.mxu0 0.0
    %526 = vmatprep.subr.mxu0 0.0
    %527 = vmatpush1.xpose.msra.mxu0 0.0
    %528 = vmatprep.subr.mxu0 0.0
    %529 = vmatpush1.xpose.msra.mxu0 0.0
    %530 = vmatprep.subr.mxu0 0.0
    %531 = vmatpush1.xpose.msra.mxu0 0.0
    %532 = vmatprep.mubr.f32.mxu0 0.0
    %533 = vmatmul.mubr.f32.gmra.mrb[0].mxu0 %v460
    %v534 = vpop.f32.mrb[0].mxu0
    %v535 = vadd.f32 0.0, %v534
    %v536 = vpop.f32.mrb[0].mxu0
    %537 = vmatprep.mubr.f32.mxu0 0.0
    %538 = vmatmul.mubr.f32.gmra.mrb[0].mxu0 %v462
    %v539 = vpop.f32.mrb[0].mxu0
    %v540 = vadd.f32 0.0, %v539
    %v541 = vpop.f32.mrb[0].mxu0
    %542 = vdwg.mxu0
    %v543 = vmul.f32 %v535, 0.25
    %v544 = vmul.f32 %v540, 0.25
    %v545 = vsel %vm135, %v543, -1e+30
    %v546 = vsel %vm136, %v544, -1e+30
    %v547 = vsel %vm254, %v545, -inf
    %548 = vmax.xlane.f32.xlu0 %v547
    %v549 = vpop.xlane.xlu0 %548
    %v550 = vsel %vm254, %v546, -inf
    %551 = vmax.xlane.f32.xlu0 %v550
    %v552 = vpop.xlane.xlu0 %551
    %v553 = vsub.f32 %v545, %v549
    %v554 = vsub.f32 %v546, %v552
    %v555 = vmul.f32 %v553, 1.442695
    %v556 = vpow.pop %v555
    %v557 = vmul.f32 %v554, 1.442695
    %v558 = vpow.pop %v557
    %v559 = vsel %vm254, %v556, 0.0
    %560 = vadd.xlane.f32.xlu0 %v559
    %v561 = vpop.xlane.xlu0 %560
    %v562 = vsel %vm254, %v558, 0.0
    %563 = vadd.xlane.f32.xlu0 %v562
    %v564 = vpop.xlane.xlu0 %563
    %v565 = vrcp.pop %v561
    %v566 = vrcp.pop %v564
    %v567 = vmul.f32 %v556, %v565
    %v568 = vmul.f32 %v558, %v566
    %569 = vrot.lane.b32.xlu0 %v242, 48
    %v570 = vpop.permute.xlu0 %569
    %571 = vrot.lane.b32.xlu0 %v245, 48
    %v572 = vpop.permute.xlu0 %571
    %v576 = vsel %vm254, %v567, 0
    %v579 = vsel %vm254, %v568, 0
    %581 = vmatprep.subr.mxu0 0.0
    %582 = vmatpush1.msra.mxu0 %v570
    %583 = vmatprep.subr.mxu0 0.0
    %584 = vmatpush1.msra.mxu0 %v572
    %585 = vmatprep.subr.mxu0 0.0
    %586 = vmatpush1.msra.mxu0 0.0
    %587 = vmatprep.subr.mxu0 0.0
    %588 = vmatpush1.msra.mxu0 0.0
    %589 = vmatprep.subr.mxu0 0.0
    %590 = vmatpush1.msra.mxu0 0.0
    %591 = vmatprep.subr.mxu0 0.0
    %592 = vmatpush1.msra.mxu0 0.0
    %593 = vmatprep.subr.mxu0 0.0
    %594 = vmatpush1.msra.mxu0 0.0
    %595 = vmatprep.subr.mxu0 0.0
    %596 = vmatpush1.msra.mxu0 0.0
    %597 = vmatprep.subr.mxu0 0.0
    %598 = vmatpush1.msra.mxu0 0.0
    %599 = vmatprep.subr.mxu0 0.0
    %600 = vmatpush1.msra.mxu0 0.0
    %601 = vmatprep.subr.mxu0 0.0
    %602 = vmatpush1.msra.mxu0 0.0
    %603 = vmatprep.subr.mxu0 0.0
    %604 = vmatpush1.msra.mxu0 0.0
    %605 = vmatprep.subr.mxu0 0.0
    %606 = vmatpush1.msra.mxu0 0.0
    %607 = vmatprep.subr.mxu0 0.0
    %608 = vmatpush1.msra.mxu0 0.0
    %609 = vmatprep.subr.mxu0 0.0
    %610 = vmatpush1.msra.mxu0 0.0
    %611 = vmatprep.subr.mxu0 0.0
    %612 = vmatpush1.msra.mxu0 0.0
    %613 = vmatprep.subr.mxu0 0.0
    %614 = vmatpush1.msra.mxu0 0.0
    %615 = vmatprep.subr.mxu0 0.0
    %616 = vmatpush1.msra.mxu0 0.0
    %617 = vmatprep.subr.mxu0 0.0
    %618 = vmatpush1.msra.mxu0 0.0
    %619 = vmatprep.subr.mxu0 0.0
    %620 = vmatpush1.msra.mxu0 0.0
    %621 = vmatprep.subr.mxu0 0.0
    %622 = vmatpush1.msra.mxu0 0.0
    %623 = vmatprep.subr.mxu0 0.0
    %624 = vmatpush1.msra.mxu0 0.0
    %625 = vmatprep.subr.mxu0 0.0
    %626 = vmatpush1.msra.mxu0 0.0
    %627 = vmatprep.subr.mxu0 0.0
    %628 = vmatpush1.msra.mxu0 0.0
    %629 = vmatprep.subr.mxu0 0.0
    %630 = vmatpush1.msra.mxu0 0.0
    %631 = vmatprep.subr.mxu0 0.0
    %632 = vmatpush1.msra.mxu0 0.0
    %633 = vmatprep.subr.mxu0 0.0
    %634 = vmatpush1.msra.mxu0 0.0
    %635 = vmatprep.subr.mxu0 0.0
    %636 = vmatpush1.msra.mxu0 0.0
    %637 = vmatprep.subr.mxu0 0.0
    %638 = vmatpush1.msra.mxu0 0.0
    %639 = vmatprep.subr.mxu0 0.0
    %640 = vmatpush1.msra.mxu0 0.0
    %641 = vmatprep.subr.mxu0 0.0
    %642 = vmatpush1.msra.mxu0 0.0
    %643 = vmatprep.subr.mxu0 0.0
    %644 = vmatpush1.msra.mxu0 0.0
    %645 = vmatprep.mubr.f32.mxu0 0.0
    %646 = vmatmul.mubr.f32.gmra.mrb[0].mxu0 %v576
    %v647 = vpop.f32.mrb[0].mxu0
    %v648 = vadd.f32 0.0, %v647
    %v649 = vpop.f32.mrb[0].mxu0
    %650 = vmatprep.mubr.f32.mxu0 0.0
    %651 = vmatmul.mubr.f32.gmra.mrb[0].mxu0 %v579
    %v652 = vpop.f32.mrb[0].mxu0
    %v653 = vadd.f32 0.0, %v652
    %v654 = vpop.f32.mrb[0].mxu0
    %655 = vdwg.mxu0
    %v656 = vpack.c.bf16 %v653, %v648
    %v659 = vunpack.c.l.b16 %v184
    %v660 = vunpack.c.l.b16 %v185
    %v661 = vpack.c.b16 %v660, %v659
    %v664 = vsel %vm254, %v656, 0
    %666 = vmatprep.subr.bf16.mxu0 0
    %667 = vmatpush1.bf16.msra.mxu0 %v661
    %668 = vmatprep.subr.bf16.mxu0 0
    %669 = vmatpush1.bf16.msra.mxu0 0
    %670 = vmatprep.subr.bf16.mxu0 0
    %671 = vmatpush1.bf16.msra.mxu0 0
    %672 = vmatprep.subr.bf16.mxu0 0
    %673 = vmatpush1.bf16.msra.mxu0 0
    %674 = vmatprep.subr.bf16.mxu0 0
    %675 = vmatpush1.bf16.msra.mxu0 0
    %676 = vmatprep.subr.bf16.mxu0 0
    %677 = vmatpush1.bf16.msra.mxu0 0
    %678 = vmatprep.subr.bf16.mxu0 0
    %679 = vmatpush1.bf16.msra.mxu0 0
    %680 = vmatprep.subr.bf16.mxu0 0
    %681 = vmatpush1.bf16.msra.mxu0 0
    %682 = vmatprep.subr.bf16.mxu0 0
    %683 = vmatpush1.bf16.msra.mxu0 0
    %684 = vmatprep.subr.bf16.mxu0 0
    %685 = vmatpush1.bf16.msra.mxu0 0
    %686 = vmatprep.subr.bf16.mxu0 0
    %687 = vmatpush1.bf16.msra.mxu0 0
    %688 = vmatprep.subr.bf16.mxu0 0
    %689 = vmatpush1.bf16.msra.mxu0 0
    %690 = vmatprep.subr.bf16.mxu0 0
    %691 = vmatpush1.bf16.msra.mxu0 0
    %692 = vmatprep.subr.bf16.mxu0 0
    %693 = vmatpush1.bf16.msra.mxu0 0
    %694 = vmatprep.subr.bf16.mxu0 0
    %695 = vmatpush1.bf16.msra.mxu0 0
    %696 = vmatprep.subr.bf16.mxu0 0
    %697 = vmatpush1.bf16.msra.mxu0 0
    %698 = vmatprep.mubr.bf16.mxu0 0
    %699 = vmatmul.mubr.bf16.gmra.mrb[0].mxu0 %v664
    %v700 = vpop.f32.mrb[0].mxu0
    %v701 = vadd.f32 0.0, %v700
    %v702 = vpop.f32.mrb[0].mxu0
    %v703 = vpop.f32.mrb[0].mxu0
    %v704 = vadd.f32 0.0, %v703
    %v705 = vpop.f32.mrb[0].mxu0
    %706 = vdwg.mxu0
    %v709 = vunpack.c.l.b16 %v182
    %v710 = vunpack.c.l.b16 %v183
    %v711 = vpack.c.b16 %v710, %v709
    %v714 = vsel %vm254, %v451, 0
    %716 = vmatprep.subr.bf16.mxu0 0
    %717 = vmatpush1.bf16.msra.mxu0 %v711
    %718 = vmatprep.subr.bf16.mxu0 0
    %719 = vmatpush1.bf16.msra.mxu0 0
    %720 = vmatprep.subr.bf16.mxu0 0
    %721 = vmatpush1.bf16.msra.mxu0 0
    %722 = vmatprep.subr.bf16.mxu0 0
    %723 = vmatpush1.bf16.msra.mxu0 0
    %724 = vmatprep.subr.bf16.mxu0 0
    %725 = vmatpush1.bf16.msra.mxu0 0
    %726 = vmatprep.subr.bf16.mxu0 0
    %727 = vmatpush1.bf16.msra.mxu0 0
    %728 = vmatprep.subr.bf16.mxu0 0
    %729 = vmatpush1.bf16.msra.mxu0 0
    %730 = vmatprep.subr.bf16.mxu0 0
    %731 = vmatpush1.bf16.msra.mxu0 0
    %732 = vmatprep.subr.bf16.mxu0 0
    %733 = vmatpush1.bf16.msra.mxu0 0
    %734 = vmatprep.subr.bf16.mxu0 0
    %735 = vmatpush1.bf16.msra.mxu0 0
    %736 = vmatprep.subr.bf16.mxu0 0
    %737 = vmatpush1.bf16.msra.mxu0 0
    %738 = vmatprep.subr.bf16.mxu0 0
    %739 = vmatpush1.bf16.msra.mxu0 0
    %740 = vmatprep.subr.bf16.mxu0 0
    %741 = vmatpush1.bf16.msra.mxu0 0
    %742 = vmatprep.subr.bf16.mxu0 0
    %743 = vmatpush1.bf16.msra.mxu0 0
    %744 = vmatprep.subr.bf16.mxu0 0
    %745 = vmatpush1.bf16.msra.mxu0 0
    %746 = vmatprep.subr.bf16.mxu0 0
    %747 = vmatpush1.bf16.msra.mxu0 0
    %748 = vmatprep.mubr.bf16.mxu0 0
    %749 = vmatmul.mubr.bf16.gmra.mrb[0].mxu0 %v714
    %v750 = vpop.f32.mrb[0].mxu0
    %v751 = vadd.f32 %v701, %v750
    %v752 = vpop.f32.mrb[0].mxu0
    %v753 = vpop.f32.mrb[0].mxu0
    %v754 = vadd.f32 %v704, %v753
    %v755 = vpop.f32.mrb[0].mxu0
    %756 = vdwg.mxu0
    %v757 = vlaneseq
    %v758 = vshrl.u32 %v757, 7
    %v759 = vsub.s32 1, %v758
    %v760 = vrot.slane %v177, %v759
    %v761 = vadd.f32 %v751, %v760
    %v762 = vadd.f32 %v754, %v760
    %v763 = vadd.f32 %v761, %v82
    %v764 = vadd.f32 %v762, %v83
    %v765 = vsel %vm203, %v763, 0.0
    %766 = vadd.xlane.f32.xlu0 %v765
    %v767 = vpop.xlane.xlu0 %766
    %v768 = vsel %vm203, %v764, 0.0
    %769 = vadd.xlane.f32.xlu0 %v768
    %v770 = vpop.xlane.xlu0 %769
    %v771 = vrcp.pop 32.0
    %v772 = vmul.f32 %v767, %v771
    %v773 = vmul.f32 %v770, %v771
    %v774 = vsub.f32 %v763, %v772
    %v775 = vsub.f32 %v764, %v773
    %v776 = vmul.f32 %v774, %v774
    %v777 = vmul.f32 %v775, %v775
    %v778 = vsel %vm203, %v776, 0.0
    %779 = vadd.xlane.f32.xlu0 %v778
    %v780 = vpop.xlane.xlu0 %779
    %v781 = vsel %vm203, %v777, 0.0
    %782 = vadd.xlane.f32.xlu0 %v781
    %v783 = vpop.xlane.xlu0 %782
    %v784 = vmul.f32 %v780, %v771
    %v785 = vmul.f32 %v783, %v771
    %v786 = vadd.f32 %v784, 1e-05
    %v787 = vadd.f32 %v785, 1e-05
    %v788 = vrsqrt.pop %v786
    %v789 = vrsqrt.pop %v787
    %v790 = vmul.f32 %v774, %v788
    %v791 = vmul.f32 %v775, %v789
    %v792 = vlaneseq
    %v793 = vshrl.u32 %v792, 7
    %v794 = vsub.s32 2, %v793
    %v795 = vrot.slane %v177, %v794
    %v796 = vmul.f32 %v790, %v795
    %v797 = vmul.f32 %v791, %v795
    %v798 = vlaneseq
    %v799 = vshrl.u32 %v798, 7
    %v800 = vsub.s32 3, %v799
    %v801 = vrot.slane %v177, %v800
    %v802 = vadd.f32 %v796, %v801
    %v803 = vadd.f32 %v797, %v801
    %v804 = vsel %vm117, 1, 0
    %v805 = vsel %vm118, 1, 0
    %vm806 = vcmp.eq.s32.totalorder %v804, 1
    %vm807 = vcmp.eq.s32.totalorder %v805, 1
    %v808 = vsel %vm806, %v802, 0.0
    %v809 = vsel %vm807, %v803, 0.0
    %v810 = vrot.slane %v808, 7
    %v811 = vrot.slane %v809, 7
    %vm812 = vcmp.lt.s32.totalorder %v85, 1
    %v813 = vsel %vm812, %v810, %v811
    %v814 = vsel %vm812, %v811, %v810
    %v815 = vsel %vm155, 1, 0
    %v816 = vsel %vm156, 1, 0
    %vm817 = vcmp.eq.s32.totalorder %v815, 1
    %vm818 = vcmp.eq.s32.totalorder %v816, 1
    %v819 = vsel %vm817, %v814, 0.0
    %v820 = vsel %vm818, %v813, 0.0
    %v821 = vpack.c.bf16 %v820, %v819
    %v822 = vld [vmem:[#allocation9] sm:$0xf]
    %v823 = vld [vmem:[#allocation9 + $0x4] sm:$0xf]
    %v824 = vld [vmem:[#allocation9 + $0x8] sm:$0xf]
    %v825 = vld [vmem:[#allocation9 + $0xc] sm:$0xf]
    %v826 = vpack.c.bf16 %v809, %v808
    %s827 = scalar_lea.vmem [#allocation9], 16
    %v828 = vld [vmem:[%s827] sm:$0xf]
    %v829 = vld [vmem:[%s827 + $0x4] sm:$0xf]
    %v830 = vld [vmem:[%s827 + $0x8] sm:$0xf]
    %v831 = vld [vmem:[%s827 + $0xc] sm:$0xf]
    %v836 = vunpack.c.l.b16 %v828
    %v837 = vunpack.c.l.b16 %v829
    %v838 = vunpack.c.l.b16 %v830
    %v839 = vunpack.c.l.b16 %v831
    %v840 = vpack.c.b16 %v837, %v836
    %v841 = vpack.c.b16 %v839, %v838
    %v845 = vsel %vm203, %v826, 0
    %847 = vmatprep.subr.bf16.mxu0 0
    %848 = vmatpush1.bf16.msra.mxu0 %v840
    %849 = vmatprep.subr.bf16.mxu0 0
    %850 = vmatpush1.bf16.msra.mxu0 %v841
    %851 = vmatprep.subr.bf16.mxu0 0
    %852 = vmatpush1.bf16.msra.mxu0 0
    %853 = vmatprep.subr.bf16.mxu0 0
    %854 = vmatpush1.bf16.msra.mxu0 0
    %855 = vmatprep.subr.bf16.mxu0 0
    %856 = vmatpush1.bf16.msra.mxu0 0
    %857 = vmatprep.subr.bf16.mxu0 0
    %858 = vmatpush1.bf16.msra.mxu0 0
    %859 = vmatprep.subr.bf16.mxu0 0
    %860 = vmatpush1.bf16.msra.mxu0 0
    %861 = vmatprep.subr.bf16.mxu0 0
    %862 = vmatpush1.bf16.msra.mxu0 0
    %863 = vmatprep.subr.bf16.mxu0 0
    %864 = vmatpush1.bf16.msra.mxu0 0
    %865 = vmatprep.subr.bf16.mxu0 0
    %866 = vmatpush1.bf16.msra.mxu0 0
    %867 = vmatprep.subr.bf16.mxu0 0
    %868 = vmatpush1.bf16.msra.mxu0 0
    %869 = vmatprep.subr.bf16.mxu0 0
    %870 = vmatpush1.bf16.msra.mxu0 0
    %871 = vmatprep.subr.bf16.mxu0 0
    %872 = vmatpush1.bf16.msra.mxu0 0
    %873 = vmatprep.subr.bf16.mxu0 0
    %874 = vmatpush1.bf16.msra.mxu0 0
    %875 = vmatprep.subr.bf16.mxu0 0
    %876 = vmatpush1.bf16.msra.mxu0 0
    %877 = vmatprep.subr.bf16.mxu0 0
    %878 = vmatpush1.bf16.msra.mxu0 0
    %879 = vmatprep.mubr.bf16.mxu0 0
    %880 = vmatmul.mubr.bf16.gmra.mrb[0].mxu0 %v845
    %v881 = vpop.f32.mrb[0].mxu0
    %v882 = vadd.f32 0.0, %v881
    %v883 = vpop.f32.mrb[0].mxu0
    %v884 = vpop.f32.mrb[0].mxu0
    %v885 = vadd.f32 0.0, %v884
    %v886 = vpop.f32.mrb[0].mxu0
    %887 = vdwg.mxu0
    %v892 = vunpack.c.l.b16 %v822
    %v893 = vunpack.c.l.b16 %v823
    %v894 = vunpack.c.l.b16 %v824
    %v895 = vunpack.c.l.b16 %v825
    %v896 = vpack.c.b16 %v893, %v892
    %v897 = vpack.c.b16 %v895, %v894
    %v901 = vsel %vm203, %v821, 0
    %903 = vmatprep.subr.bf16.mxu0 0
    %904 = vmatpush1.bf16.msra.mxu0 %v896
    %905 = vmatprep.subr.bf16.mxu0 0
    %906 = vmatpush1.bf16.msra.mxu0 %v897
    %907 = vmatprep.subr.bf16.mxu0 0
    %908 = vmatpush1.bf16.msra.mxu0 0
    %909 = vmatprep.subr.bf16.mxu0 0
    %910 = vmatpush1.bf16.msra.mxu0 0
    %911 = vmatprep.subr.bf16.mxu0 0
    %912 = vmatpush1.bf16.msra.mxu0 0
    %913 = vmatprep.subr.bf16.mxu0 0
    %914 = vmatpush1.bf16.msra.mxu0 0
    %915 = vmatprep.subr.bf16.mxu0 0
    %916 = vmatpush1.bf16.msra.mxu0 0
    %917 = vmatprep.subr.bf16.mxu0 0
    %918 = vmatpush1.bf16.msra.mxu0 0
    %919 = vmatprep.subr.bf16.mxu0 0
    %920 = vmatpush1.bf16.msra.mxu0 0
    %921 = vmatprep.subr.bf16.mxu0 0
    %922 = vmatpush1.bf16.msra.mxu0 0
    %923 = vmatprep.subr.bf16.mxu0 0
    %924 = vmatpush1.bf16.msra.mxu0 0
    %925 = vmatprep.subr.bf16.mxu0 0
    %926 = vmatpush1.bf16.msra.mxu0 0
    %927 = vmatprep.subr.bf16.mxu0 0
    %928 = vmatpush1.bf16.msra.mxu0 0
    %929 = vmatprep.subr.bf16.mxu0 0
    %930 = vmatpush1.bf16.msra.mxu0 0
    %931 = vmatprep.subr.bf16.mxu0 0
    %932 = vmatpush1.bf16.msra.mxu0 0
    %933 = vmatprep.subr.bf16.mxu0 0
    %934 = vmatpush1.bf16.msra.mxu0 0
    %935 = vmatprep.mubr.bf16.mxu0 0
    %936 = vmatmul.mubr.bf16.gmra.mrb[0].mxu0 %v901
    %v937 = vpop.f32.mrb[0].mxu0
    %v938 = vadd.f32 %v882, %v937
    %v939 = vpop.f32.mrb[0].mxu0
    %v940 = vpop.f32.mrb[0].mxu0
    %v941 = vadd.f32 %v885, %v940
    %v942 = vpop.f32.mrb[0].mxu0
    %943 = vdwg.mxu0
    %v944 = vrot.slane %v808, 1
    %v945 = vrot.slane %v809, 1
    %vm946 = vcmp.lt.s32.totalorder %v85, 7
    %v947 = vsel %vm946, %v944, %v945
    %v948 = vsel %vm946, %v945, %v944
    %v949 = vsel %vm175, 1, 0
    %v950 = vsel %vm176, 1, 0
    %vm951 = vcmp.eq.s32.totalorder %v949, 1
    %vm952 = vcmp.eq.s32.totalorder %v950, 1
    %v953 = vsel %vm951, %v947, 0.0
    %v954 = vsel %vm952, %v948, 0.0
    %v955 = vpack.c.bf16 %v954, %v953
    %s956 = scalar_lea.vmem [#allocation9], 32
    %v957 = vld [vmem:[%s956] sm:$0xf]
    %v958 = vld [vmem:[%s956 + $0x4] sm:$0xf]
    %v959 = vld [vmem:[%s956 + $0x8] sm:$0xf]
    %v960 = vld [vmem:[%s956 + $0xc] sm:$0xf]
    %v965 = vunpack.c.l.b16 %v957
    %v966 = vunpack.c.l.b16 %v958
    %v967 = vunpack.c.l.b16 %v959
    %v968 = vunpack.c.l.b16 %v960
    %v969 = vpack.c.b16 %v966, %v965
    %v970 = vpack.c.b16 %v968, %v967
    %v974 = vsel %vm203, %v955, 0
    %976 = vmatprep.subr.bf16.mxu0 0
    %977 = vmatpush1.bf16.msra.mxu0 %v969
    %978 = vmatprep.subr.bf16.mxu0 0
    %979 = vmatpush1.bf16.msra.mxu0 %v970
    %980 = vmatprep.subr.bf16.mxu0 0
    %981 = vmatpush1.bf16.msra.mxu0 0
    %982 = vmatprep.subr.bf16.mxu0 0
    %983 = vmatpush1.bf16.msra.mxu0 0
    %984 = vmatprep.subr.bf16.mxu0 0
    %985 = vmatpush1.bf16.msra.mxu0 0
    %986 = vmatprep.subr.bf16.mxu0 0
    %987 = vmatpush1.bf16.msra.mxu0 0
    %988 = vmatprep.subr.bf16.mxu0 0
    %989 = vmatpush1.bf16.msra.mxu0 0
    %990 = vmatprep.subr.bf16.mxu0 0
    %991 = vmatpush1.bf16.msra.mxu0 0
    %992 = vmatprep.subr.bf16.mxu0 0
    %993 = vmatpush1.bf16.msra.mxu0 0
    %994 = vmatprep.subr.bf16.mxu0 0
    %995 = vmatpush1.bf16.msra.mxu0 0
    %996 = vmatprep.subr.bf16.mxu0 0
    %997 = vmatpush1.bf16.msra.mxu0 0
    %998 = vmatprep.subr.bf16.mxu0 0
    %999 = vmatpush1.bf16.msra.mxu0 0
    %1000 = vmatprep.subr.bf16.mxu0 0
    %1001 = vmatpush1.bf16.msra.mxu0 0
    %1002 = vmatprep.subr.bf16.mxu0 0
    %1003 = vmatpush1.bf16.msra.mxu0 0
    %1004 = vmatprep.subr.bf16.mxu0 0
    %1005 = vmatpush1.bf16.msra.mxu0 0
    %1006 = vmatprep.subr.bf16.mxu0 0
    %1007 = vmatpush1.bf16.msra.mxu0 0
    %1008 = vmatprep.mubr.bf16.mxu0 0
    %1009 = vmatmul.mubr.bf16.gmra.mrb[0].mxu0 %v974
    %v1010 = vpop.f32.mrb[0].mxu0
    %v1011 = vadd.f32 0.0, %v1010
    %v1012 = vpop.f32.mrb[0].mxu0
    %v1013 = vpop.f32.mrb[0].mxu0
    %v1014 = vadd.f32 0.0, %v1013
    %v1015 = vpop.f32.mrb[0].mxu0
    %1016 = vdwg.mxu0
    %v1017 = vadd.f32 %v938, %v1011
    %v1018 = vadd.f32 %v941, %v1014
    %v1019 = vlaneseq
    %v1020 = vshrl.u32 %v1019, 7
    %v1021 = vsub.s32 4, %v1020
    %v1022 = vrot.slane %v177, %v1021
    %v1023 = vadd.f32 %v1017, %v1022
    %v1024 = vadd.f32 %v1018, %v1022
    %v1025 = vmax.f32 %v1023, 0.0
    %v1026 = vmax.f32 %v1024, 0.0
    %v1027 = vrot.slane %v1025, 7
    %v1028 = vrot.slane %v1026, 7
    %v1029 = vsel %vm812, %v1027, %v1028
    %v1030 = vsel %vm812, %v1028, %v1027
    %v1031 = vsel %vm817, %v1030, 0.0
    %v1032 = vsel %vm818, %v1029, 0.0
    %v1033 = vpack.c.bf16 %v1032, %v1031
    %v1034 = vld [vmem:[#allocation10] sm:$0xf]
    %v1035 = vld [vmem:[#allocation10 + $0x4] sm:$0xf]
    %v1036 = vld [vmem:[#allocation10 + $0x8] sm:$0xf]
    %v1037 = vld [vmem:[#allocation10 + $0xc] sm:$0xf]
    %v1038 = vld [vmem:[#allocation10 + $0x10] sm:$0xf]
    %v1039 = vld [vmem:[#allocation10 + $0x14] sm:$0xf]
    %v1040 = vld [vmem:[#allocation10 + $0x18] sm:$0xf]
    %v1041 = vld [vmem:[#allocation10 + $0x1c] sm:$0xf]
    %v1042 = vld [vmem:[#allocation10 + $0x20] sm:$0xf]
    %v1043 = vld [vmem:[#allocation10 + $0x24] sm:$0xf]
    %v1044 = vld [vmem:[#allocation10 + $0x28] sm:$0xf]
    %v1045 = vld [vmem:[#allocation10 + $0x2c] sm:$0xf]
    %v1046 = vld [vmem:[#allocation10 + $0x30] sm:$0xf]
    %v1047 = vld [vmem:[#allocation10 + $0x34] sm:$0xf]
    %v1048 = vld [vmem:[#allocation10 + $0x38] sm:$0xf]
    %v1049 = vld [vmem:[#allocation10 + $0x3c] sm:$0xf]
    %v1050 = vpack.c.bf16 %v1026, %v1025
    %s1051 = scalar_lea.vmem [#allocation10], 64
    %v1052 = vld [vmem:[%s1051] sm:$0xf]
    %v1053 = vld [vmem:[%s1051 + $0x4] sm:$0xf]
    %v1054 = vld [vmem:[%s1051 + $0x8] sm:$0xf]
    %v1055 = vld [vmem:[%s1051 + $0xc] sm:$0xf]
    %v1056 = vld [vmem:[%s1051 + $0x10] sm:$0xf]
    %v1057 = vld [vmem:[%s1051 + $0x14] sm:$0xf]
    %v1058 = vld [vmem:[%s1051 + $0x18] sm:$0xf]
    %v1059 = vld [vmem:[%s1051 + $0x1c] sm:$0xf]
    %v1060 = vld [vmem:[%s1051 + $0x20] sm:$0xf]
    %v1061 = vld [vmem:[%s1051 + $0x24] sm:$0xf]
    %v1062 = vld [vmem:[%s1051 + $0x28] sm:$0xf]
    %v1063 = vld [vmem:[%s1051 + $0x2c] sm:$0xf]
    %v1064 = vld [vmem:[%s1051 + $0x30] sm:$0xf]
    %v1065 = vld [vmem:[%s1051 + $0x34] sm:$0xf]
    %v1066 = vld [vmem:[%s1051 + $0x38] sm:$0xf]
    %v1067 = vld [vmem:[%s1051 + $0x3c] sm:$0xf]
    %v1084 = vunpack.c.l.b16 %v1052
    %v1085 = vunpack.c.l.b16 %v1053
    %v1086 = vunpack.c.l.b16 %v1054
    %v1087 = vunpack.c.l.b16 %v1055
    %v1088 = vunpack.c.l.b16 %v1056
    %v1089 = vunpack.c.l.b16 %v1057
    %v1090 = vunpack.c.l.b16 %v1058
    %v1091 = vunpack.c.l.b16 %v1059
    %v1092 = vunpack.c.l.b16 %v1060
    %v1093 = vunpack.c.l.b16 %v1061
    %v1094 = vunpack.c.l.b16 %v1062
    %v1095 = vunpack.c.l.b16 %v1063
    %v1096 = vunpack.c.l.b16 %v1064
    %v1097 = vunpack.c.l.b16 %v1065
    %v1098 = vunpack.c.l.b16 %v1066
    %v1099 = vunpack.c.l.b16 %v1067
    %v1100 = vpack.c.b16 %v1085, %v1084
    %v1101 = vpack.c.b16 %v1087, %v1086
    %v1102 = vpack.c.b16 %v1089, %v1088
    %v1103 = vpack.c.b16 %v1091, %v1090
    %v1104 = vpack.c.b16 %v1093, %v1092
    %v1105 = vpack.c.b16 %v1095, %v1094
    %v1106 = vpack.c.b16 %v1097, %v1096
    %v1107 = vpack.c.b16 %v1099, %v1098
    %1116 = vmatprep.subr.bf16.mxu0 0
    %1117 = vmatpush1.bf16.msra.mxu0 %v1100
    %1118 = vmatprep.subr.bf16.mxu0 0
    %1119 = vmatpush1.bf16.msra.mxu0 %v1101
    %1120 = vmatprep.subr.bf16.mxu0 0
    %1121 = vmatpush1.bf16.msra.mxu0 %v1102
    %1122 = vmatprep.subr.bf16.mxu0 0
    %1123 = vmatpush1.bf16.msra.mxu0 %v1103
    %1124 = vmatprep.subr.bf16.mxu0 0
    %1125 = vmatpush1.bf16.msra.mxu0 %v1104
    %1126 = vmatprep.subr.bf16.mxu0 0
    %1127 = vmatpush1.bf16.msra.mxu0 %v1105
    %1128 = vmatprep.subr.bf16.mxu0 0
    %1129 = vmatpush1.bf16.msra.mxu0 %v1106
    %1130 = vmatprep.subr.bf16.mxu0 0
    %1131 = vmatpush1.bf16.msra.mxu0 %v1107
    %1132 = vmatprep.subr.bf16.mxu0 0
    %1133 = vmatpush1.bf16.msra.mxu0 0
    %1134 = vmatprep.subr.bf16.mxu0 0
    %1135 = vmatpush1.bf16.msra.mxu0 0
    %1136 = vmatprep.subr.bf16.mxu0 0
    %1137 = vmatpush1.bf16.msra.mxu0 0
    %1138 = vmatprep.subr.bf16.mxu0 0
    %1139 = vmatpush1.bf16.msra.mxu0 0
    %1140 = vmatprep.subr.bf16.mxu0 0
    %1141 = vmatpush1.bf16.msra.mxu0 0
    %1142 = vmatprep.subr.bf16.mxu0 0
    %1143 = vmatpush1.bf16.msra.mxu0 0
    %1144 = vmatprep.subr.bf16.mxu0 0
    %1145 = vmatpush1.bf16.msra.mxu0 0
    %1146 = vmatprep.subr.bf16.mxu0 0
    %1147 = vmatpush1.bf16.msra.mxu0 0
    %1148 = vmatprep.mubr.bf16.mxu0 0
    %1149 = vmatmul.mubr.bf16.gmra.mrb[0].mxu0 %v1050
    %v1150 = vpop.f32.mrb[0].mxu0
    %v1151 = vadd.f32 0.0, %v1150
    %v1152 = vpop.f32.mrb[0].mxu0
    %v1153 = vpop.f32.mrb[0].mxu0
    %v1154 = vadd.f32 0.0, %v1153
    %v1155 = vpop.f32.mrb[0].mxu0
    %1156 = vdwg.mxu0
    %v1173 = vunpack.c.l.b16 %v1034
    %v1174 = vunpack.c.l.b16 %v1035
    %v1175 = vunpack.c.l.b16 %v1036
    %v1176 = vunpack.c.l.b16 %v1037
    %v1177 = vunpack.c.l.b16 %v1038
    %v1178 = vunpack.c.l.b16 %v1039
    %v1179 = vunpack.c.l.b16 %v1040
    %v1180 = vunpack.c.l.b16 %v1041
    %v1181 = vunpack.c.l.b16 %v1042
    %v1182 = vunpack.c.l.b16 %v1043
    %v1183 = vunpack.c.l.b16 %v1044
    %v1184 = vunpack.c.l.b16 %v1045
    %v1185 = vunpack.c.l.b16 %v1046
    %v1186 = vunpack.c.l.b16 %v1047
    %v1187 = vunpack.c.l.b16 %v1048
    %v1188 = vunpack.c.l.b16 %v1049
    %v1189 = vpack.c.b16 %v1174, %v1173
    %v1190 = vpack.c.b16 %v1176, %v1175
    %v1191 = vpack.c.b16 %v1178, %v1177
    %v1192 = vpack.c.b16 %v1180, %v1179
    %v1193 = vpack.c.b16 %v1182, %v1181
    %v1194 = vpack.c.b16 %v1184, %v1183
    %v1195 = vpack.c.b16 %v1186, %v1185
    %v1196 = vpack.c.b16 %v1188, %v1187
    %1205 = vmatprep.subr.bf16.mxu0 0
    %1206 = vmatpush1.bf16.msra.mxu0 %v1189
    %1207 = vmatprep.subr.bf16.mxu0 0
    %1208 = vmatpush1.bf16.msra.mxu0 %v1190
    %1209 = vmatprep.subr.bf16.mxu0 0
    %1210 = vmatpush1.bf16.msra.mxu0 %v1191
    %1211 = vmatprep.subr.bf16.mxu0 0
    %1212 = vmatpush1.bf16.msra.mxu0 %v1192
    %1213 = vmatprep.subr.bf16.mxu0 0
    %1214 = vmatpush1.bf16.msra.mxu0 %v1193
    %1215 = vmatprep.subr.bf16.mxu0 0
    %1216 = vmatpush1.bf16.msra.mxu0 %v1194
    %1217 = vmatprep.subr.bf16.mxu0 0
    %1218 = vmatpush1.bf16.msra.mxu0 %v1195
    %1219 = vmatprep.subr.bf16.mxu0 0
    %1220 = vmatpush1.bf16.msra.mxu0 %v1196
    %1221 = vmatprep.subr.bf16.mxu0 0
    %1222 = vmatpush1.bf16.msra.mxu0 0
    %1223 = vmatprep.subr.bf16.mxu0 0
    %1224 = vmatpush1.bf16.msra.mxu0 0
    %1225 = vmatprep.subr.bf16.mxu0 0
    %1226 = vmatpush1.bf16.msra.mxu0 0
    %1227 = vmatprep.subr.bf16.mxu0 0
    %1228 = vmatpush1.bf16.msra.mxu0 0
    %1229 = vmatprep.subr.bf16.mxu0 0
    %1230 = vmatpush1.bf16.msra.mxu0 0
    %1231 = vmatprep.subr.bf16.mxu0 0
    %1232 = vmatpush1.bf16.msra.mxu0 0
    %1233 = vmatprep.subr.bf16.mxu0 0
    %1234 = vmatpush1.bf16.msra.mxu0 0
    %1235 = vmatprep.subr.bf16.mxu0 0
    %1236 = vmatpush1.bf16.msra.mxu0 0
    %1237 = vmatprep.mubr.bf16.mxu0 0
    %1238 = vmatmul.mubr.bf16.gmra.mrb[0].mxu0 %v1033
    %v1239 = vpop.f32.mrb[0].mxu0
    %v1240 = vadd.f32 %v1151, %v1239
    %v1241 = vpop.f32.mrb[0].mxu0
    %v1242 = vpop.f32.mrb[0].mxu0
    %v1243 = vadd.f32 %v1154, %v1242
    %v1244 = vpop.f32.mrb[0].mxu0
    %1245 = vdwg.mxu0
    %v1246 = vrot.slane %v1025, 1
    %v1247 = vrot.slane %v1026, 1
    %v1248 = vsel %vm946, %v1246, %v1247
    %v1249 = vsel %vm946, %v1247, %v1246
    %v1250 = vsel %vm951, %v1248, 0.0
    %v1251 = vsel %vm952, %v1249, 0.0
    %v1252 = vpack.c.bf16 %v1251, %v1250
    %s1253 = scalar_lea.vmem [#allocation10], 128
    %v1254 = vld [vmem:[%s1253] sm:$0xf]
    %v1255 = vld [vmem:[%s1253 + $0x4] sm:$0xf]
    %v1256 = vld [vmem:[%s1253 + $0x8] sm:$0xf]
    %v1257 = vld [vmem:[%s1253 + $0xc] sm:$0xf]
    %v1258 = vld [vmem:[%s1253 + $0x10] sm:$0xf]
    %v1259 = vld [vmem:[%s1253 + $0x14] sm:$0xf]
    %v1260 = vld [vmem:[%s1253 + $0x18] sm:$0xf]
    %v1261 = vld [vmem:[%s1253 + $0x1c] sm:$0xf]
    %v1262 = vld [vmem:[%s1253 + $0x20] sm:$0xf]
    %v1263 = vld [vmem:[%s1253 + $0x24] sm:$0xf]
    %v1264 = vld [vmem:[%s1253 + $0x28] sm:$0xf]
    %v1265 = vld [vmem:[%s1253 + $0x2c] sm:$0xf]
    %v1266 = vld [vmem:[%s1253 + $0x30] sm:$0xf]
    %v1267 = vld [vmem:[%s1253 + $0x34] sm:$0xf]
    %v1268 = vld [vmem:[%s1253 + $0x38] sm:$0xf]
    %v1269 = vld [vmem:[%s1253 + $0x3c] sm:$0xf]
    %v1286 = vunpack.c.l.b16 %v1254
    %v1287 = vunpack.c.l.b16 %v1255
    %v1288 = vunpack.c.l.b16 %v1256
    %v1289 = vunpack.c.l.b16 %v1257
    %v1290 = vunpack.c.l.b16 %v1258
    %v1291 = vunpack.c.l.b16 %v1259
    %v1292 = vunpack.c.l.b16 %v1260
    %v1293 = vunpack.c.l.b16 %v1261
    %v1294 = vunpack.c.l.b16 %v1262
    %v1295 = vunpack.c.l.b16 %v1263
    %v1296 = vunpack.c.l.b16 %v1264
    %v1297 = vunpack.c.l.b16 %v1265
    %v1298 = vunpack.c.l.b16 %v1266
    %v1299 = vunpack.c.l.b16 %v1267
    %v1300 = vunpack.c.l.b16 %v1268
    %v1301 = vunpack.c.l.b16 %v1269
    %v1302 = vpack.c.b16 %v1287, %v1286
    %v1303 = vpack.c.b16 %v1289, %v1288
    %v1304 = vpack.c.b16 %v1291, %v1290
    %v1305 = vpack.c.b16 %v1293, %v1292
    %v1306 = vpack.c.b16 %v1295, %v1294
    %v1307 = vpack.c.b16 %v1297, %v1296
    %v1308 = vpack.c.b16 %v1299, %v1298
    %v1309 = vpack.c.b16 %v1301, %v1300
    %1318 = vmatprep.subr.bf16.mxu0 0
    %1319 = vmatpush1.bf16.msra.mxu0 %v1302
    %1320 = vmatprep.subr.bf16.mxu0 0
    %1321 = vmatpush1.bf16.msra.mxu0 %v1303
    %1322 = vmatprep.subr.bf16.mxu0 0
    %1323 = vmatpush1.bf16.msra.mxu0 %v1304
    %1324 = vmatprep.subr.bf16.mxu0 0
    %1325 = vmatpush1.bf16.msra.mxu0 %v1305
    %1326 = vmatprep.subr.bf16.mxu0 0
    %1327 = vmatpush1.bf16.msra.mxu0 %v1306
    %1328 = vmatprep.subr.bf16.mxu0 0
    %1329 = vmatpush1.bf16.msra.mxu0 %v1307
    %1330 = vmatprep.subr.bf16.mxu0 0
    %1331 = vmatpush1.bf16.msra.mxu0 %v1308
    %1332 = vmatprep.subr.bf16.mxu0 0
    %1333 = vmatpush1.bf16.msra.mxu0 %v1309
    %1334 = vmatprep.subr.bf16.mxu0 0
    %1335 = vmatpush1.bf16.msra.mxu0 0
    %1336 = vmatprep.subr.bf16.mxu0 0
    %1337 = vmatpush1.bf16.msra.mxu0 0
    %1338 = vmatprep.subr.bf16.mxu0 0
    %1339 = vmatpush1.bf16.msra.mxu0 0
    %1340 = vmatprep.subr.bf16.mxu0 0
    %1341 = vmatpush1.bf16.msra.mxu0 0
    %1342 = vmatprep.subr.bf16.mxu0 0
    %1343 = vmatpush1.bf16.msra.mxu0 0
    %1344 = vmatprep.subr.bf16.mxu0 0
    %1345 = vmatpush1.bf16.msra.mxu0 0
    %1346 = vmatprep.subr.bf16.mxu0 0
    %1347 = vmatpush1.bf16.msra.mxu0 0
    %1348 = vmatprep.subr.bf16.mxu0 0
    %1349 = vmatpush1.bf16.msra.mxu0 0
    %1350 = vmatprep.mubr.bf16.mxu0 0
    %1351 = vmatmul.mubr.bf16.gmra.mrb[0].mxu0 %v1252
    %v1352 = vpop.f32.mrb[0].mxu0
    %v1353 = vadd.f32 0.0, %v1352
    %v1354 = vpop.f32.mrb[0].mxu0
    %v1355 = vpop.f32.mrb[0].mxu0
    %v1356 = vadd.f32 0.0, %v1355
    %v1357 = vpop.f32.mrb[0].mxu0
    %1358 = vdwg.mxu0
    %v1359 = vadd.f32 %v1240, %v1353
    %v1360 = vadd.f32 %v1243, %v1356
    %v1361 = vlaneseq
    %v1362 = vshrl.u32 %v1361, 7
    %v1363 = vsub.s32 5, %v1362
    %v1364 = vrot.slane %v177, %v1363
    %v1365 = vadd.f32 %v1359, %v1364
    %v1366 = vadd.f32 %v1360, %v1364
    %v1367 = vadd.f32 %v1365, %v808
    %v1368 = vadd.f32 %v1366, %v809
    %v1369 = vsel %vm203, %v1367, 0.0
    %1370 = vadd.xlane.f32.xlu0 %v1369
    %v1371 = vpop.xlane.xlu0 %1370
    %v1372 = vsel %vm203, %v1368, 0.0
    %1373 = vadd.xlane.f32.xlu0 %v1372
    %v1374 = vpop.xlane.xlu0 %1373
    %v1375 = vmul.f32 %v1371, %v771
    %v1376 = vmul.f32 %v1374, %v771
    %v1377 = vsub.f32 %v1367, %v1375
    %v1378 = vsub.f32 %v1368, %v1376
    %v1379 = vmul.f32 %v1377, %v1377
    %v1380 = vmul.f32 %v1378, %v1378
    %v1381 = vsel %vm203, %v1379, 0.0
    %1382 = vadd.xlane.f32.xlu0 %v1381
    %v1383 = vpop.xlane.xlu0 %1382
    %v1384 = vsel %vm203, %v1380, 0.0
    %1385 = vadd.xlane.f32.xlu0 %v1384
    %v1386 = vpop.xlane.xlu0 %1385
    %v1387 = vmul.f32 %v1383, %v771
    %v1388 = vmul.f32 %v1386, %v771
    %v1389 = vadd.f32 %v1387, 1e-05
    %v1390 = vadd.f32 %v1388, 1e-05
    %v1391 = vrsqrt.pop %v1389
    %v1392 = vrsqrt.pop %v1390
    %v1393 = vmul.f32 %v1377, %v1391
    %v1394 = vmul.f32 %v1378, %v1392
    %v1395 = vlaneseq
    %v1396 = vshrl.u32 %v1395, 7
    %v1397 = vsub.s32 6, %v1396
    %v1398 = vrot.slane %v177, %v1397
    %v1399 = vmul.f32 %v1393, %v1398
    %v1400 = vmul.f32 %v1394, %v1398
    %v1401 = vlaneseq
    %v1402 = vshrl.u32 %v1401, 7
    %v1403 = vsub.s32 7, %v1402
    %v1404 = vrot.slane %v177, %v1403
    %v1405 = vadd.f32 %v1399, %v1404
    %v1406 = vadd.f32 %v1400, %v1404
    %v1407 = vsel %vm806, %v1405, 0.0
    %v1408 = vsel %vm807, %v1406, 0.0
    %s1409 = scalar_lea.vmem %s5, 8
    %v1410 = vld [vmem:[%s1409] sm:$0xff]
    %s1411 = scalar_lea.vmem [#allocation7], 32
    %v1412 = vld [vmem:[%s1411] sm:$0xf]
    %v1413 = vld [vmem:[%s1411 + $0x8] sm:$0xf]
    %v1414 = vld [vmem:[%s1411 + $0x10] sm:$0xf]
    %v1415 = vld [vmem:[%s1411 + $0x18] sm:$0xf]
    %v1416 = vld [vmem:[%s1411 + $0x4] sm:$0xf]
    %v1417 = vld [vmem:[%s1411 + $0xc] sm:$0xf]
    %v1418 = vld [vmem:[%s1411 + $0x14] sm:$0xf]
    %v1419 = vld [vmem:[%s1411 + $0x1c] sm:$0xf]
    %v1420 = vpack.c.bf16 %v1408, %v1407
    %v1421 = vlaneseq
    %v1422 = vshrl.u32 %v1421, 7
    %v1423 = vsub.s32 0, %v1422
    %v1424 = vrot.slane %v1410, %v1423
    %v1429 = vunpack.c.l.b16 %v1412
    %v1430 = vunpack.c.l.b16 %v1413
    %v1431 = vunpack.c.l.b16 %v1414
    %v1432 = vunpack.c.l.b16 %v1415
    %v1433 = vpack.c.b16 %v1430, %v1429
    %v1434 = vpack.c.b16 %v1432, %v1431
    %v1438 = vsel %vm203, %v1420, 0
    %1440 = vmatprep.subr.bf16.mxu0 0
    %1441 = vmatpush1.bf16.msra.mxu0 %v1433
    %1442 = vmatprep.subr.bf16.mxu0 0
    %1443 = vmatpush1.bf16.msra.mxu0 %v1434
    %1444 = vmatprep.subr.bf16.mxu0 0
    %1445 = vmatpush1.bf16.msra.mxu0 0
    %1446 = vmatprep.subr.bf16.mxu0 0
    %1447 = vmatpush1.bf16.msra.mxu0 0
    %1448 = vmatprep.subr.bf16.mxu0 0
    %1449 = vmatpush1.bf16.msra.mxu0 0
    %1450 = vmatprep.subr.bf16.mxu0 0
    %1451 = vmatpush1.bf16.msra.mxu0 0
    %1452 = vmatprep.subr.bf16.mxu0 0
    %1453 = vmatpush1.bf16.msra.mxu0 0
    %1454 = vmatprep.subr.bf16.mxu0 0
    %1455 = vmatpush1.bf16.msra.mxu0 0
    %1456 = vmatprep.subr.bf16.mxu0 0
    %1457 = vmatpush1.bf16.msra.mxu0 0
    %1458 = vmatprep.subr.bf16.mxu0 0
    %1459 = vmatpush1.bf16.msra.mxu0 0
    %1460 = vmatprep.subr.bf16.mxu0 0
    %1461 = vmatpush1.bf16.msra.mxu0 0
    %1462 = vmatprep.subr.bf16.mxu0 0
    %1463 = vmatpush1.bf16.msra.mxu0 0
    %1464 = vmatprep.subr.bf16.mxu0 0
    %1465 = vmatpush1.bf16.msra.mxu0 0
    %1466 = vmatprep.subr.bf16.mxu0 0
    %1467 = vmatpush1.bf16.msra.mxu0 0
    %1468 = vmatprep.subr.bf16.mxu0 0
    %1469 = vmatpush1.bf16.msra.mxu0 0
    %1470 = vmatprep.subr.bf16.mxu0 0
    %1471 = vmatpush1.bf16.msra.mxu0 0
    %1472 = vmatprep.mubr.bf16.mxu0 0
    %1473 = vmatmul.mubr.bf16.gmra.mrb[0].mxu0 %v1438
    %v1474 = vpop.f32.mrb[0].mxu0
    %v1475 = vadd.f32 %v1424, %v1474
    %v1476 = vpop.f32.mrb[0].mxu0
    %v1477 = vpop.f32.mrb[0].mxu0
    %v1478 = vadd.f32 %v1424, %v1477
    %v1479 = vpop.f32.mrb[0].mxu0
    %1480 = vdwg.mxu0
    %1483 = vrot.lane.b32.xlu0 %v1475, 96
    %v1484 = vpop.permute.xlu0 %1483
    %1485 = vrot.lane.b32.xlu0 %v1478, 96
    %v1486 = vpop.permute.xlu0 %1485
    %v1487 = vsel %vm254, %v1475, 0
    %v1489 = vsel %vm254, %v1478, 0
    %v1491 = vsel %vm254, %v1484, 0
    %v1493 = vsel %vm254, %v1486, 0
    %1495 = vmatprep.subr.mxu0 0.0
    %1496 = vmatpush1.xpose.msra.mxu0 %v1491
    %1497 = vmatprep.subr.mxu0 0.0
    %1498 = vmatpush1.xpose.msra.mxu0 %v1493
    %1499 = vmatprep.subr.mxu0 0.0
    %1500 = vmatpush1.xpose.msra.mxu0 0.0
    %1501 = vmatprep.subr.mxu0 0.0
    %1502 = vmatpush1.xpose.msra.mxu0 0.0
    %1503 = vmatprep.subr.mxu0 0.0
    %1504 = vmatpush1.xpose.msra.mxu0 0.0
    %1505 = vmatprep.subr.mxu0 0.0
    %1506 = vmatpush1.xpose.msra.mxu0 0.0
    %1507 = vmatprep.subr.mxu0 0.0
    %1508 = vmatpush1.xpose.msra.mxu0 0.0
    %1509 = vmatprep.subr.mxu0 0.0
    %1510 = vmatpush1.xpose.msra.mxu0 0.0
    %1511 = vmatprep.subr.mxu0 0.0
    %1512 = vmatpush1.xpose.msra.mxu0 0.0
    %1513 = vmatprep.subr.mxu0 0.0
    %1514 = vmatpush1.xpose.msra.mxu0 0.0
    %1515 = vmatprep.subr.mxu0 0.0
    %1516 = vmatpush1.xpose.msra.mxu0 0.0
    %1517 = vmatprep.subr.mxu0 0.0
    %1518 = vmatpush1.xpose.msra.mxu0 0.0
    %1519 = vmatprep.subr.mxu0 0.0
    %1520 = vmatpush1.xpose.msra.mxu0 0.0
    %1521 = vmatprep.subr.mxu0 0.0
    %1522 = vmatpush1.xpose.msra.mxu0 0.0
    %1523 = vmatprep.subr.mxu0 0.0
    %1524 = vmatpush1.xpose.msra.mxu0 0.0
    %1525 = vmatprep.subr.mxu0 0.0
    %1526 = vmatpush1.xpose.msra.mxu0 0.0
    %1527 = vmatprep.subr.mxu0 0.0
    %1528 = vmatpush1.xpose.msra.mxu0 0.0
    %1529 = vmatprep.subr.mxu0 0.0
    %1530 = vmatpush1.xpose.msra.mxu0 0.0
    %1531 = vmatprep.subr.mxu0 0.0
    %1532 = vmatpush1.xpose.msra.mxu0 0.0
    %1533 = vmatprep.subr.mxu0 0.0
    %1534 = vmatpush1.xpose.msra.mxu0 0.0
    %1535 = vmatprep.subr.mxu0 0.0
    %1536 = vmatpush1.xpose.msra.mxu0 0.0
    %1537 = vmatprep.subr.mxu0 0.0
    %1538 = vmatpush1.xpose.msra.mxu0 0.0
    %1539 = vmatprep.subr.mxu0 0.0
    %1540 = vmatpush1.xpose.msra.mxu0 0.0
    %1541 = vmatprep.subr.mxu0 0.0
    %1542 = vmatpush1.xpose.msra.mxu0 0.0
    %1543 = vmatprep.subr.mxu0 0.0
    %1544 = vmatpush1.xpose.msra.mxu0 0.0
    %1545 = vmatprep.subr.mxu0 0.0
    %1546 = vmatpush1.xpose.msra.mxu0 0.0
    %1547 = vmatprep.subr.mxu0 0.0
    %1548 = vmatpush1.xpose.msra.mxu0 0.0
    %1549 = vmatprep.subr.mxu0 0.0
    %1550 = vmatpush1.xpose.msra.mxu0 0.0
    %1551 = vmatprep.subr.mxu0 0.0
    %1552 = vmatpush1.xpose.msra.mxu0 0.0
    %1553 = vmatprep.subr.mxu0 0.0
    %1554 = vmatpush1.xpose.msra.mxu0 0.0
    %1555 = vmatprep.subr.mxu0 0.0
    %1556 = vmatpush1.xpose.msra.mxu0 0.0
    %1557 = vmatprep.subr.mxu0 0.0
    %1558 = vmatpush1.xpose.msra.mxu0 0.0
    %1559 = vmatprep.mubr.f32.mxu0 0.0
    %1560 = vmatmul.mubr.f32.gmra.mrb[0].mxu0 %v1487
    %v1561 = vpop.f32.mrb[0].mxu0
    %v1562 = vadd.f32 0.0, %v1561
    %v1563 = vpop.f32.mrb[0].mxu0
    %1564 = vmatprep.mubr.f32.mxu0 0.0
    %1565 = vmatmul.mubr.f32.gmra.mrb[0].mxu0 %v1489
    %v1566 = vpop.f32.mrb[0].mxu0
    %v1567 = vadd.f32 0.0, %v1566
    %v1568 = vpop.f32.mrb[0].mxu0
    %1569 = vdwg.mxu0
    %v1570 = vmul.f32 %v1562, 0.25
    %v1571 = vmul.f32 %v1567, 0.25
    %v1572 = vsel %vm135, %v1570, -1e+30
    %v1573 = vsel %vm136, %v1571, -1e+30
    %v1574 = vsel %vm254, %v1572, -inf
    %1575 = vmax.xlane.f32.xlu0 %v1574
    %v1576 = vpop.xlane.xlu0 %1575
    %v1577 = vsel %vm254, %v1573, -inf
    %1578 = vmax.xlane.f32.xlu0 %v1577
    %v1579 = vpop.xlane.xlu0 %1578
    %v1580 = vsub.f32 %v1572, %v1576
    %v1581 = vsub.f32 %v1573, %v1579
    %v1582 = vmul.f32 %v1580, 1.442695
    %v1583 = vpow.pop %v1582
    %v1584 = vmul.f32 %v1581, 1.442695
    %v1585 = vpow.pop %v1584
    %v1586 = vsel %vm254, %v1583, 0.0
    %1587 = vadd.xlane.f32.xlu0 %v1586
    %v1588 = vpop.xlane.xlu0 %1587
    %v1589 = vsel %vm254, %v1585, 0.0
    %1590 = vadd.xlane.f32.xlu0 %v1589
    %v1591 = vpop.xlane.xlu0 %1590
    %v1592 = vrcp.pop %v1588
    %v1593 = vrcp.pop %v1591
    %v1594 = vmul.f32 %v1583, %v1592
    %v1595 = vmul.f32 %v1585, %v1593
    %1596 = vrot.lane.b32.xlu0 %v1475, 64
    %v1597 = vpop.permute.xlu0 %1596
    %1598 = vrot.lane.b32.xlu0 %v1478, 64
    %v1599 = vpop.permute.xlu0 %1598
    %v1603 = vsel %vm254, %v1594, 0
    %v1606 = vsel %vm254, %v1595, 0
    %1608 = vmatprep.subr.mxu0 0.0
    %1609 = vmatpush1.msra.mxu0 %v1597
    %1610 = vmatprep.subr.mxu0 0.0
    %1611 = vmatpush1.msra.mxu0 %v1599
    %1612 = vmatprep.subr.mxu0 0.0
    %1613 = vmatpush1.msra.mxu0 0.0
    %1614 = vmatprep.subr.mxu0 0.0
    %1615 = vmatpush1.msra.mxu0 0.0
    %1616 = vmatprep.subr.mxu0 0.0
    %1617 = vmatpush1.msra.mxu0 0.0
    %1618 = vmatprep.subr.mxu0 0.0
    %1619 = vmatpush1.msra.mxu0 0.0
    %1620 = vmatprep.subr.mxu0 0.0
    %1621 = vmatpush1.msra.mxu0 0.0
    %1622 = vmatprep.subr.mxu0 0.0
    %1623 = vmatpush1.msra.mxu0 0.0
    %1624 = vmatprep.subr.mxu0 0.0
    %1625 = vmatpush1.msra.mxu0 0.0
    %1626 = vmatprep.subr.mxu0 0.0
    %1627 = vmatpush1.msra.mxu0 0.0
    %1628 = vmatprep.subr.mxu0 0.0
    %1629 = vmatpush1.msra.mxu0 0.0
    %1630 = vmatprep.subr.mxu0 0.0
    %1631 = vmatpush1.msra.mxu0 0.0
    %1632 = vmatprep.subr.mxu0 0.0
    %1633 = vmatpush1.msra.mxu0 0.0
    %1634 = vmatprep.subr.mxu0 0.0
    %1635 = vmatpush1.msra.mxu0 0.0
    %1636 = vmatprep.subr.mxu0 0.0
    %1637 = vmatpush1.msra.mxu0 0.0
    %1638 = vmatprep.subr.mxu0 0.0
    %1639 = vmatpush1.msra.mxu0 0.0
    %1640 = vmatprep.subr.mxu0 0.0
    %1641 = vmatpush1.msra.mxu0 0.0
    %1642 = vmatprep.subr.mxu0 0.0
    %1643 = vmatpush1.msra.mxu0 0.0
    %1644 = vmatprep.subr.mxu0 0.0
    %1645 = vmatpush1.msra.mxu0 0.0
    %1646 = vmatprep.subr.mxu0 0.0
    %1647 = vmatpush1.msra.mxu0 0.0
    %1648 = vmatprep.subr.mxu0 0.0
    %1649 = vmatpush1.msra.mxu0 0.0
    %1650 = vmatprep.subr.mxu0 0.0
    %1651 = vmatpush1.msra.mxu0 0.0
    %1652 = vmatprep.subr.mxu0 0.0
    %1653 = vmatpush1.msra.mxu0 0.0
    %1654 = vmatprep.subr.mxu0 0.0
    %1655 = vmatpush1.msra.mxu0 0.0
    %1656 = vmatprep.subr.mxu0 0.0
    %1657 = vmatpush1.msra.mxu0 0.0
    %1658 = vmatprep.subr.mxu0 0.0
    %1659 = vmatpush1.msra.mxu0 0.0
    %1660 = vmatprep.subr.mxu0 0.0
    %1661 = vmatpush1.msra.mxu0 0.0
    %1662 = vmatprep.subr.mxu0 0.0
    %1663 = vmatpush1.msra.mxu0 0.0
    %1664 = vmatprep.subr.mxu0 0.0
    %1665 = vmatpush1.msra.mxu0 0.0
    %1666 = vmatprep.subr.mxu0 0.0
    %1667 = vmatpush1.msra.mxu0 0.0
    %1668 = vmatprep.subr.mxu0 0.0
    %1669 = vmatpush1.msra.mxu0 0.0
    %1670 = vmatprep.subr.mxu0 0.0
    %1671 = vmatpush1.msra.mxu0 0.0
    %1672 = vmatprep.mubr.f32.mxu0 0.0
    %1673 = vmatmul.mubr.f32.gmra.mrb[0].mxu0 %v1603
    %v1674 = vpop.f32.mrb[0].mxu0
    %v1675 = vadd.f32 0.0, %v1674
    %v1676 = vpop.f32.mrb[0].mxu0
    %1677 = vmatprep.mubr.f32.mxu0 0.0
    %1678 = vmatmul.mubr.f32.gmra.mrb[0].mxu0 %v1606
    %v1679 = vpop.f32.mrb[0].mxu0
    %v1680 = vadd.f32 0.0, %v1679
    %v1681 = vpop.f32.mrb[0].mxu0
    %1682 = vdwg.mxu0
    %v1683 = vpack.c.bf16 %v1680, %v1675
    %1684 = vrot.lane.b32.xlu0 %v1475, 112
    %v1685 = vpop.permute.xlu0 %1684
    %1686 = vrot.lane.b32.xlu0 %v1478, 112
    %v1687 = vpop.permute.xlu0 %1686
    %1688 = vrot.lane.b32.xlu0 %v1475, 80
    %v1689 = vpop.permute.xlu0 %1688
    %1690 = vrot.lane.b32.xlu0 %v1478, 80
    %v1691 = vpop.permute.xlu0 %1690
    %v1692 = vsel %vm254, %v1685, 0
    %v1694 = vsel %vm254, %v1687, 0
    %v1696 = vsel %vm254, %v1689, 0
    %v1698 = vsel %vm254, %v1691, 0
    %1700 = vmatprep.subr.mxu0 0.0
    %1701 = vmatpush1.xpose.msra.mxu0 %v1696
    %1702 = vmatprep.subr.mxu0 0.0
    %1703 = vmatpush1.xpose.msra.mxu0 %v1698
    %1704 = vmatprep.subr.mxu0 0.0
    %1705 = vmatpush1.xpose.msra.mxu0 0.0
    %1706 = vmatprep.subr.mxu0 0.0
    %1707 = vmatpush1.xpose.msra.mxu0 0.0
    %1708 = vmatprep.subr.mxu0 0.0
    %1709 = vmatpush1.xpose.msra.mxu0 0.0
    %1710 = vmatprep.subr.mxu0 0.0
    %1711 = vmatpush1.xpose.msra.mxu0 0.0
    %1712 = vmatprep.subr.mxu0 0.0
    %1713 = vmatpush1.xpose.msra.mxu0 0.0
    %1714 = vmatprep.subr.mxu0 0.0
    %1715 = vmatpush1.xpose.msra.mxu0 0.0
    %1716 = vmatprep.subr.mxu0 0.0
    %1717 = vmatpush1.xpose.msra.mxu0 0.0
    %1718 = vmatprep.subr.mxu0 0.0
    %1719 = vmatpush1.xpose.msra.mxu0 0.0
    %1720 = vmatprep.subr.mxu0 0.0
    %1721 = vmatpush1.xpose.msra.mxu0 0.0
    %1722 = vmatprep.subr.mxu0 0.0
    %1723 = vmatpush1.xpose.msra.mxu0 0.0
    %1724 = vmatprep.subr.mxu0 0.0
    %1725 = vmatpush1.xpose.msra.mxu0 0.0
    %1726 = vmatprep.subr.mxu0 0.0
    %1727 = vmatpush1.xpose.msra.mxu0 0.0
    %1728 = vmatprep.subr.mxu0 0.0
    %1729 = vmatpush1.xpose.msra.mxu0 0.0
    %1730 = vmatprep.subr.mxu0 0.0
    %1731 = vmatpush1.xpose.msra.mxu0 0.0
    %1732 = vmatprep.subr.mxu0 0.0
    %1733 = vmatpush1.xpose.msra.mxu0 0.0
    %1734 = vmatprep.subr.mxu0 0.0
    %1735 = vmatpush1.xpose.msra.mxu0 0.0
    %1736 = vmatprep.subr.mxu0 0.0
    %1737 = vmatpush1.xpose.msra.mxu0 0.0
    %1738 = vmatprep.subr.mxu0 0.0
    %1739 = vmatpush1.xpose.msra.mxu0 0.0
    %1740 = vmatprep.subr.mxu0 0.0
    %1741 = vmatpush1.xpose.msra.mxu0 0.0
    %1742 = vmatprep.subr.mxu0 0.0
    %1743 = vmatpush1.xpose.msra.mxu0 0.0
    %1744 = vmatprep.subr.mxu0 0.0
    %1745 = vmatpush1.xpose.msra.mxu0 0.0
    %1746 = vmatprep.subr.mxu0 0.0
    %1747 = vmatpush1.xpose.msra.mxu0 0.0
    %1748 = vmatprep.subr.mxu0 0.0
    %1749 = vmatpush1.xpose.msra.mxu0 0.0
    %1750 = vmatprep.subr.mxu0 0.0
    %1751 = vmatpush1.xpose.msra.mxu0 0.0
    %1752 = vmatprep.subr.mxu0 0.0
    %1753 = vmatpush1.xpose.msra.mxu0 0.0
    %1754 = vmatprep.subr.mxu0 0.0
    %1755 = vmatpush1.xpose.msra.mxu0 0.0
    %1756 = vmatprep.subr.mxu0 0.0
    %1757 = vmatpush1.xpose.msra.mxu0 0.0
    %1758 = vmatprep.subr.mxu0 0.0
    %1759 = vmatpush1.xpose.msra.mxu0 0.0
    %1760 = vmatprep.subr.mxu0 0.0
    %1761 = vmatpush1.xpose.msra.mxu0 0.0
    %1762 = vmatprep.subr.mxu0 0.0
    %1763 = vmatpush1.xpose.msra.mxu0 0.0
    %1764 = vmatprep.mubr.f32.mxu0 0.0
    %1765 = vmatmul.mubr.f32.gmra.mrb[0].mxu0 %v1692
    %v1766 = vpop.f32.mrb[0].mxu0
    %v1767 = vadd.f32 0.0, %v1766
    %v1768 = vpop.f32.mrb[0].mxu0
    %1769 = vmatprep.mubr.f32.mxu0 0.0
    %1770 = vmatmul.mubr.f32.gmra.mrb[0].mxu0 %v1694
    %v1771 = vpop.f32.mrb[0].mxu0
    %v1772 = vadd.f32 0.0, %v1771
    %v1773 = vpop.f32.mrb[0].mxu0
    %1774 = vdwg.mxu0
    %v1775 = vmul.f32 %v1767, 0.25
    %v1776 = vmul.f32 %v1772, 0.25
    %v1777 = vsel %vm135, %v1775, -1e+30
    %v1778 = vsel %vm136, %v1776, -1e+30
    %v1779 = vsel %vm254, %v1777, -inf
    %1780 = vmax.xlane.f32.xlu0 %v1779
    %v1781 = vpop.xlane.xlu0 %1780
    %v1782 = vsel %vm254, %v1778, -inf
    %1783 = vmax.xlane.f32.xlu0 %v1782
    %v1784 = vpop.xlane.xlu0 %1783
    %v1785 = vsub.f32 %v1777, %v1781
    %v1786 = vsub.f32 %v1778, %v1784
    %v1787 = vmul.f32 %v1785, 1.442695
    %v1788 = vpow.pop %v1787
    %v1789 = vmul.f32 %v1786, 1.442695
    %v1790 = vpow.pop %v1789
    %v1791 = vsel %vm254, %v1788, 0.0
    %1792 = vadd.xlane.f32.xlu0 %v1791
    %v1793 = vpop.xlane.xlu0 %1792
    %v1794 = vsel %vm254, %v1790, 0.0
    %1795 = vadd.xlane.f32.xlu0 %v1794
    %v1796 = vpop.xlane.xlu0 %1795
    %v1797 = vrcp.pop %v1793
    %v1798 = vrcp.pop %v1796
    %v1799 = vmul.f32 %v1788, %v1797
    %v1800 = vmul.f32 %v1790, %v1798
    %1801 = vrot.lane.b32.xlu0 %v1475, 48
    %v1802 = vpop.permute.xlu0 %1801
    %1803 = vrot.lane.b32.xlu0 %v1478, 48
    %v1804 = vpop.permute.xlu0 %1803
    %v1808 = vsel %vm254, %v1799, 0
    %v1811 = vsel %vm254, %v1800, 0
    %1813 = vmatprep.subr.mxu0 0.0
    %1814 = vmatpush1.msra.mxu0 %v1802
    %1815 = vmatprep.subr.mxu0 0.0
    %1816 = vmatpush1.msra.mxu0 %v1804
    %1817 = vmatprep.subr.mxu0 0.0
    %1818 = vmatpush1.msra.mxu0 0.0
    %1819 = vmatprep.subr.mxu0 0.0
    %1820 = vmatpush1.msra.mxu0 0.0
    %1821 = vmatprep.subr.mxu0 0.0
    %1822 = vmatpush1.msra.mxu0 0.0
    %1823 = vmatprep.subr.mxu0 0.0
    %1824 = vmatpush1.msra.mxu0 0.0
    %1825 = vmatprep.subr.mxu0 0.0
    %1826 = vmatpush1.msra.mxu0 0.0
    %1827 = vmatprep.subr.mxu0 0.0
    %1828 = vmatpush1.msra.mxu0 0.0
    %1829 = vmatprep.subr.mxu0 0.0
    %1830 = vmatpush1.msra.mxu0 0.0
    %1831 = vmatprep.subr.mxu0 0.0
    %1832 = vmatpush1.msra.mxu0 0.0
    %1833 = vmatprep.subr.mxu0 0.0
    %1834 = vmatpush1.msra.mxu0 0.0
    %1835 = vmatprep.subr.mxu0 0.0
    %1836 = vmatpush1.msra.mxu0 0.0
    %1837 = vmatprep.subr.mxu0 0.0
    %1838 = vmatpush1.msra.mxu0 0.0
    %1839 = vmatprep.subr.mxu0 0.0
    %1840 = vmatpush1.msra.mxu0 0.0
    %1841 = vmatprep.subr.mxu0 0.0
    %1842 = vmatpush1.msra.mxu0 0.0
    %1843 = vmatprep.subr.mxu0 0.0
    %1844 = vmatpush1.msra.mxu0 0.0
    %1845 = vmatprep.subr.mxu0 0.0
    %1846 = vmatpush1.msra.mxu0 0.0
    %1847 = vmatprep.subr.mxu0 0.0
    %1848 = vmatpush1.msra.mxu0 0.0
    %1849 = vmatprep.subr.mxu0 0.0
    %1850 = vmatpush1.msra.mxu0 0.0
    %1851 = vmatprep.subr.mxu0 0.0
    %1852 = vmatpush1.msra.mxu0 0.0
    %1853 = vmatprep.subr.mxu0 0.0
    %1854 = vmatpush1.msra.mxu0 0.0
    %1855 = vmatprep.subr.mxu0 0.0
    %1856 = vmatpush1.msra.mxu0 0.0
    %1857 = vmatprep.subr.mxu0 0.0
    %1858 = vmatpush1.msra.mxu0 0.0
    %1859 = vmatprep.subr.mxu0 0.0
    %1860 = vmatpush1.msra.mxu0 0.0
    %1861 = vmatprep.subr.mxu0 0.0
    %1862 = vmatpush1.msra.mxu0 0.0
    %1863 = vmatprep.subr.mxu0 0.0
    %1864 = vmatpush1.msra.mxu0 0.0
    %1865 = vmatprep.subr.mxu0 0.0
    %1866 = vmatpush1.msra.mxu0 0.0
    %1867 = vmatprep.subr.mxu0 0.0
    %1868 = vmatpush1.msra.mxu0 0.0
    %1869 = vmatprep.subr.mxu0 0.0
    %1870 = vmatpush1.msra.mxu0 0.0
    %1871 = vmatprep.subr.mxu0 0.0
    %1872 = vmatpush1.msra.mxu0 0.0
    %1873 = vmatprep.subr.mxu0 0.0
    %1874 = vmatpush1.msra.mxu0 0.0
    %1875 = vmatprep.subr.mxu0 0.0
    %1876 = vmatpush1.msra.mxu0 0.0
    %1877 = vmatprep.mubr.f32.mxu0 0.0
    %1878 = vmatmul.mubr.f32.gmra.mrb[0].mxu0 %v1808
    %v1879 = vpop.f32.mrb[0].mxu0
    %v1880 = vadd.f32 0.0, %v1879
    %v1881 = vpop.f32.mrb[0].mxu0
    %1882 = vmatprep.mubr.f32.mxu0 0.0
    %1883 = vmatmul.mubr.f32.gmra.mrb[0].mxu0 %v1811
    %v1884 = vpop.f32.mrb[0].mxu0
    %v1885 = vadd.f32 0.0, %v1884
    %v1886 = vpop.f32.mrb[0].mxu0
    %1887 = vdwg.mxu0
    %v1888 = vpack.c.bf16 %v1885, %v1880
    %v1891 = vunpack.c.l.b16 %v1418
    %v1892 = vunpack.c.l.b16 %v1419
    %v1893 = vpack.c.b16 %v1892, %v1891
    %v1896 = vsel %vm254, %v1888, 0
    %1898 = vmatprep.subr.bf16.mxu0 0
    %1899 = vmatpush1.bf16.msra.mxu0 %v1893
    %1900 = vmatprep.subr.bf16.mxu0 0
    %1901 = vmatpush1.bf16.msra.mxu0 0
    %1902 = vmatprep.subr.bf16.mxu0 0
    %1903 = vmatpush1.bf16.msra.mxu0 0
    %1904 = vmatprep.subr.bf16.mxu0 0
    %1905 = vmatpush1.bf16.msra.mxu0 0
    %1906 = vmatprep.subr.bf16.mxu0 0
    %1907 = vmatpush1.bf16.msra.mxu0 0
    %1908 = vmatprep.subr.bf16.mxu0 0
    %1909 = vmatpush1.bf16.msra.mxu0 0
    %1910 = vmatprep.subr.bf16.mxu0 0
    %1911 = vmatpush1.bf16.msra.mxu0 0
    %1912 = vmatprep.subr.bf16.mxu0 0
    %1913 = vmatpush1.bf16.msra.mxu0 0
    %1914 = vmatprep.subr.bf16.mxu0 0
    %1915 = vmatpush1.bf16.msra.mxu0 0
    %1916 = vmatprep.subr.bf16.mxu0 0
    %1917 = vmatpush1.bf16.msra.mxu0 0
    %1918 = vmatprep.subr.bf16.mxu0 0
    %1919 = vmatpush1.bf16.msra.mxu0 0
    %1920 = vmatprep.subr.bf16.mxu0 0
    %1921 = vmatpush1.bf16.msra.mxu0 0
    %1922 = vmatprep.subr.bf16.mxu0 0
    %1923 = vmatpush1.bf16.msra.mxu0 0
    %1924 = vmatprep.subr.bf16.mxu0 0
    %1925 = vmatpush1.bf16.msra.mxu0 0
    %1926 = vmatprep.subr.bf16.mxu0 0
    %1927 = vmatpush1.bf16.msra.mxu0 0
    %1928 = vmatprep.subr.bf16.mxu0 0
    %1929 = vmatpush1.bf16.msra.mxu0 0
    %1930 = vmatprep.mubr.bf16.mxu0 0
    %1931 = vmatmul.mubr.bf16.gmra.mrb[0].mxu0 %v1896
    %v1932 = vpop.f32.mrb[0].mxu0
    %v1933 = vadd.f32 0.0, %v1932
    %v1934 = vpop.f32.mrb[0].mxu0
    %v1935 = vpop.f32.mrb[0].mxu0
    %v1936 = vadd.f32 0.0, %v1935
    %v1937 = vpop.f32.mrb[0].mxu0
    %1938 = vdwg.mxu0
    %v1941 = vunpack.c.l.b16 %v1416
    %v1942 = vunpack.c.l.b16 %v1417
    %v1943 = vpack.c.b16 %v1942, %v1941
    %v1946 = vsel %vm254, %v1683, 0
    %1948 = vmatprep.subr.bf16.mxu0 0
    %1949 = vmatpush1.bf16.msra.mxu0 %v1943
    %1950 = vmatprep.subr.bf16.mxu0 0
    %1951 = vmatpush1.bf16.msra.mxu0 0
    %1952 = vmatprep.subr.bf16.mxu0 0
    %1953 = vmatpush1.bf16.msra.mxu0 0
    %1954 = vmatprep.subr.bf16.mxu0 0
    %1955 = vmatpush1.bf16.msra.mxu0 0
    %1956 = vmatprep.subr.bf16.mxu0 0
    %1957 = vmatpush1.bf16.msra.mxu0 0
    %1958 = vmatprep.subr.bf16.mxu0 0
    %1959 = vmatpush1.bf16.msra.mxu0 0
    %1960 = vmatprep.subr.bf16.mxu0 0
    %1961 = vmatpush1.bf16.msra.mxu0 0
    %1962 = vmatprep.subr.bf16.mxu0 0
    %1963 = vmatpush1.bf16.msra.mxu0 0
    %1964 = vmatprep.subr.bf16.mxu0 0
    %1965 = vmatpush1.bf16.msra.mxu0 0
    %1966 = vmatprep.subr.bf16.mxu0 0
    %1967 = vmatpush1.bf16.msra.mxu0 0
    %1968 = vmatprep.subr.bf16.mxu0 0
    %1969 = vmatpush1.bf16.msra.mxu0 0
    %1970 = vmatprep.subr.bf16.mxu0 0
    %1971 = vmatpush1.bf16.msra.mxu0 0
    %1972 = vmatprep.subr.bf16.mxu0 0
    %1973 = vmatpush1.bf16.msra.mxu0 0
    %1974 = vmatprep.subr.bf16.mxu0 0
    %1975 = vmatpush1.bf16.msra.mxu0 0
    %1976 = vmatprep.subr.bf16.mxu0 0
    %1977 = vmatpush1.bf16.msra.mxu0 0
    %1978 = vmatprep.subr.bf16.mxu0 0
    %1979 = vmatpush1.bf16.msra.mxu0 0
    %1980 = vmatprep.mubr.bf16.mxu0 0
    %1981 = vmatmul.mubr.bf16.gmra.mrb[0].mxu0 %v1946
    %v1982 = vpop.f32.mrb[0].mxu0
    %v1983 = vadd.f32 %v1933, %v1982
    %v1984 = vpop.f32.mrb[0].mxu0
    %v1985 = vpop.f32.mrb[0].mxu0
    %v1986 = vadd.f32 %v1936, %v1985
    %v1987 = vpop.f32.mrb[0].mxu0
    %1988 = vdwg.mxu0
    %v1989 = vlaneseq
    %v1990 = vshrl.u32 %v1989, 7
    %v1991 = vsub.s32 1, %v1990
    %v1992 = vrot.slane %v1410, %v1991
    %v1993 = vadd.f32 %v1983, %v1992
    %v1994 = vadd.f32 %v1986, %v1992
    %v1995 = vadd.f32 %v1993, %v1407
    %v1996 = vadd.f32 %v1994, %v1408
    %v1997 = vsel %vm203, %v1995, 0.0
    %1998 = vadd.xlane.f32.xlu0 %v1997
    %v1999 = vpop.xlane.xlu0 %1998
    %v2000 = vsel %vm203, %v1996, 0.0
    %2001 = vadd.xlane.f32.xlu0 %v2000
    %v2002 = vpop.xlane.xlu0 %2001
    %v2003 = vmul.f32 %v1999, %v771
    %v2004 = vmul.f32 %v2002, %v771
    %v2005 = vsub.f32 %v1995, %v2003
    %v2006 = vsub.f32 %v1996, %v2004
    %v2007 = vmul.f32 %v2005, %v2005
    %v2008 = vmul.f32 %v2006, %v2006
    %v2009 = vsel %vm203, %v2007, 0.0
    %2010 = vadd.xlane.f32.xlu0 %v2009
    %v2011 = vpop.xlane.xlu0 %2010
    %v2012 = vsel %vm203, %v2008, 0.0
    %2013 = vadd.xlane.f32.xlu0 %v2012
    %v2014 = vpop.xlane.xlu0 %2013
    %v2015 = vmul.f32 %v2011, %v771
    %v2016 = vmul.f32 %v2014, %v771
    %v2017 = vadd.f32 %v2015, 1e-05
    %v2018 = vadd.f32 %v2016, 1e-05
    %v2019 = vrsqrt.pop %v2017
    %v2020 = vrsqrt.pop %v2018
    %v2021 = vmul.f32 %v2005, %v2019
    %v2022 = vmul.f32 %v2006, %v2020
    %v2023 = vlaneseq
    %v2024 = vshrl.u32 %v2023, 7
    %v2025 = vsub.s32 2, %v2024
    %v2026 = vrot.slane %v1410, %v2025
    %v2027 = vmul.f32 %v2021, %v2026
    %v2028 = vmul.f32 %v2022, %v2026
    %v2029 = vlaneseq
    %v2030 = vshrl.u32 %v2029, 7
    %v2031 = vsub.s32 3, %v2030
    %v2032 = vrot.slane %v1410, %v2031
    %v2033 = vadd.f32 %v2027, %v2032
    %v2034 = vadd.f32 %v2028, %v2032
    %v2035 = vsel %vm806, %v2033, 0.0
    %v2036 = vsel %vm807, %v2034, 0.0
    %v2037 = vrot.slane %v2035, 7
    %v2038 = vrot.slane %v2036, 7
    %v2039 = vsel %vm812, %v2037, %v2038
    %v2040 = vsel %vm812, %v2038, %v2037
    %v2041 = vsel %vm817, %v2040, 0.0
    %v2042 = vsel %vm818, %v2039, 0.0
    %v2043 = vpack.c.bf16 %v2042, %v2041
    %s2044 = scalar_lea.vmem [#allocation9], 48
    %v2045 = vld [vmem:[%s2044] sm:$0xf]
    %v2046 = vld [vmem:[%s2044 + $0x4] sm:$0xf]
    %v2047 = vld [vmem:[%s2044 + $0x8] sm:$0xf]
    %v2048 = vld [vmem:[%s2044 + $0xc] sm:$0xf]
    %v2049 = vpack.c.bf16 %v2036, %v2035
    %s2050 = scalar_lea.vmem [#allocation9], 64
    %v2051 = vld [vmem:[%s2050] sm:$0xf]
    %v2052 = vld [vmem:[%s2050 + $0x4] sm:$0xf]
    %v2053 = vld [vmem:[%s2050 + $0x8] sm:$0xf]
    %v2054 = vld [vmem:[%s2050 + $0xc] sm:$0xf]
    %v2059 = vunpack.c.l.b16 %v2051
    %v2060 = vunpack.c.l.b16 %v2052
    %v2061 = vunpack.c.l.b16 %v2053
    %v2062 = vunpack.c.l.b16 %v2054
    %v2063 = vpack.c.b16 %v2060, %v2059
    %v2064 = vpack.c.b16 %v2062, %v2061
    %v2068 = vsel %vm203, %v2049, 0
    %2070 = vmatprep.subr.bf16.mxu0 0
    %2071 = vmatpush1.bf16.msra.mxu0 %v2063
    %2072 = vmatprep.subr.bf16.mxu0 0
    %2073 = vmatpush1.bf16.msra.mxu0 %v2064
    %2074 = vmatprep.subr.bf16.mxu0 0
    %2075 = vmatpush1.bf16.msra.mxu0 0
    %2076 = vmatprep.subr.bf16.mxu0 0
    %2077 = vmatpush1.bf16.msra.mxu0 0
    %2078 = vmatprep.subr.bf16.mxu0 0
    %2079 = vmatpush1.bf16.msra.mxu0 0
    %2080 = vmatprep.subr.bf16.mxu0 0
    %2081 = vmatpush1.bf16.msra.mxu0 0
    %2082 = vmatprep.subr.bf16.mxu0 0
    %2083 = vmatpush1.bf16.msra.mxu0 0
    %2084 = vmatprep.subr.bf16.mxu0 0
    %2085 = vmatpush1.bf16.msra.mxu0 0
    %2086 = vmatprep.subr.bf16.mxu0 0
    %2087 = vmatpush1.bf16.msra.mxu0 0
    %2088 = vmatprep.subr.bf16.mxu0 0
    %2089 = vmatpush1.bf16.msra.mxu0 0
    %2090 = vmatprep.subr.bf16.mxu0 0
    %2091 = vmatpush1.bf16.msra.mxu0 0
    %2092 = vmatprep.subr.bf16.mxu0 0
    %2093 = vmatpush1.bf16.msra.mxu0 0
    %2094 = vmatprep.subr.bf16.mxu0 0
    %2095 = vmatpush1.bf16.msra.mxu0 0
    %2096 = vmatprep.subr.bf16.mxu0 0
    %2097 = vmatpush1.bf16.msra.mxu0 0
    %2098 = vmatprep.subr.bf16.mxu0 0
    %2099 = vmatpush1.bf16.msra.mxu0 0
    %2100 = vmatprep.subr.bf16.mxu0 0
    %2101 = vmatpush1.bf16.msra.mxu0 0
    %2102 = vmatprep.mubr.bf16.mxu0 0
    %2103 = vmatmul.mubr.bf16.gmra.mrb[0].mxu0 %v2068
    %v2104 = vpop.f32.mrb[0].mxu0
    %v2105 = vadd.f32 0.0, %v2104
    %v2106 = vpop.f32.mrb[0].mxu0
    %v2107 = vpop.f32.mrb[0].mxu0
    %v2108 = vadd.f32 0.0, %v2107
    %v2109 = vpop.f32.mrb[0].mxu0
    %2110 = vdwg.mxu0
    %v2115 = vunpack.c.l.b16 %v2045
    %v2116 = vunpack.c.l.b16 %v2046
    %v2117 = vunpack.c.l.b16 %v2047
    %v2118 = vunpack.c.l.b16 %v2048
    %v2119 = vpack.c.b16 %v2116, %v2115
    %v2120 = vpack.c.b16 %v2118, %v2117
    %v2124 = vsel %vm203, %v2043, 0
    %2126 = vmatprep.subr.bf16.mxu0 0
    %2127 = vmatpush1.bf16.msra.mxu0 %v2119
    %2128 = vmatprep.subr.bf16.mxu0 0
    %2129 = vmatpush1.bf16.msra.mxu0 %v2120
    %2130 = vmatprep.subr.bf16.mxu0 0
    %2131 = vmatpush1.bf16.msra.mxu0 0
    %2132 = vmatprep.subr.bf16.mxu0 0
    %2133 = vmatpush1.bf16.msra.mxu0 0
    %2134 = vmatprep.subr.bf16.mxu0 0
    %2135 = vmatpush1.bf16.msra.mxu0 0
    %2136 = vmatprep.subr.bf16.mxu0 0
    %2137 = vmatpush1.bf16.msra.mxu0 0
    %2138 = vmatprep.subr.bf16.mxu0 0
    %2139 = vmatpush1.bf16.msra.mxu0 0
    %2140 = vmatprep.subr.bf16.mxu0 0
    %2141 = vmatpush1.bf16.msra.mxu0 0
    %2142 = vmatprep.subr.bf16.mxu0 0
    %2143 = vmatpush1.bf16.msra.mxu0 0
    %2144 = vmatprep.subr.bf16.mxu0 0
    %2145 = vmatpush1.bf16.msra.mxu0 0
    %2146 = vmatprep.subr.bf16.mxu0 0
    %2147 = vmatpush1.bf16.msra.mxu0 0
    %2148 = vmatprep.subr.bf16.mxu0 0
    %2149 = vmatpush1.bf16.msra.mxu0 0
    %2150 = vmatprep.subr.bf16.mxu0 0
    %2151 = vmatpush1.bf16.msra.mxu0 0
    %2152 = vmatprep.subr.bf16.mxu0 0
    %2153 = vmatpush1.bf16.msra.mxu0 0
    %2154 = vmatprep.subr.bf16.mxu0 0
    %2155 = vmatpush1.bf16.msra.mxu0 0
    %2156 = vmatprep.subr.bf16.mxu0 0
    %2157 = vmatpush1.bf16.msra.mxu0 0
    %2158 = vmatprep.mubr.bf16.mxu0 0
    %2159 = vmatmul.mubr.bf16.gmra.mrb[0].mxu0 %v2124
    %v2160 = vpop.f32.mrb[0].mxu0
    %v2161 = vadd.f32 %v2105, %v2160
    %v2162 = vpop.f32.mrb[0].mxu0
    %v2163 = vpop.f32.mrb[0].mxu0
    %v2164 = vadd.f32 %v2108, %v2163
    %v2165 = vpop.f32.mrb[0].mxu0
    %2166 = vdwg.mxu0
    %v2167 = vrot.slane %v2035, 1
    %v2168 = vrot.slane %v2036, 1
    %v2169 = vsel %vm946, %v2167, %v2168
    %v2170 = vsel %vm946, %v2168, %v2167
    %v2171 = vsel %vm951, %v2169, 0.0
    %v2172 = vsel %vm952, %v2170, 0.0
    %v2173 = vpack.c.bf16 %v2172, %v2171
    %s2174 = scalar_lea.vmem [#allocation9], 80
    %v2175 = vld [vmem:[%s2174] sm:$0xf]
    %v2176 = vld [vmem:[%s2174 + $0x4] sm:$0xf]
    %v2177 = vld [vmem:[%s2174 + $0x8] sm:$0xf]
    %v2178 = vld [vmem:[%s2174 + $0xc] sm:$0xf]
    %v2183 = vunpack.c.l.b16 %v2175
    %v2184 = vunpack.c.l.b16 %v2176
    %v2185 = vunpack.c.l.b16 %v2177
    %v2186 = vunpack.c.l.b16 %v2178
    %v2187 = vpack.c.b16 %v2184, %v2183
    %v2188 = vpack.c.b16 %v2186, %v2185
    %v2192 = vsel %vm203, %v2173, 0
    %2194 = vmatprep.subr.bf16.mxu0 0
    %2195 = vmatpush1.bf16.msra.mxu0 %v2187
    %2196 = vmatprep.subr.bf16.mxu0 0
    %2197 = vmatpush1.bf16.msra.mxu0 %v2188
    %2198 = vmatprep.subr.bf16.mxu0 0
    %2199 = vmatpush1.bf16.msra.mxu0 0
    %2200 = vmatprep.subr.bf16.mxu0 0
    %2201 = vmatpush1.bf16.msra.mxu0 0
    %2202 = vmatprep.subr.bf16.mxu0 0
    %2203 = vmatpush1.bf16.msra.mxu0 0
    %2204 = vmatprep.subr.bf16.mxu0 0
    %2205 = vmatpush1.bf16.msra.mxu0 0
    %2206 = vmatprep.subr.bf16.mxu0 0
    %2207 = vmatpush1.bf16.msra.mxu0 0
    %2208 = vmatprep.subr.bf16.mxu0 0
    %2209 = vmatpush1.bf16.msra.mxu0 0
    %2210 = vmatprep.subr.bf16.mxu0 0
    %2211 = vmatpush1.bf16.msra.mxu0 0
    %2212 = vmatprep.subr.bf16.mxu0 0
    %2213 = vmatpush1.bf16.msra.mxu0 0
    %2214 = vmatprep.subr.bf16.mxu0 0
    %2215 = vmatpush1.bf16.msra.mxu0 0
    %2216 = vmatprep.subr.bf16.mxu0 0
    %2217 = vmatpush1.bf16.msra.mxu0 0
    %2218 = vmatprep.subr.bf16.mxu0 0
    %2219 = vmatpush1.bf16.msra.mxu0 0
    %2220 = vmatprep.subr.bf16.mxu0 0
    %2221 = vmatpush1.bf16.msra.mxu0 0
    %2222 = vmatprep.subr.bf16.mxu0 0
    %2223 = vmatpush1.bf16.msra.mxu0 0
    %2224 = vmatprep.subr.bf16.mxu0 0
    %2225 = vmatpush1.bf16.msra.mxu0 0
    %2226 = vmatprep.mubr.bf16.mxu0 0
    %2227 = vmatmul.mubr.bf16.gmra.mrb[0].mxu0 %v2192
    %v2228 = vpop.f32.mrb[0].mxu0
    %v2229 = vadd.f32 0.0, %v2228
    %v2230 = vpop.f32.mrb[0].mxu0
    %v2231 = vpop.f32.mrb[0].mxu0
    %v2232 = vadd.f32 0.0, %v2231
    %v2233 = vpop.f32.mrb[0].mxu0
    %2234 = vdwg.mxu0
    %v2235 = vadd.f32 %v2161, %v2229
    %v2236 = vadd.f32 %v2164, %v2232
    %v2237 = vlaneseq
    %v2238 = vshrl.u32 %v2237, 7
    %v2239 = vsub.s32 4, %v2238
    %v2240 = vrot.slane %v1410, %v2239
    %v2241 = vadd.f32 %v2235, %v2240
    %v2242 = vadd.f32 %v2236, %v2240
    %v2243 = vmax.f32 %v2241, 0.0
    %v2244 = vmax.f32 %v2242, 0.0
    %v2245 = vrot.slane %v2243, 7
    %v2246 = vrot.slane %v2244, 7
    %v2247 = vsel %vm812, %v2245, %v2246
    %v2248 = vsel %vm812, %v2246, %v2245
    %v2249 = vsel %vm817, %v2248, 0.0
    %v2250 = vsel %vm818, %v2247, 0.0
    %v2251 = vpack.c.bf16 %v2250, %v2249
    %s2252 = scalar_lea.vmem [#allocation10], 192
    %v2253 = vld [vmem:[%s2252] sm:$0xf]
    %v2254 = vld [vmem:[%s2252 + $0x4] sm:$0xf]
    %v2255 = vld [vmem:[%s2252 + $0x8] sm:$0xf]
    %v2256 = vld [vmem:[%s2252 + $0xc] sm:$0xf]
    %v2257 = vld [vmem:[%s2252 + $0x10] sm:$0xf]
    %v2258 = vld [vmem:[%s2252 + $0x14] sm:$0xf]
    %v2259 = vld [vmem:[%s2252 + $0x18] sm:$0xf]
    %v2260 = vld [vmem:[%s2252 + $0x1c] sm:$0xf]
    %v2261 = vld [vmem:[%s2252 + $0x20] sm:$0xf]
    %v2262 = vld [vmem:[%s2252 + $0x24] sm:$0xf]
    %v2263 = vld [vmem:[%s2252 + $0x28] sm:$0xf]
    %v2264 = vld [vmem:[%s2252 + $0x2c] sm:$0xf]
    %v2265 = vld [vmem:[%s2252 + $0x30] sm:$0xf]
    %v2266 = vld [vmem:[%s2252 + $0x34] sm:$0xf]
    %v2267 = vld [vmem:[%s2252 + $0x38] sm:$0xf]
    %v2268 = vld [vmem:[%s2252 + $0x3c] sm:$0xf]
    %v2269 = vpack.c.bf16 %v2244, %v2243
    %s2270 = scalar_lea.vmem [#allocation10], 256
    %v2271 = vld [vmem:[%s2270] sm:$0xf]
    %v2272 = vld [vmem:[%s2270 + $0x4] sm:$0xf]
    %v2273 = vld [vmem:[%s2270 + $0x8] sm:$0xf]
    %v2274 = vld [vmem:[%s2270 + $0xc] sm:$0xf]
    %v2275 = vld [vmem:[%s2270 + $0x10] sm:$0xf]
    %v2276 = vld [vmem:[%s2270 + $0x14] sm:$0xf]
    %v2277 = vld [vmem:[%s2270 + $0x18] sm:$0xf]
    %v2278 = vld [vmem:[%s2270 + $0x1c] sm:$0xf]
    %v2279 = vld [vmem:[%s2270 + $0x20] sm:$0xf]
    %v2280 = vld [vmem:[%s2270 + $0x24] sm:$0xf]
    %v2281 = vld [vmem:[%s2270 + $0x28] sm:$0xf]
    %v2282 = vld [vmem:[%s2270 + $0x2c] sm:$0xf]
    %v2283 = vld [vmem:[%s2270 + $0x30] sm:$0xf]
    %v2284 = vld [vmem:[%s2270 + $0x34] sm:$0xf]
    %v2285 = vld [vmem:[%s2270 + $0x38] sm:$0xf]
    %v2286 = vld [vmem:[%s2270 + $0x3c] sm:$0xf]
    %v2303 = vunpack.c.l.b16 %v2271
    %v2304 = vunpack.c.l.b16 %v2272
    %v2305 = vunpack.c.l.b16 %v2273
    %v2306 = vunpack.c.l.b16 %v2274
    %v2307 = vunpack.c.l.b16 %v2275
    %v2308 = vunpack.c.l.b16 %v2276
    %v2309 = vunpack.c.l.b16 %v2277
    %v2310 = vunpack.c.l.b16 %v2278
    %v2311 = vunpack.c.l.b16 %v2279
    %v2312 = vunpack.c.l.b16 %v2280
    %v2313 = vunpack.c.l.b16 %v2281
    %v2314 = vunpack.c.l.b16 %v2282
    %v2315 = vunpack.c.l.b16 %v2283
    %v2316 = vunpack.c.l.b16 %v2284
    %v2317 = vunpack.c.l.b16 %v2285
    %v2318 = vunpack.c.l.b16 %v2286
    %v2319 = vpack.c.b16 %v2304, %v2303
    %v2320 = vpack.c.b16 %v2306, %v2305
    %v2321 = vpack.c.b16 %v2308, %v2307
    %v2322 = vpack.c.b16 %v2310, %v2309
    %v2323 = vpack.c.b16 %v2312, %v2311
    %v2324 = vpack.c.b16 %v2314, %v2313
    %v2325 = vpack.c.b16 %v2316, %v2315
    %v2326 = vpack.c.b16 %v2318, %v2317
    %2335 = vmatprep.subr.bf16.mxu0 0
    %2336 = vmatpush1.bf16.msra.mxu0 %v2319
    %2337 = vmatprep.subr.bf16.mxu0 0
    %2338 = vmatpush1.bf16.msra.mxu0 %v2320
    %2339 = vmatprep.subr.bf16.mxu0 0
    %2340 = vmatpush1.bf16.msra.mxu0 %v2321
    %2341 = vmatprep.subr.bf16.mxu0 0
    %2342 = vmatpush1.bf16.msra.mxu0 %v2322
    %2343 = vmatprep.subr.bf16.mxu0 0
    %2344 = vmatpush1.bf16.msra.mxu0 %v2323
    %2345 = vmatprep.subr.bf16.mxu0 0
    %2346 = vmatpush1.bf16.msra.mxu0 %v2324
    %2347 = vmatprep.subr.bf16.mxu0 0
    %2348 = vmatpush1.bf16.msra.mxu0 %v2325
    %2349 = vmatprep.subr.bf16.mxu0 0
    %2350 = vmatpush1.bf16.msra.mxu0 %v2326
    %2351 = vmatprep.subr.bf16.mxu0 0
    %2352 = vmatpush1.bf16.msra.mxu0 0
    %2353 = vmatprep.subr.bf16.mxu0 0
    %2354 = vmatpush1.bf16.msra.mxu0 0
    %2355 = vmatprep.subr.bf16.mxu0 0
    %2356 = vmatpush1.bf16.msra.mxu0 0
    %2357 = vmatprep.subr.bf16.mxu0 0
    %2358 = vmatpush1.bf16.msra.mxu0 0
    %2359 = vmatprep.subr.bf16.mxu0 0
    %2360 = vmatpush1.bf16.msra.mxu0 0
    %2361 = vmatprep.subr.bf16.mxu0 0
    %2362 = vmatpush1.bf16.msra.mxu0 0
    %2363 = vmatprep.subr.bf16.mxu0 0
    %2364 = vmatpush1.bf16.msra.mxu0 0
    %2365 = vmatprep.subr.bf16.mxu0 0
    %2366 = vmatpush1.bf16.msra.mxu0 0
    %2367 = vmatprep.mubr.bf16.mxu0 0
    %2368 = vmatmul.mubr.bf16.gmra.mrb[0].mxu0 %v2269
    %v2369 = vpop.f32.mrb[0].mxu0
    %v2370 = vadd.f32 0.0, %v2369
    %v2371 = vpop.f32.mrb[0].mxu0
    %v2372 = vpop.f32.mrb[0].mxu0
    %v2373 = vadd.f32 0.0, %v2372
    %v2374 = vpop.f32.mrb[0].mxu0
    %2375 = vdwg.mxu0
    %v2392 = vunpack.c.l.b16 %v2253
    %v2393 = vunpack.c.l.b16 %v2254
    %v2394 = vunpack.c.l.b16 %v2255
    %v2395 = vunpack.c.l.b16 %v2256
    %v2396 = vunpack.c.l.b16 %v2257
    %v2397 = vunpack.c.l.b16 %v2258
    %v2398 = vunpack.c.l.b16 %v2259
    %v2399 = vunpack.c.l.b16 %v2260
    %v2400 = vunpack.c.l.b16 %v2261
    %v2401 = vunpack.c.l.b16 %v2262
    %v2402 = vunpack.c.l.b16 %v2263
    %v2403 = vunpack.c.l.b16 %v2264
    %v2404 = vunpack.c.l.b16 %v2265
    %v2405 = vunpack.c.l.b16 %v2266
    %v2406 = vunpack.c.l.b16 %v2267
    %v2407 = vunpack.c.l.b16 %v2268
    %v2408 = vpack.c.b16 %v2393, %v2392
    %v2409 = vpack.c.b16 %v2395, %v2394
    %v2410 = vpack.c.b16 %v2397, %v2396
    %v2411 = vpack.c.b16 %v2399, %v2398
    %v2412 = vpack.c.b16 %v2401, %v2400
    %v2413 = vpack.c.b16 %v2403, %v2402
    %v2414 = vpack.c.b16 %v2405, %v2404
    %v2415 = vpack.c.b16 %v2407, %v2406
    %2424 = vmatprep.subr.bf16.mxu0 0
    %2425 = vmatpush1.bf16.msra.mxu0 %v2408
    %2426 = vmatprep.subr.bf16.mxu0 0
    %2427 = vmatpush1.bf16.msra.mxu0 %v2409
    %2428 = vmatprep.subr.bf16.mxu0 0
    %2429 = vmatpush1.bf16.msra.mxu0 %v2410
    %2430 = vmatprep.subr.bf16.mxu0 0
    %2431 = vmatpush1.bf16.msra.mxu0 %v2411
    %2432 = vmatprep.subr.bf16.mxu0 0
    %2433 = vmatpush1.bf16.msra.mxu0 %v2412
    %2434 = vmatprep.subr.bf16.mxu0 0
    %2435 = vmatpush1.bf16.msra.mxu0 %v2413
    %2436 = vmatprep.subr.bf16.mxu0 0
    %2437 = vmatpush1.bf16.msra.mxu0 %v2414
    %2438 = vmatprep.subr.bf16.mxu0 0
    %2439 = vmatpush1.bf16.msra.mxu0 %v2415
    %2440 = vmatprep.subr.bf16.mxu0 0
    %2441 = vmatpush1.bf16.msra.mxu0 0
    %2442 = vmatprep.subr.bf16.mxu0 0
    %2443 = vmatpush1.bf16.msra.mxu0 0
    %2444 = vmatprep.subr.bf16.mxu0 0
    %2445 = vmatpush1.bf16.msra.mxu0 0
    %2446 = vmatprep.subr.bf16.mxu0 0
    %2447 = vmatpush1.bf16.msra.mxu0 0
    %2448 = vmatprep.subr.bf16.mxu0 0
    %2449 = vmatpush1.bf16.msra.mxu0 0
    %2450 = vmatprep.subr.bf16.mxu0 0
    %2451 = vmatpush1.bf16.msra.mxu0 0
    %2452 = vmatprep.subr.bf16.mxu0 0
    %2453 = vmatpush1.bf16.msra.mxu0 0
    %2454 = vmatprep.subr.bf16.mxu0 0
    %2455 = vmatpush1.bf16.msra.mxu0 0
    %2456 = vmatprep.mubr.bf16.mxu0 0
    %2457 = vmatmul.mubr.bf16.gmra.mrb[0].mxu0 %v2251
    %v2458 = vpop.f32.mrb[0].mxu0
    %v2459 = vadd.f32 %v2370, %v2458
    %v2460 = vpop.f32.mrb[0].mxu0
    %v2461 = vpop.f32.mrb[0].mxu0
    %v2462 = vadd.f32 %v2373, %v2461
    %v2463 = vpop.f32.mrb[0].mxu0
    %2464 = vdwg.mxu0
    %v2465 = vrot.slane %v2243, 1
    %v2466 = vrot.slane %v2244, 1
    %v2467 = vsel %vm946, %v2465, %v2466
    %v2468 = vsel %vm946, %v2466, %v2465
    %v2469 = vsel %vm951, %v2467, 0.0
    %v2470 = vsel %vm952, %v2468, 0.0
    %v2471 = vpack.c.bf16 %v2470, %v2469
    %s2472 = scalar_lea.vmem [#allocation10], 320
    %v2473 = vld [vmem:[%s2472] sm:$0xf]
    %v2474 = vld [vmem:[%s2472 + $0x4] sm:$0xf]
    %v2475 = vld [vmem:[%s2472 + $0x8] sm:$0xf]
    %v2476 = vld [vmem:[%s2472 + $0xc] sm:$0xf]
    %v2477 = vld [vmem:[%s2472 + $0x10] sm:$0xf]
    %v2478 = vld [vmem:[%s2472 + $0x14] sm:$0xf]
    %v2479 = vld [vmem:[%s2472 + $0x18] sm:$0xf]
    %v2480 = vld [vmem:[%s2472 + $0x1c] sm:$0xf]
    %v2481 = vld [vmem:[%s2472 + $0x20] sm:$0xf]
    %v2482 = vld [vmem:[%s2472 + $0x24] sm:$0xf]
    %v2483 = vld [vmem:[%s2472 + $0x28] sm:$0xf]
    %v2484 = vld [vmem:[%s2472 + $0x2c] sm:$0xf]
    %v2485 = vld [vmem:[%s2472 + $0x30] sm:$0xf]
    %v2486 = vld [vmem:[%s2472 + $0x34] sm:$0xf]
    %v2487 = vld [vmem:[%s2472 + $0x38] sm:$0xf]
    %v2488 = vld [vmem:[%s2472 + $0x3c] sm:$0xf]
    %v2505 = vunpack.c.l.b16 %v2473
    %v2506 = vunpack.c.l.b16 %v2474
    %v2507 = vunpack.c.l.b16 %v2475
    %v2508 = vunpack.c.l.b16 %v2476
    %v2509 = vunpack.c.l.b16 %v2477
    %v2510 = vunpack.c.l.b16 %v2478
    %v2511 = vunpack.c.l.b16 %v2479
    %v2512 = vunpack.c.l.b16 %v2480
    %v2513 = vunpack.c.l.b16 %v2481
    %v2514 = vunpack.c.l.b16 %v2482
    %v2515 = vunpack.c.l.b16 %v2483
    %v2516 = vunpack.c.l.b16 %v2484
    %v2517 = vunpack.c.l.b16 %v2485
    %v2518 = vunpack.c.l.b16 %v2486
    %v2519 = vunpack.c.l.b16 %v2487
    %v2520 = vunpack.c.l.b16 %v2488
    %v2521 = vpack.c.b16 %v2506, %v2505
    %v2522 = vpack.c.b16 %v2508, %v2507
    %v2523 = vpack.c.b16 %v2510, %v2509
    %v2524 = vpack.c.b16 %v2512, %v2511
    %v2525 = vpack.c.b16 %v2514, %v2513
    %v2526 = vpack.c.b16 %v2516, %v2515
    %v2527 = vpack.c.b16 %v2518, %v2517
    %v2528 = vpack.c.b16 %v2520, %v2519
    %2537 = vmatprep.subr.bf16.mxu0 0
    %2538 = vmatpush1.bf16.msra.mxu0 %v2521
    %2539 = vmatprep.subr.bf16.mxu0 0
    %2540 = vmatpush1.bf16.msra.mxu0 %v2522
    %2541 = vmatprep.subr.bf16.mxu0 0
    %2542 = vmatpush1.bf16.msra.mxu0 %v2523
    %2543 = vmatprep.subr.bf16.mxu0 0
    %2544 = vmatpush1.bf16.msra.mxu0 %v2524
    %2545 = vmatprep.subr.bf16.mxu0 0
    %2546 = vmatpush1.bf16.msra.mxu0 %v2525
    %2547 = vmatprep.subr.bf16.mxu0 0
    %2548 = vmatpush1.bf16.msra.mxu0 %v2526
    %2549 = vmatprep.subr.bf16.mxu0 0
    %2550 = vmatpush1.bf16.msra.mxu0 %v2527
    %2551 = vmatprep.subr.bf16.mxu0 0
    %2552 = vmatpush1.bf16.msra.mxu0 %v2528
    %2553 = vmatprep.subr.bf16.mxu0 0
    %2554 = vmatpush1.bf16.msra.mxu0 0
    %2555 = vmatprep.subr.bf16.mxu0 0
    %2556 = vmatpush1.bf16.msra.mxu0 0
    %2557 = vmatprep.subr.bf16.mxu0 0
    %2558 = vmatpush1.bf16.msra.mxu0 0
    %2559 = vmatprep.subr.bf16.mxu0 0
    %2560 = vmatpush1.bf16.msra.mxu0 0
    %2561 = vmatprep.subr.bf16.mxu0 0
    %2562 = vmatpush1.bf16.msra.mxu0 0
    %2563 = vmatprep.subr.bf16.mxu0 0
    %2564 = vmatpush1.bf16.msra.mxu0 0
    %2565 = vmatprep.subr.bf16.mxu0 0
    %2566 = vmatpush1.bf16.msra.mxu0 0
    %2567 = vmatprep.subr.bf16.mxu0 0
    %2568 = vmatpush1.bf16.msra.mxu0 0
    %2569 = vmatprep.mubr.bf16.mxu0 0
    %2570 = vmatmul.mubr.bf16.gmra.mrb[0].mxu0 %v2471
    %v2571 = vpop.f32.mrb[0].mxu0
    %v2572 = vadd.f32 0.0, %v2571
    %v2573 = vpop.f32.mrb[0].mxu0
    %v2574 = vpop.f32.mrb[0].mxu0
    %v2575 = vadd.f32 0.0, %v2574
    %v2576 = vpop.f32.mrb[0].mxu0
    %2577 = vdwg.mxu0
    %v2578 = vadd.f32 %v2459, %v2572
    %v2579 = vadd.f32 %v2462, %v2575
    %v2580 = vlaneseq
    %v2581 = vshrl.u32 %v2580, 7
    %v2582 = vsub.s32 5, %v2581
    %v2583 = vrot.slane %v1410, %v2582
    %v2584 = vadd.f32 %v2578, %v2583
    %v2585 = vadd.f32 %v2579, %v2583
    %v2586 = vadd.f32 %v2584, %v2035
    %v2587 = vadd.f32 %v2585, %v2036
    %v2588 = vsel %vm203, %v2586, 0.0
    %2589 = vadd.xlane.f32.xlu0 %v2588
    %v2590 = vpop.xlane.xlu0 %2589
    %v2591 = vsel %vm203, %v2587, 0.0
    %2592 = vadd.xlane.f32.xlu0 %v2591
    %v2593 = vpop.xlane.xlu0 %2592
    %v2594 = vmul.f32 %v2590, %v771
    %v2595 = vmul.f32 %v2593, %v771
    %v2596 = vsub.f32 %v2586, %v2594
    %v2597 = vsub.f32 %v2587, %v2595
    %v2598 = vmul.f32 %v2596, %v2596
    %v2599 = vmul.f32 %v2597, %v2597
    %v2600 = vsel %vm203, %v2598, 0.0
    %2601 = vadd.xlane.f32.xlu0 %v2600
    %v2602 = vpop.xlane.xlu0 %2601
    %v2603 = vsel %vm203, %v2599, 0.0
    %2604 = vadd.xlane.f32.xlu0 %v2603
    %v2605 = vpop.xlane.xlu0 %2604
    %v2606 = vmul.f32 %v2602, %v771
    %v2607 = vmul.f32 %v2605, %v771
    %v2608 = vadd.f32 %v2606, 1e-05
    %v2609 = vadd.f32 %v2607, 1e-05
    %v2610 = vrsqrt.pop %v2608
    %v2611 = vrsqrt.pop %v2609
    %v2612 = vmul.f32 %v2596, %v2610
    %v2613 = vmul.f32 %v2597, %v2611
    %v2614 = vlaneseq
    %v2615 = vshrl.u32 %v2614, 7
    %v2616 = vsub.s32 6, %v2615
    %v2617 = vrot.slane %v1410, %v2616
    %v2618 = vmul.f32 %v2612, %v2617
    %v2619 = vmul.f32 %v2613, %v2617
    %v2620 = vlaneseq
    %v2621 = vshrl.u32 %v2620, 7
    %v2622 = vsub.s32 7, %v2621
    %v2623 = vrot.slane %v1410, %v2622
    %v2624 = vadd.f32 %v2618, %v2623
    %v2625 = vadd.f32 %v2619, %v2623
    %v2626 = vsel %vm806, %v2624, 0.0
    %v2627 = vsel %vm807, %v2625, 0.0
    %2628 = vst.msk [vmem:[#allocation12] sm:$0xff] %vm203, %v2626
    %2629 = vst.msk [vmem:[#allocation12 + $0x8] sm:$0xff] %vm203, %v2627
    // Predicated region
    $region38: #{tpu_custom_call.1} parent=1 // pred_check
      _
    $region39: #{tpu_custom_call.1} parent=1 // pred_check_branch
      %2631 = sbr.rel (0) target = $region41
    $region40: #{tpu_custom_call.1} parent=1 // pred_region
      %s2633 = ssub.s32 256, 256
      %2634 = vsyncadd [#allocation6], %s2633
      %s2635 = sshll.u32 [#allocation12], 4
      %s2636 = int_to_ptr.vmem [resolvable:$true] %s2635
      %2641 = dma.vmem_to_hbm [thread:$0]  %s2636, 256, %s6, [#allocation6], 128, 128, 8
    $region41: #{tpu_custom_call.1} parent=1 // pred_fallthru
      _
    // Predicated region
    $region42: #{tpu_custom_call.1} parent=1 // pred_check
      _
    $region43: #{tpu_custom_call.1} parent=1 // pred_check_branch
      %2643 = sbr.rel (0) target = $region45
    $region44: #{tpu_custom_call.1} parent=1 // pred_region
      %2644 = dma.done [#allocation6], 256
    $region45: #{tpu_custom_call.1} parent=1 // pred_fallthru
      _
    %2645 = vsyncpa [#allocation5], 1
    %2646 = vsyncpa [#allocation8], 1
    %2647 = vsyncpa [#allocation11], 1
    %2648 = vsyncpa [#allocation6], 1

</llo_original>
